<compile_context>
chip_gen: v5e
topology: v5e:2x2
jax: 0.10.0
libtpu: 0.0.40
codegen_flags: <defaults>
</compile_context>

<pallas_src>
import jax
import jax.numpy as jnp
from jax.experimental import pallas as pl
from jax.experimental.pallas import tpu as pltpu

# ----------------------------- small ViT config -----------------------------
IMG = 16          # args.input_size
PATCH = 4         # args.patch_size
C_IN = 3          # RGB input
DIM = 32          # args.vit_dim (embed dim)
DEPTH = 2         # number of transformer blocks
HEADS = 2
MLP_RATIO = 4
EPS = 1e-6        # timm vision_transformer LayerNorm eps

N_PATCH = (IMG // PATCH) * (IMG // PATCH)   # 16
SEQ = N_PATCH + 1                           # 17  (CLS + patches)
SEQ_PAD = 24                                # padded to a multiple of 8 sublanes
K_IN = C_IN * PATCH * PATCH                 # 48  (im2col patch length)
HID = DIM * MLP_RATIO                       # 128
HEAD_DIM = DIM // HEADS                     # 16
SCALE = HEAD_DIM ** -0.5

BLOCK_B = 16                                # images per grid step (capped by batch)


def _layernorm(x, w, b):
    mu = jnp.mean(x, axis=-1, keepdims=True)
    var = jnp.mean((x - mu) ** 2, axis=-1, keepdims=True)
    return (x - mu) * jax.lax.rsqrt(var + EPS) * w + b


def vit_kernel(x_ref, seed_ref, kbias_ref, pe_w_ref,
               ln1_w_ref, ln1_b_ref,
               wq_ref, bq_ref, wk_ref, bk_ref, wv_ref, bv_ref,
               wo_ref, proj_b_ref,
               ln2_w_ref, ln2_b_ref,
               fc1_w_ref, fc1_b_ref, fc2_w_ref, fc2_b_ref,
               lnf_w_ref, lnf_b_ref,
               out_ref):
    """Processes BB images per grid step.

    x_ref:   [BB*SEQ_PAD, K_IN] bf16  (row 0 of each image = CLS slot = zeros,
                                       rows 1..SEQ-1 = im2col patches, rest 0)
    seed_ref:[SEQ_PAD, DIM] f32       (cls+pos for row 0, pos+patch-bias rows 1..SEQ-1)
    All linear weights arrive pre-transposed to [in, out] in bf16; biases f32.
    """
    BB = out_ref.shape[0]
    M = BB * SEQ_PAD

    # ---- patch embedding (stride=patch conv as im2col matmul) + token assembly ----
    emb = jnp.dot(x_ref[...], pe_w_ref[...],
                  preferred_element_type=jnp.float32)                # [M, DIM] f32
    tokens = (emb.reshape(BB, SEQ_PAD, DIM) + seed_ref[...][None]).reshape(M, DIM)

    kbias = kbias_ref[...]                                           # [1, SEQ_PAD]

    for l in range(DEPTH):
        # -------- multi-head self attention (pre-LN) --------
        h = _layernorm(tokens, ln1_w_ref[l], ln1_b_ref[l])
        hb = h.astype(jnp.bfloat16)
        attn = jnp.zeros((M, DIM), jnp.float32)
        for hh in range(HEADS):
            q = jnp.dot(hb, wq_ref[l, hh],
                        preferred_element_type=jnp.float32) + bq_ref[l, hh]
            k = jnp.dot(hb, wk_ref[l, hh],
                        preferred_element_type=jnp.float32) + bk_ref[l, hh]
            v = jnp.dot(hb, wv_ref[l, hh],
                        preferred_element_type=jnp.float32) + bv_ref[l, hh]
            q3 = q.reshape(BB, SEQ_PAD, HEAD_DIM).astype(jnp.bfloat16)
            k3 = k.reshape(BB, SEQ_PAD, HEAD_DIM).astype(jnp.bfloat16)
            v3 = v.reshape(BB, SEQ_PAD, HEAD_DIM).astype(jnp.bfloat16)

            s = jnp.einsum('bqd,bkd->bqk', q3, k3,
                           preferred_element_type=jnp.float32) * SCALE + kbias
            s = s - jnp.max(s, axis=-1, keepdims=True)
            p = jnp.exp(s)
            p = p * pl.reciprocal(jnp.sum(p, axis=-1, keepdims=True), approx=True)

            o = jnp.einsum('bqk,bkd->bqd', p.astype(jnp.bfloat16), v3,
                           preferred_element_type=jnp.float32)       # [BB,SEQ_PAD,HEAD_DIM]
            # proj(concat(heads)) == sum_h head_h @ proj_w[rows of this head]
            attn = attn + jnp.dot(o.reshape(M, HEAD_DIM).astype(jnp.bfloat16),
                                  wo_ref[l, hh],
                                  preferred_element_type=jnp.float32)
        tokens = tokens + attn + proj_b_ref[l]                       # residual

        # -------- MLP (pre-LN) --------
        h = _layernorm(tokens, ln2_w_ref[l], ln2_b_ref[l])
        h = jnp.dot(h.astype(jnp.bfloat16), fc1_w_ref[l],
                    preferred_element_type=jnp.float32) + fc1_b_ref[l]
        # TODO(synk): torch nn.GELU is erf-exact; tanh approximation used for Mosaic-safe lowering.
        h = jax.nn.gelu(h, approximate=True)
        h = jnp.dot(h.astype(jnp.bfloat16), fc2_w_ref[l],
                    preferred_element_type=jnp.float32) + fc2_b_ref[l]
        tokens = tokens + h                                          # residual

    # ---- final norm, full token sequence out (cls_only=False) ----
    y = _layernorm(tokens, lnf_w_ref[...], lnf_b_ref[...])           # [M, DIM]
    out_ref[...] = y.reshape(BB, SEQ_PAD, DIM)[:, :SEQ, :]


def _full_spec(shape):
    nd = len(shape)
    return pl.BlockSpec(shape, lambda b, _nd=nd: (0,) * _nd)


@jax.jit
def backbone_vit_forward(x, params):
    """x: NCHW float32 image tensor [B, C_IN, IMG, IMG] -> [B, SEQ, DIM]."""
    B, C, H, W = x.shape
    BB = min(BLOCK_B, B)
    n_blocks = -(-B // BB)
    Bp = n_blocks * BB

    # ---- im2col for the stride=kernel patch-embed conv: flatten order (c,i,j)
    #      per patch, patches row-major over (h, w) like the conv output ----
    xp = x.reshape(B, C, H // PATCH, PATCH, W // PATCH, PATCH)
    xp = xp.transpose(0, 2, 4, 1, 3, 5).reshape(B, N_PATCH, K_IN)

    # pad sequence (CLS slot + pad rows = zeros) and batch, flatten to 2-D slab
    x_pad = jnp.zeros((Bp, SEQ_PAD, K_IN), jnp.bfloat16)
    x_pad = x_pad.at[:B, 1:SEQ, :].set(xp.astype(jnp.bfloat16))
    x_flat = x_pad.reshape(Bp * SEQ_PAD, K_IN)

    # token "seed": cls+pos for row 0, pos+patch-embed-bias for patch rows, 0 for pad
    seed = jnp.zeros((SEQ_PAD, DIM), jnp.float32)
    seed = seed.at[0:1, :].set(params["cls"] + params["pos"][0:1])
    seed = seed.at[1:SEQ, :].set(params["pos"][1:SEQ] + params["pe_b"])

    # additive key-mask bias: 0 for real tokens, -1e9 for pad rows
    kbias = jnp.where(jnp.arange(SEQ_PAD) < SEQ, 0.0, -1e9)
    kbias = kbias.astype(jnp.float32).reshape(1, SEQ_PAD)

    bf = lambda w: w.astype(jnp.bfloat16)
    t = lambda w: jnp.swapaxes(w, -1, -2)        # torch [out,in] -> [in,out]

    pe_w = bf(t(params["pe_w"]))                                     # [K_IN, DIM]

    # split qkv / proj per head in the wrapper (lane-aligned head operands)
    qkv_w = params["qkv_w"].reshape(DEPTH, 3, HEADS, HEAD_DIM, DIM)  # torch [out,in]
    wq = bf(t(qkv_w[:, 0]))                                          # [L,H,DIM,HEAD_DIM]
    wk = bf(t(qkv_w[:, 1]))
    wv = bf(t(qkv_w[:, 2]))
    qkv_b = params["qkv_b"].reshape(DEPTH, 3, HEADS, 1, HEAD_DIM)
    bq, bk, bv = qkv_b[:, 0], qkv_b[:, 1], qkv_b[:, 2]               # [L,H,1,HEAD_DIM]
    wo = bf(t(params["proj_w"]).reshape(DEPTH, HEADS, HEAD_DIM, DIM))

    weight_args = [
        seed, kbias, pe_w,
        params["ln1_w"], params["ln1_b"],
        wq, bq, wk, bk, wv, bv,
        wo, params["proj_b"],
        params["ln2_w"], params["ln2_b"],
        bf(t(params["fc1_w"])), params["fc1_b"],
        bf(t(params["fc2_w"])), params["fc2_b"],
        params["lnf_w"], params["lnf_b"],
    ]

    in_specs = [pl.BlockSpec((BB * SEQ_PAD, K_IN), lambda b: (b, 0))]
    in_specs += [_full_spec(w.shape) for w in weight_args]

    out = pl.pallas_call(
        vit_kernel,
        out_shape=jax.ShapeDtypeStruct((Bp, SEQ, DIM), jnp.float32),
        grid=(n_blocks,),
        in_specs=in_specs,
        out_specs=pl.BlockSpec((BB, SEQ, DIM), lambda b: (b, 0, 0)),
        compiler_params=pltpu.CompilerParams(
            dimension_semantics=("parallel",)),
    )(x_flat, *weight_args)
    return out[:B]


def init_params(key):
    """Deterministic synthetic parameters (shapes follow the PyTorch module)."""
    keys = jax.random.split(key, 8)

    def trunc(k, shape, std=0.02):
        return (std * jax.random.normal(k, shape)).astype(jnp.float32)

    return {
        # patch embed conv weight [DIM, C_IN, P, P] flattened to [DIM, K_IN]
        "pe_w": trunc(keys[0], (DIM, K_IN)),
        "pe_b": jnp.zeros((1, DIM), jnp.float32),
        "cls": trunc(keys[1], (1, DIM)),
        "pos": trunc(keys[2], (SEQ, DIM)),
        # per-block (stacked over DEPTH), torch nn.Linear convention [out, in]
        "ln1_w": jnp.ones((DEPTH, 1, DIM), jnp.float32),
        "ln1_b": jnp.zeros((DEPTH, 1, DIM), jnp.float32),
        "qkv_w": trunc(keys[3], (DEPTH, 3 * DIM, DIM)),
        "qkv_b": jnp.zeros((DEPTH, 1, 3 * DIM), jnp.float32),
        "proj_w": trunc(keys[4], (DEPTH, DIM, DIM)),
        "proj_b": jnp.zeros((DEPTH, 1, DIM), jnp.float32),
        "ln2_w": jnp.ones((DEPTH, 1, DIM), jnp.float32),
        "ln2_b": jnp.zeros((DEPTH, 1, DIM), jnp.float32),
        "fc1_w": trunc(keys[5], (DEPTH, HID, DIM)),
        "fc1_b": jnp.zeros((DEPTH, 1, HID), jnp.float32),
        "fc2_w": trunc(keys[6], (DEPTH, DIM, HID)),
        "fc2_b": jnp.zeros((DEPTH, 1, DIM), jnp.float32),
        "lnf_w": jnp.ones((1, DIM), jnp.float32),
        "lnf_b": jnp.zeros((1, DIM), jnp.float32),
    }


if __name__ == "__main__":
    key = jax.random.PRNGKey(0)
    k_x, k_p = jax.random.split(key)
    x = jax.random.normal(k_x, (2, C_IN, IMG, IMG), dtype=jnp.float32)  # NCHW
    params = init_params(k_p)

    out = backbone_vit_forward(x, params)
    out = jax.block_until_ready(out)
    assert out.shape == (2, SEQ, DIM), out.shape
    assert jnp.all(jnp.isfinite(out))
    print("KERNEL_OK")
</pallas_src>

<mosaic_0001>
module attributes {stable_mosaic.version = 11 : i64} {
  func.func @vit_kernel(%arg0: i32, %arg1: memref<48x48xbf16, #tpu.memory_space<vmem>>, %arg2: memref<24x32xf32, #tpu.memory_space<vmem>>, %arg3: memref<1x24xf32, #tpu.memory_space<vmem>>, %arg4: memref<48x32xbf16, #tpu.memory_space<vmem>>, %arg5: memref<2x1x32xf32, #tpu.memory_space<vmem>>, %arg6: memref<2x1x32xf32, #tpu.memory_space<vmem>>, %arg7: memref<2x2x32x16xbf16, #tpu.memory_space<vmem>>, %arg8: memref<2x2x1x16xf32, #tpu.memory_space<vmem>>, %arg9: memref<2x2x32x16xbf16, #tpu.memory_space<vmem>>, %arg10: memref<2x2x1x16xf32, #tpu.memory_space<vmem>>, %arg11: memref<2x2x32x16xbf16, #tpu.memory_space<vmem>>, %arg12: memref<2x2x1x16xf32, #tpu.memory_space<vmem>>, %arg13: memref<2x2x16x32xbf16, #tpu.memory_space<vmem>>, %arg14: memref<2x1x32xf32, #tpu.memory_space<vmem>>, %arg15: memref<2x1x32xf32, #tpu.memory_space<vmem>>, %arg16: memref<2x1x32xf32, #tpu.memory_space<vmem>>, %arg17: memref<2x32x128xbf16, #tpu.memory_space<vmem>>, %arg18: memref<2x1x128xf32, #tpu.memory_space<vmem>>, %arg19: memref<2x128x32xbf16, #tpu.memory_space<vmem>>, %arg20: memref<2x1x32xf32, #tpu.memory_space<vmem>>, %arg21: memref<1x32xf32, #tpu.memory_space<vmem>>, %arg22: memref<1x32xf32, #tpu.memory_space<vmem>>, %arg23: memref<2x17x32xf32, #tpu.memory_space<vmem>>) attributes {dimension_semantics = [#tpu.dimension_semantics<parallel>], iteration_bounds = array<i64: 1>, scalar_prefetch = 0 : i64, scratch_operands = 0 : i64, tpu.core_type = #tpu.core_type<tc>, window_params = [{transform_indices = @transform_0, window_bounds = array<i64: 48, 48>}, {pipeline_mode = #tpu.pipeline_mode<synchronous>, transform_indices = @transform_1, window_bounds = array<i64: 24, 32>}, {pipeline_mode = #tpu.pipeline_mode<synchronous>, transform_indices = @transform_2, window_bounds = array<i64: 1, 24>}, {pipeline_mode = #tpu.pipeline_mode<synchronous>, transform_indices = @transform_3, window_bounds = array<i64: 48, 32>}, {pipeline_mode = #tpu.pipeline_mode<synchronous>, transform_indices = @transform_4, window_bounds = array<i64: 2, 1, 32>}, {pipeline_mode = #tpu.pipeline_mode<synchronous>, transform_indices = @transform_5, window_bounds = array<i64: 2, 1, 32>}, {pipeline_mode = #tpu.pipeline_mode<synchronous>, transform_indices = @transform_6, window_bounds = array<i64: 2, 2, 32, 16>}, {pipeline_mode = #tpu.pipeline_mode<synchronous>, transform_indices = @transform_7, window_bounds = array<i64: 2, 2, 1, 16>}, {pipeline_mode = #tpu.pipeline_mode<synchronous>, transform_indices = @transform_8, window_bounds = array<i64: 2, 2, 32, 16>}, {pipeline_mode = #tpu.pipeline_mode<synchronous>, transform_indices = @transform_9, window_bounds = array<i64: 2, 2, 1, 16>}, {pipeline_mode = #tpu.pipeline_mode<synchronous>, transform_indices = @transform_10, window_bounds = array<i64: 2, 2, 32, 16>}, {pipeline_mode = #tpu.pipeline_mode<synchronous>, transform_indices = @transform_11, window_bounds = array<i64: 2, 2, 1, 16>}, {pipeline_mode = #tpu.pipeline_mode<synchronous>, transform_indices = @transform_12, window_bounds = array<i64: 2, 2, 16, 32>}, {pipeline_mode = #tpu.pipeline_mode<synchronous>, transform_indices = @transform_13, window_bounds = array<i64: 2, 1, 32>}, {pipeline_mode = #tpu.pipeline_mode<synchronous>, transform_indices = @transform_14, window_bounds = array<i64: 2, 1, 32>}, {pipeline_mode = #tpu.pipeline_mode<synchronous>, transform_indices = @transform_15, window_bounds = array<i64: 2, 1, 32>}, {pipeline_mode = #tpu.pipeline_mode<synchronous>, transform_indices = @transform_16, window_bounds = array<i64: 2, 32, 128>}, {pipeline_mode = #tpu.pipeline_mode<synchronous>, transform_indices = @transform_17, window_bounds = array<i64: 2, 1, 128>}, {pipeline_mode = #tpu.pipeline_mode<synchronous>, transform_indices = @transform_18, window_bounds = array<i64: 2, 128, 32>}, {pipeline_mode = #tpu.pipeline_mode<synchronous>, transform_indices = @transform_19, window_bounds = array<i64: 2, 1, 32>}, {pipeline_mode = #tpu.pipeline_mode<synchronous>, transform_indices = @transform_20, window_bounds = array<i64: 1, 32>}, {pipeline_mode = #tpu.pipeline_mode<synchronous>, transform_indices = @transform_21, window_bounds = array<i64: 1, 32>}, {transform_indices = @transform_22, window_bounds = array<i64: 2, 17, 32>}]} {
    %c0 = arith.constant 0 : index
    %c0_0 = arith.constant 0 : index
    %0 = vector.load %arg1[%c0, %c0_0] : memref<48x48xbf16, #tpu.memory_space<vmem>>, vector<48x48xbf16>
    %c0_1 = arith.constant 0 : index
    %c0_2 = arith.constant 0 : index
    %1 = vector.load %arg4[%c0_1, %c0_2] : memref<48x32xbf16, #tpu.memory_space<vmem>>, vector<48x32xbf16>
    %cst = arith.constant dense<0.000000e+00> : vector<48x32xf32>
    %2 = tpu.matmul %0, %1, %cst {dimension_numbers = #tpu.dot_dimension_numbers<[1], [0], [0], [1], [0, 0, 1, 1], [], []>} : vector<48x48xbf16>, vector<48x32xbf16>, vector<48x32xf32> -> vector<48x32xf32>
    %3 = vector.shape_cast %2 : vector<48x32xf32> to vector<2x24x32xf32>
    %c0_3 = arith.constant 0 : index
    %c0_4 = arith.constant 0 : index
    %4 = vector.load %arg2[%c0_3, %c0_4] : memref<24x32xf32, #tpu.memory_space<vmem>>, vector<24x32xf32>
    %5 = vector.shape_cast %4 : vector<24x32xf32> to vector<1x24x32xf32>
    %6 = vector.broadcast %5 : vector<1x24x32xf32> to vector<2x24x32xf32>
    %7 = arith.addf %3, %6 : vector<2x24x32xf32>
    %8 = vector.shape_cast %7 : vector<2x24x32xf32> to vector<48x32xf32>
    %c0_5 = arith.constant 0 : index
    %c0_6 = arith.constant 0 : index
    %9 = vector.load %arg3[%c0_5, %c0_6] : memref<1x24xf32, #tpu.memory_space<vmem>>, vector<1x24xf32>
    %c0_7 = arith.constant 0 : index
    %c0_8 = arith.constant 0 : index
    %c0_9 = arith.constant 0 : index
    %10 = vector.load %arg5[%c0_7, %c0_8, %c0_9] : memref<2x1x32xf32, #tpu.memory_space<vmem>>, vector<1x1x32xf32>
    %11 = vector.shape_cast %10 : vector<1x1x32xf32> to vector<1x32xf32>
    %c0_10 = arith.constant 0 : index
    %c0_11 = arith.constant 0 : index
    %c0_12 = arith.constant 0 : index
    %12 = vector.load %arg6[%c0_10, %c0_11, %c0_12] : memref<2x1x32xf32, #tpu.memory_space<vmem>>, vector<1x1x32xf32>
    %13 = vector.shape_cast %12 : vector<1x1x32xf32> to vector<1x32xf32>
    %cst_13 = arith.constant dense<0.000000e+00> : vector<48xf32>
    %14 = vector.multi_reduction <add>, %8, %cst_13 [1] : vector<48x32xf32> to vector<48xf32>
    %15 = vector.shape_cast %14 : vector<48xf32> to vector<48x1xf32>
    %cst_14 = arith.constant 3.200000e+01 : f32
    %16 = vector.broadcast %cst_14 : f32 to vector<48x1xf32>
    %17 = arith.divf %15, %16 : vector<48x1xf32>
    %18 = vector.broadcast %17 : vector<48x1xf32> to vector<48x32xf32>
    %19 = arith.subf %8, %18 : vector<48x32xf32>
    %20 = arith.mulf %19, %19 : vector<48x32xf32>
    %cst_15 = arith.constant dense<0.000000e+00> : vector<48xf32>
    %21 = vector.multi_reduction <add>, %20, %cst_15 [1] : vector<48x32xf32> to vector<48xf32>
    %22 = vector.shape_cast %21 : vector<48xf32> to vector<48x1xf32>
    %cst_16 = arith.constant 3.200000e+01 : f32
    %23 = vector.broadcast %cst_16 : f32 to vector<48x1xf32>
    %24 = arith.divf %22, %23 : vector<48x1xf32>
    %25 = vector.broadcast %17 : vector<48x1xf32> to vector<48x32xf32>
    %26 = arith.subf %8, %25 : vector<48x32xf32>
    %cst_17 = arith.constant 9.99999997E-7 : f32
    %27 = vector.broadcast %cst_17 : f32 to vector<48x1xf32>
    %28 = arith.addf %24, %27 : vector<48x1xf32>
    %29 = math.rsqrt %28 : vector<48x1xf32>
    %30 = vector.broadcast %29 : vector<48x1xf32> to vector<48x32xf32>
    %31 = arith.mulf %26, %30 : vector<48x32xf32>
    %32 = vector.broadcast %11 : vector<1x32xf32> to vector<48x32xf32>
    %33 = arith.mulf %31, %32 : vector<48x32xf32>
    %34 = vector.broadcast %13 : vector<1x32xf32> to vector<48x32xf32>
    %35 = arith.addf %33, %34 : vector<48x32xf32>
    %36 = arith.truncf %35 : vector<48x32xf32> to vector<48x32xbf16>
    %cst_18 = arith.constant 0.000000e+00 : f32
    %37 = vector.broadcast %cst_18 : f32 to vector<48x32xf32>
    %c0_19 = arith.constant 0 : index
    %c0_20 = arith.constant 0 : index
    %c0_21 = arith.constant 0 : index
    %c0_22 = arith.constant 0 : index
    %38 = vector.load %arg7[%c0_19, %c0_20, %c0_21, %c0_22] : memref<2x2x32x16xbf16, #tpu.memory_space<vmem>>, vector<1x1x32x16xbf16>
    %39 = vector.shape_cast %38 : vector<1x1x32x16xbf16> to vector<32x16xbf16>
    %cst_23 = arith.constant dense<0.000000e+00> : vector<48x16xf32>
    %40 = tpu.matmul %36, %39, %cst_23 {dimension_numbers = #tpu.dot_dimension_numbers<[1], [0], [0], [1], [0, 0, 1, 1], [], []>} : vector<48x32xbf16>, vector<32x16xbf16>, vector<48x16xf32> -> vector<48x16xf32>
    %c0_24 = arith.constant 0 : index
    %c0_25 = arith.constant 0 : index
    %c0_26 = arith.constant 0 : index
    %c0_27 = arith.constant 0 : index
    %41 = vector.load %arg8[%c0_24, %c0_25, %c0_26, %c0_27] : memref<2x2x1x16xf32, #tpu.memory_space<vmem>>, vector<1x1x1x16xf32>
    %42 = vector.shape_cast %41 : vector<1x1x1x16xf32> to vector<1x16xf32>
    %43 = vector.broadcast %42 : vector<1x16xf32> to vector<48x16xf32>
    %44 = arith.addf %40, %43 : vector<48x16xf32>
    %c0_28 = arith.constant 0 : index
    %c0_29 = arith.constant 0 : index
    %c0_30 = arith.constant 0 : index
    %c0_31 = arith.constant 0 : index
    %45 = vector.load %arg9[%c0_28, %c0_29, %c0_30, %c0_31] : memref<2x2x32x16xbf16, #tpu.memory_space<vmem>>, vector<1x1x32x16xbf16>
    %46 = vector.shape_cast %45 : vector<1x1x32x16xbf16> to vector<32x16xbf16>
    %cst_32 = arith.constant dense<0.000000e+00> : vector<48x16xf32>
    %47 = tpu.matmul %36, %46, %cst_32 {dimension_numbers = #tpu.dot_dimension_numbers<[1], [0], [0], [1], [0, 0, 1, 1], [], []>} : vector<48x32xbf16>, vector<32x16xbf16>, vector<48x16xf32> -> vector<48x16xf32>
    %c0_33 = arith.constant 0 : index
    %c0_34 = arith.constant 0 : index
    %c0_35 = arith.constant 0 : index
    %c0_36 = arith.constant 0 : index
    %48 = vector.load %arg10[%c0_33, %c0_34, %c0_35, %c0_36] : memref<2x2x1x16xf32, #tpu.memory_space<vmem>>, vector<1x1x1x16xf32>
    %49 = vector.shape_cast %48 : vector<1x1x1x16xf32> to vector<1x16xf32>
    %50 = vector.broadcast %49 : vector<1x16xf32> to vector<48x16xf32>
    %51 = arith.addf %47, %50 : vector<48x16xf32>
    %c0_37 = arith.constant 0 : index
    %c0_38 = arith.constant 0 : index
    %c0_39 = arith.constant 0 : index
    %c0_40 = arith.constant 0 : index
    %52 = vector.load %arg11[%c0_37, %c0_38, %c0_39, %c0_40] : memref<2x2x32x16xbf16, #tpu.memory_space<vmem>>, vector<1x1x32x16xbf16>
    %53 = vector.shape_cast %52 : vector<1x1x32x16xbf16> to vector<32x16xbf16>
    %cst_41 = arith.constant dense<0.000000e+00> : vector<48x16xf32>
    %54 = tpu.matmul %36, %53, %cst_41 {dimension_numbers = #tpu.dot_dimension_numbers<[1], [0], [0], [1], [0, 0, 1, 1], [], []>} : vector<48x32xbf16>, vector<32x16xbf16>, vector<48x16xf32> -> vector<48x16xf32>
    %c0_42 = arith.constant 0 : index
    %c0_43 = arith.constant 0 : index
    %c0_44 = arith.constant 0 : index
    %c0_45 = arith.constant 0 : index
    %55 = vector.load %arg12[%c0_42, %c0_43, %c0_44, %c0_45] : memref<2x2x1x16xf32, #tpu.memory_space<vmem>>, vector<1x1x1x16xf32>
    %56 = vector.shape_cast %55 : vector<1x1x1x16xf32> to vector<1x16xf32>
    %57 = vector.broadcast %56 : vector<1x16xf32> to vector<48x16xf32>
    %58 = arith.addf %54, %57 : vector<48x16xf32>
    %59 = vector.shape_cast %44 : vector<48x16xf32> to vector<2x24x16xf32>
    %60 = arith.truncf %59 : vector<2x24x16xf32> to vector<2x24x16xbf16>
    %61 = vector.shape_cast %51 : vector<48x16xf32> to vector<2x24x16xf32>
    %62 = arith.truncf %61 : vector<2x24x16xf32> to vector<2x24x16xbf16>
    %63 = vector.shape_cast %58 : vector<48x16xf32> to vector<2x24x16xf32>
    %64 = arith.truncf %63 : vector<2x24x16xf32> to vector<2x24x16xbf16>
    "tpu.trace_start"() <{level = 10 : i32, message = "bqd,bkd->bqk"}> : () -> ()
    %cst_46 = arith.constant dense<0.000000e+00> : vector<2x24x24xf32>
    %65 = tpu.matmul %60, %62, %cst_46 {dimension_numbers = #tpu.dot_dimension_numbers<[2], [2], [1], [1], [0, 0, 0, 1, 1, 1], [0], [0]>} : vector<2x24x16xbf16>, vector<2x24x16xbf16>, vector<2x24x24xf32> -> vector<2x24x24xf32>
    "tpu.trace_stop"() : () -> ()
    %cst_47 = arith.constant 2.500000e-01 : f32
    %66 = vector.broadcast %cst_47 : f32 to vector<2x24x24xf32>
    %67 = arith.mulf %65, %66 : vector<2x24x24xf32>
    %68 = vector.shape_cast %9 : vector<1x24xf32> to vector<1x1x24xf32>
    %69 = vector.broadcast %68 : vector<1x1x24xf32> to vector<2x24x24xf32>
    %70 = arith.addf %67, %69 : vector<2x24x24xf32>
    %cst_48 = arith.constant dense<0xFF800000> : vector<2x24xf32>
    %71 = vector.multi_reduction <maximumf>, %70, %cst_48 [2] : vector<2x24x24xf32> to vector<2x24xf32>
    %72 = vector.shape_cast %71 : vector<2x24xf32> to vector<2x24x1xf32>
    %73 = vector.broadcast %72 : vector<2x24x1xf32> to vector<2x24x24xf32>
    %74 = arith.subf %70, %73 : vector<2x24x24xf32>
    %75 = math.exp %74 : vector<2x24x24xf32>
    %cst_49 = arith.constant dense<0.000000e+00> : vector<2x24xf32>
    %76 = vector.multi_reduction <add>, %75, %cst_49 [2] : vector<2x24x24xf32> to vector<2x24xf32>
    %77 = vector.shape_cast %76 : vector<2x24xf32> to vector<2x24x1xf32>
    %78 = tpu.reciprocal %77 {approx = true} : vector<2x24x1xf32> -> vector<2x24x1xf32>
    %79 = vector.broadcast %78 : vector<2x24x1xf32> to vector<2x24x24xf32>
    %80 = arith.mulf %75, %79 : vector<2x24x24xf32>
    %81 = arith.truncf %80 : vector<2x24x24xf32> to vector<2x24x24xbf16>
    "tpu.trace_start"() <{level = 10 : i32, message = "bqk,bkd->bqd"}> : () -> ()
    %cst_50 = arith.constant dense<0.000000e+00> : vector<2x24x16xf32>
    %82 = tpu.matmul %81, %64, %cst_50 {dimension_numbers = #tpu.dot_dimension_numbers<[2], [1], [1], [2], [0, 0, 0, 1, 1, 2], [0], [0]>} : vector<2x24x24xbf16>, vector<2x24x16xbf16>, vector<2x24x16xf32> -> vector<2x24x16xf32>
    "tpu.trace_stop"() : () -> ()
    %83 = vector.shape_cast %82 : vector<2x24x16xf32> to vector<48x16xf32>
    %84 = arith.truncf %83 : vector<48x16xf32> to vector<48x16xbf16>
    %c0_51 = arith.constant 0 : index
    %c0_52 = arith.constant 0 : index
    %c0_53 = arith.constant 0 : index
    %c0_54 = arith.constant 0 : index
    %85 = vector.load %arg13[%c0_51, %c0_52, %c0_53, %c0_54] : memref<2x2x16x32xbf16, #tpu.memory_space<vmem>>, vector<1x1x16x32xbf16>
    %86 = vector.shape_cast %85 : vector<1x1x16x32xbf16> to vector<16x32xbf16>
    %cst_55 = arith.constant dense<0.000000e+00> : vector<48x32xf32>
    %87 = tpu.matmul %84, %86, %cst_55 {dimension_numbers = #tpu.dot_dimension_numbers<[1], [0], [0], [1], [0, 0, 1, 1], [], []>} : vector<48x16xbf16>, vector<16x32xbf16>, vector<48x32xf32> -> vector<48x32xf32>
    %88 = arith.addf %37, %87 : vector<48x32xf32>
    %c0_56 = arith.constant 0 : index
    %c1 = arith.constant 1 : index
    %c0_57 = arith.constant 0 : index
    %c0_58 = arith.constant 0 : index
    %89 = vector.load %arg7[%c0_56, %c1, %c0_57, %c0_58] : memref<2x2x32x16xbf16, #tpu.memory_space<vmem>>, vector<1x1x32x16xbf16>
    %90 = vector.shape_cast %89 : vector<1x1x32x16xbf16> to vector<32x16xbf16>
    %cst_59 = arith.constant dense<0.000000e+00> : vector<48x16xf32>
    %91 = tpu.matmul %36, %90, %cst_59 {dimension_numbers = #tpu.dot_dimension_numbers<[1], [0], [0], [1], [0, 0, 1, 1], [], []>} : vector<48x32xbf16>, vector<32x16xbf16>, vector<48x16xf32> -> vector<48x16xf32>
    %c0_60 = arith.constant 0 : index
    %c1_61 = arith.constant 1 : index
    %c0_62 = arith.constant 0 : index
    %c0_63 = arith.constant 0 : index
    %92 = vector.load %arg8[%c0_60, %c1_61, %c0_62, %c0_63] : memref<2x2x1x16xf32, #tpu.memory_space<vmem>>, vector<1x1x1x16xf32>
    %93 = vector.shape_cast %92 : vector<1x1x1x16xf32> to vector<1x16xf32>
    %94 = vector.broadcast %93 : vector<1x16xf32> to vector<48x16xf32>
    %95 = arith.addf %91, %94 : vector<48x16xf32>
    %c0_64 = arith.constant 0 : index
    %c1_65 = arith.constant 1 : index
    %c0_66 = arith.constant 0 : index
    %c0_67 = arith.constant 0 : index
    %96 = vector.load %arg9[%c0_64, %c1_65, %c0_66, %c0_67] : memref<2x2x32x16xbf16, #tpu.memory_space<vmem>>, vector<1x1x32x16xbf16>
    %97 = vector.shape_cast %96 : vector<1x1x32x16xbf16> to vector<32x16xbf16>
    %cst_68 = arith.constant dense<0.000000e+00> : vector<48x16xf32>
    %98 = tpu.matmul %36, %97, %cst_68 {dimension_numbers = #tpu.dot_dimension_numbers<[1], [0], [0], [1], [0, 0, 1, 1], [], []>} : vector<48x32xbf16>, vector<32x16xbf16>, vector<48x16xf32> -> vector<48x16xf32>
    %c0_69 = arith.constant 0 : index
    %c1_70 = arith.constant 1 : index
    %c0_71 = arith.constant 0 : index
    %c0_72 = arith.constant 0 : index
    %99 = vector.load %arg10[%c0_69, %c1_70, %c0_71, %c0_72] : memref<2x2x1x16xf32, #tpu.memory_space<vmem>>, vector<1x1x1x16xf32>
    %100 = vector.shape_cast %99 : vector<1x1x1x16xf32> to vector<1x16xf32>
    %101 = vector.broadcast %100 : vector<1x16xf32> to vector<48x16xf32>
    %102 = arith.addf %98, %101 : vector<48x16xf32>
    %c0_73 = arith.constant 0 : index
    %c1_74 = arith.constant 1 : index
    %c0_75 = arith.constant 0 : index
    %c0_76 = arith.constant 0 : index
    %103 = vector.load %arg11[%c0_73, %c1_74, %c0_75, %c0_76] : memref<2x2x32x16xbf16, #tpu.memory_space<vmem>>, vector<1x1x32x16xbf16>
    %104 = vector.shape_cast %103 : vector<1x1x32x16xbf16> to vector<32x16xbf16>
    %cst_77 = arith.constant dense<0.000000e+00> : vector<48x16xf32>
    %105 = tpu.matmul %36, %104, %cst_77 {dimension_numbers = #tpu.dot_dimension_numbers<[1], [0], [0], [1], [0, 0, 1, 1], [], []>} : vector<48x32xbf16>, vector<32x16xbf16>, vector<48x16xf32> -> vector<48x16xf32>
    %c0_78 = arith.constant 0 : index
    %c1_79 = arith.constant 1 : index
    %c0_80 = arith.constant 0 : index
    %c0_81 = arith.constant 0 : index
    %106 = vector.load %arg12[%c0_78, %c1_79, %c0_80, %c0_81] : memref<2x2x1x16xf32, #tpu.memory_space<vmem>>, vector<1x1x1x16xf32>
    %107 = vector.shape_cast %106 : vector<1x1x1x16xf32> to vector<1x16xf32>
    %108 = vector.broadcast %107 : vector<1x16xf32> to vector<48x16xf32>
    %109 = arith.addf %105, %108 : vector<48x16xf32>
    %110 = vector.shape_cast %95 : vector<48x16xf32> to vector<2x24x16xf32>
    %111 = arith.truncf %110 : vector<2x24x16xf32> to vector<2x24x16xbf16>
    %112 = vector.shape_cast %102 : vector<48x16xf32> to vector<2x24x16xf32>
    %113 = arith.truncf %112 : vector<2x24x16xf32> to vector<2x24x16xbf16>
    %114 = vector.shape_cast %109 : vector<48x16xf32> to vector<2x24x16xf32>
    %115 = arith.truncf %114 : vector<2x24x16xf32> to vector<2x24x16xbf16>
    "tpu.trace_start"() <{level = 10 : i32, message = "bqd,bkd->bqk"}> : () -> ()
    %cst_82 = arith.constant dense<0.000000e+00> : vector<2x24x24xf32>
    %116 = tpu.matmul %111, %113, %cst_82 {dimension_numbers = #tpu.dot_dimension_numbers<[2], [2], [1], [1], [0, 0, 0, 1, 1, 1], [0], [0]>} : vector<2x24x16xbf16>, vector<2x24x16xbf16>, vector<2x24x24xf32> -> vector<2x24x24xf32>
    "tpu.trace_stop"() : () -> ()
    %cst_83 = arith.constant 2.500000e-01 : f32
    %117 = vector.broadcast %cst_83 : f32 to vector<2x24x24xf32>
    %118 = arith.mulf %116, %117 : vector<2x24x24xf32>
    %119 = vector.shape_cast %9 : vector<1x24xf32> to vector<1x1x24xf32>
    %120 = vector.broadcast %119 : vector<1x1x24xf32> to vector<2x24x24xf32>
    %121 = arith.addf %118, %120 : vector<2x24x24xf32>
    %cst_84 = arith.constant dense<0xFF800000> : vector<2x24xf32>
    %122 = vector.multi_reduction <maximumf>, %121, %cst_84 [2] : vector<2x24x24xf32> to vector<2x24xf32>
    %123 = vector.shape_cast %122 : vector<2x24xf32> to vector<2x24x1xf32>
    %124 = vector.broadcast %123 : vector<2x24x1xf32> to vector<2x24x24xf32>
    %125 = arith.subf %121, %124 : vector<2x24x24xf32>
    %126 = math.exp %125 : vector<2x24x24xf32>
    %cst_85 = arith.constant dense<0.000000e+00> : vector<2x24xf32>
    %127 = vector.multi_reduction <add>, %126, %cst_85 [2] : vector<2x24x24xf32> to vector<2x24xf32>
    %128 = vector.shape_cast %127 : vector<2x24xf32> to vector<2x24x1xf32>
    %129 = tpu.reciprocal %128 {approx = true} : vector<2x24x1xf32> -> vector<2x24x1xf32>
    %130 = vector.broadcast %129 : vector<2x24x1xf32> to vector<2x24x24xf32>
    %131 = arith.mulf %126, %130 : vector<2x24x24xf32>
    %132 = arith.truncf %131 : vector<2x24x24xf32> to vector<2x24x24xbf16>
    "tpu.trace_start"() <{level = 10 : i32, message = "bqk,bkd->bqd"}> : () -> ()
    %cst_86 = arith.constant dense<0.000000e+00> : vector<2x24x16xf32>
    %133 = tpu.matmul %132, %115, %cst_86 {dimension_numbers = #tpu.dot_dimension_numbers<[2], [1], [1], [2], [0, 0, 0, 1, 1, 2], [0], [0]>} : vector<2x24x24xbf16>, vector<2x24x16xbf16>, vector<2x24x16xf32> -> vector<2x24x16xf32>
    "tpu.trace_stop"() : () -> ()
    %134 = vector.shape_cast %133 : vector<2x24x16xf32> to vector<48x16xf32>
    %135 = arith.truncf %134 : vector<48x16xf32> to vector<48x16xbf16>
    %c0_87 = arith.constant 0 : index
    %c1_88 = arith.constant 1 : index
    %c0_89 = arith.constant 0 : index
    %c0_90 = arith.constant 0 : index
    %136 = vector.load %arg13[%c0_87, %c1_88, %c0_89, %c0_90] : memref<2x2x16x32xbf16, #tpu.memory_space<vmem>>, vector<1x1x16x32xbf16>
    %137 = vector.shape_cast %136 : vector<1x1x16x32xbf16> to vector<16x32xbf16>
    %cst_91 = arith.constant dense<0.000000e+00> : vector<48x32xf32>
    %138 = tpu.matmul %135, %137, %cst_91 {dimension_numbers = #tpu.dot_dimension_numbers<[1], [0], [0], [1], [0, 0, 1, 1], [], []>} : vector<48x16xbf16>, vector<16x32xbf16>, vector<48x32xf32> -> vector<48x32xf32>
    %139 = arith.addf %88, %138 : vector<48x32xf32>
    %140 = arith.addf %8, %139 : vector<48x32xf32>
    %c0_92 = arith.constant 0 : index
    %c0_93 = arith.constant 0 : index
    %c0_94 = arith.constant 0 : index
    %141 = vector.load %arg14[%c0_92, %c0_93, %c0_94] : memref<2x1x32xf32, #tpu.memory_space<vmem>>, vector<1x1x32xf32>
    %142 = vector.shape_cast %141 : vector<1x1x32xf32> to vector<1x32xf32>
    %143 = vector.broadcast %142 : vector<1x32xf32> to vector<48x32xf32>
    %144 = arith.addf %140, %143 : vector<48x32xf32>
    %c0_95 = arith.constant 0 : index
    %c0_96 = arith.constant 0 : index
    %c0_97 = arith.constant 0 : index
    %145 = vector.load %arg15[%c0_95, %c0_96, %c0_97] : memref<2x1x32xf32, #tpu.memory_space<vmem>>, vector<1x1x32xf32>
    %146 = vector.shape_cast %145 : vector<1x1x32xf32> to vector<1x32xf32>
    %c0_98 = arith.constant 0 : index
    %c0_99 = arith.constant 0 : index
    %c0_100 = arith.constant 0 : index
    %147 = vector.load %arg16[%c0_98, %c0_99, %c0_100] : memref<2x1x32xf32, #tpu.memory_space<vmem>>, vector<1x1x32xf32>
    %148 = vector.shape_cast %147 : vector<1x1x32xf32> to vector<1x32xf32>
    %cst_101 = arith.constant dense<0.000000e+00> : vector<48xf32>
    %149 = vector.multi_reduction <add>, %144, %cst_101 [1] : vector<48x32xf32> to vector<48xf32>
    %150 = vector.shape_cast %149 : vector<48xf32> to vector<48x1xf32>
    %cst_102 = arith.constant 3.200000e+01 : f32
    %151 = vector.broadcast %cst_102 : f32 to vector<48x1xf32>
    %152 = arith.divf %150, %151 : vector<48x1xf32>
    %153 = vector.broadcast %152 : vector<48x1xf32> to vector<48x32xf32>
    %154 = arith.subf %144, %153 : vector<48x32xf32>
    %155 = arith.mulf %154, %154 : vector<48x32xf32>
    %cst_103 = arith.constant dense<0.000000e+00> : vector<48xf32>
    %156 = vector.multi_reduction <add>, %155, %cst_103 [1] : vector<48x32xf32> to vector<48xf32>
    %157 = vector.shape_cast %156 : vector<48xf32> to vector<48x1xf32>
    %cst_104 = arith.constant 3.200000e+01 : f32
    %158 = vector.broadcast %cst_104 : f32 to vector<48x1xf32>
    %159 = arith.divf %157, %158 : vector<48x1xf32>
    %160 = vector.broadcast %152 : vector<48x1xf32> to vector<48x32xf32>
    %161 = arith.subf %144, %160 : vector<48x32xf32>
    %cst_105 = arith.constant 9.99999997E-7 : f32
    %162 = vector.broadcast %cst_105 : f32 to vector<48x1xf32>
    %163 = arith.addf %159, %162 : vector<48x1xf32>
    %164 = math.rsqrt %163 : vector<48x1xf32>
    %165 = vector.broadcast %164 : vector<48x1xf32> to vector<48x32xf32>
    %166 = arith.mulf %161, %165 : vector<48x32xf32>
    %167 = vector.broadcast %146 : vector<1x32xf32> to vector<48x32xf32>
    %168 = arith.mulf %166, %167 : vector<48x32xf32>
    %169 = vector.broadcast %148 : vector<1x32xf32> to vector<48x32xf32>
    %170 = arith.addf %168, %169 : vector<48x32xf32>
    %171 = arith.truncf %170 : vector<48x32xf32> to vector<48x32xbf16>
    %c0_106 = arith.constant 0 : index
    %c0_107 = arith.constant 0 : index
    %c0_108 = arith.constant 0 : index
    %172 = vector.load %arg17[%c0_106, %c0_107, %c0_108] : memref<2x32x128xbf16, #tpu.memory_space<vmem>>, vector<1x32x128xbf16>
    %173 = vector.shape_cast %172 : vector<1x32x128xbf16> to vector<32x128xbf16>
    %cst_109 = arith.constant dense<0.000000e+00> : vector<48x128xf32>
    %174 = tpu.matmul %171, %173, %cst_109 {dimension_numbers = #tpu.dot_dimension_numbers<[1], [0], [0], [1], [0, 0, 1, 1], [], []>} : vector<48x32xbf16>, vector<32x128xbf16>, vector<48x128xf32> -> vector<48x128xf32>
    %c0_110 = arith.constant 0 : index
    %c0_111 = arith.constant 0 : index
    %c0_112 = arith.constant 0 : index
    %175 = vector.load %arg18[%c0_110, %c0_111, %c0_112] : memref<2x1x128xf32, #tpu.memory_space<vmem>>, vector<1x1x128xf32>
    %176 = vector.shape_cast %175 : vector<1x1x128xf32> to vector<1x128xf32>
    %177 = vector.broadcast %176 : vector<1x128xf32> to vector<48x128xf32>
    %178 = arith.addf %174, %177 : vector<48x128xf32>
    %179 = arith.mulf %178, %178 : vector<48x128xf32>
    %180 = arith.mulf %178, %179 : vector<48x128xf32>
    %cst_113 = arith.constant 4.471500e-02 : f32
    %181 = vector.broadcast %cst_113 : f32 to vector<48x128xf32>
    %182 = arith.mulf %181, %180 : vector<48x128xf32>
    %183 = arith.addf %178, %182 : vector<48x128xf32>
    %cst_114 = arith.constant 0.797884583 : f32
    %184 = vector.broadcast %cst_114 : f32 to vector<48x128xf32>
    %185 = arith.mulf %184, %183 : vector<48x128xf32>
    %186 = math.tanh %185 : vector<48x128xf32>
    %cst_115 = arith.constant 1.000000e+00 : f32
    %187 = vector.broadcast %cst_115 : f32 to vector<48x128xf32>
    %188 = arith.addf %187, %186 : vector<48x128xf32>
    %cst_116 = arith.constant 5.000000e-01 : f32
    %189 = vector.broadcast %cst_116 : f32 to vector<48x128xf32>
    %190 = arith.mulf %189, %188 : vector<48x128xf32>
    %191 = arith.mulf %178, %190 : vector<48x128xf32>
    %192 = arith.truncf %191 : vector<48x128xf32> to vector<48x128xbf16>
    %c0_117 = arith.constant 0 : index
    %c0_118 = arith.constant 0 : index
    %c0_119 = arith.constant 0 : index
    %193 = vector.load %arg19[%c0_117, %c0_118, %c0_119] : memref<2x128x32xbf16, #tpu.memory_space<vmem>>, vector<1x128x32xbf16>
    %194 = vector.shape_cast %193 : vector<1x128x32xbf16> to vector<128x32xbf16>
    %cst_120 = arith.constant dense<0.000000e+00> : vector<48x32xf32>
    %195 = tpu.matmul %192, %194, %cst_120 {dimension_numbers = #tpu.dot_dimension_numbers<[1], [0], [0], [1], [0, 0, 1, 1], [], []>} : vector<48x128xbf16>, vector<128x32xbf16>, vector<48x32xf32> -> vector<48x32xf32>
    %c0_121 = arith.constant 0 : index
    %c0_122 = arith.constant 0 : index
    %c0_123 = arith.constant 0 : index
    %196 = vector.load %arg20[%c0_121, %c0_122, %c0_123] : memref<2x1x32xf32, #tpu.memory_space<vmem>>, vector<1x1x32xf32>
    %197 = vector.shape_cast %196 : vector<1x1x32xf32> to vector<1x32xf32>
    %198 = vector.broadcast %197 : vector<1x32xf32> to vector<48x32xf32>
    %199 = arith.addf %195, %198 : vector<48x32xf32>
    %200 = arith.addf %144, %199 : vector<48x32xf32>
    %c1_124 = arith.constant 1 : index
    %c0_125 = arith.constant 0 : index
    %c0_126 = arith.constant 0 : index
    %201 = vector.load %arg5[%c1_124, %c0_125, %c0_126] : memref<2x1x32xf32, #tpu.memory_space<vmem>>, vector<1x1x32xf32>
    %202 = vector.shape_cast %201 : vector<1x1x32xf32> to vector<1x32xf32>
    %c1_127 = arith.constant 1 : index
    %c0_128 = arith.constant 0 : index
    %c0_129 = arith.constant 0 : index
    %203 = vector.load %arg6[%c1_127, %c0_128, %c0_129] : memref<2x1x32xf32, #tpu.memory_space<vmem>>, vector<1x1x32xf32>
    %204 = vector.shape_cast %203 : vector<1x1x32xf32> to vector<1x32xf32>
    %cst_130 = arith.constant dense<0.000000e+00> : vector<48xf32>
    %205 = vector.multi_reduction <add>, %200, %cst_130 [1] : vector<48x32xf32> to vector<48xf32>
    %206 = vector.shape_cast %205 : vector<48xf32> to vector<48x1xf32>
    %cst_131 = arith.constant 3.200000e+01 : f32
    %207 = vector.broadcast %cst_131 : f32 to vector<48x1xf32>
    %208 = arith.divf %206, %207 : vector<48x1xf32>
    %209 = vector.broadcast %208 : vector<48x1xf32> to vector<48x32xf32>
    %210 = arith.subf %200, %209 : vector<48x32xf32>
    %211 = arith.mulf %210, %210 : vector<48x32xf32>
    %cst_132 = arith.constant dense<0.000000e+00> : vector<48xf32>
    %212 = vector.multi_reduction <add>, %211, %cst_132 [1] : vector<48x32xf32> to vector<48xf32>
    %213 = vector.shape_cast %212 : vector<48xf32> to vector<48x1xf32>
    %cst_133 = arith.constant 3.200000e+01 : f32
    %214 = vector.broadcast %cst_133 : f32 to vector<48x1xf32>
    %215 = arith.divf %213, %214 : vector<48x1xf32>
    %216 = vector.broadcast %208 : vector<48x1xf32> to vector<48x32xf32>
    %217 = arith.subf %200, %216 : vector<48x32xf32>
    %cst_134 = arith.constant 9.99999997E-7 : f32
    %218 = vector.broadcast %cst_134 : f32 to vector<48x1xf32>
    %219 = arith.addf %215, %218 : vector<48x1xf32>
    %220 = math.rsqrt %219 : vector<48x1xf32>
    %221 = vector.broadcast %220 : vector<48x1xf32> to vector<48x32xf32>
    %222 = arith.mulf %217, %221 : vector<48x32xf32>
    %223 = vector.broadcast %202 : vector<1x32xf32> to vector<48x32xf32>
    %224 = arith.mulf %222, %223 : vector<48x32xf32>
    %225 = vector.broadcast %204 : vector<1x32xf32> to vector<48x32xf32>
    %226 = arith.addf %224, %225 : vector<48x32xf32>
    %227 = arith.truncf %226 : vector<48x32xf32> to vector<48x32xbf16>
    %cst_135 = arith.constant 0.000000e+00 : f32
    %228 = vector.broadcast %cst_135 : f32 to vector<48x32xf32>
    %c1_136 = arith.constant 1 : index
    %c0_137 = arith.constant 0 : index
    %c0_138 = arith.constant 0 : index
    %c0_139 = arith.constant 0 : index
    %229 = vector.load %arg7[%c1_136, %c0_137, %c0_138, %c0_139] : memref<2x2x32x16xbf16, #tpu.memory_space<vmem>>, vector<1x1x32x16xbf16>
    %230 = vector.shape_cast %229 : vector<1x1x32x16xbf16> to vector<32x16xbf16>
    %cst_140 = arith.constant dense<0.000000e+00> : vector<48x16xf32>
    %231 = tpu.matmul %227, %230, %cst_140 {dimension_numbers = #tpu.dot_dimension_numbers<[1], [0], [0], [1], [0, 0, 1, 1], [], []>} : vector<48x32xbf16>, vector<32x16xbf16>, vector<48x16xf32> -> vector<48x16xf32>
    %c1_141 = arith.constant 1 : index
    %c0_142 = arith.constant 0 : index
    %c0_143 = arith.constant 0 : index
    %c0_144 = arith.constant 0 : index
    %232 = vector.load %arg8[%c1_141, %c0_142, %c0_143, %c0_144] : memref<2x2x1x16xf32, #tpu.memory_space<vmem>>, vector<1x1x1x16xf32>
    %233 = vector.shape_cast %232 : vector<1x1x1x16xf32> to vector<1x16xf32>
    %234 = vector.broadcast %233 : vector<1x16xf32> to vector<48x16xf32>
    %235 = arith.addf %231, %234 : vector<48x16xf32>
    %c1_145 = arith.constant 1 : index
    %c0_146 = arith.constant 0 : index
    %c0_147 = arith.constant 0 : index
    %c0_148 = arith.constant 0 : index
    %236 = vector.load %arg9[%c1_145, %c0_146, %c0_147, %c0_148] : memref<2x2x32x16xbf16, #tpu.memory_space<vmem>>, vector<1x1x32x16xbf16>
    %237 = vector.shape_cast %236 : vector<1x1x32x16xbf16> to vector<32x16xbf16>
    %cst_149 = arith.constant dense<0.000000e+00> : vector<48x16xf32>
    %238 = tpu.matmul %227, %237, %cst_149 {dimension_numbers = #tpu.dot_dimension_numbers<[1], [0], [0], [1], [0, 0, 1, 1], [], []>} : vector<48x32xbf16>, vector<32x16xbf16>, vector<48x16xf32> -> vector<48x16xf32>
    %c1_150 = arith.constant 1 : index
    %c0_151 = arith.constant 0 : index
    %c0_152 = arith.constant 0 : index
    %c0_153 = arith.constant 0 : index
    %239 = vector.load %arg10[%c1_150, %c0_151, %c0_152, %c0_153] : memref<2x2x1x16xf32, #tpu.memory_space<vmem>>, vector<1x1x1x16xf32>
    %240 = vector.shape_cast %239 : vector<1x1x1x16xf32> to vector<1x16xf32>
    %241 = vector.broadcast %240 : vector<1x16xf32> to vector<48x16xf32>
    %242 = arith.addf %238, %241 : vector<48x16xf32>
    %c1_154 = arith.constant 1 : index
    %c0_155 = arith.constant 0 : index
    %c0_156 = arith.constant 0 : index
    %c0_157 = arith.constant 0 : index
    %243 = vector.load %arg11[%c1_154, %c0_155, %c0_156, %c0_157] : memref<2x2x32x16xbf16, #tpu.memory_space<vmem>>, vector<1x1x32x16xbf16>
    %244 = vector.shape_cast %243 : vector<1x1x32x16xbf16> to vector<32x16xbf16>
    %cst_158 = arith.constant dense<0.000000e+00> : vector<48x16xf32>
    %245 = tpu.matmul %227, %244, %cst_158 {dimension_numbers = #tpu.dot_dimension_numbers<[1], [0], [0], [1], [0, 0, 1, 1], [], []>} : vector<48x32xbf16>, vector<32x16xbf16>, vector<48x16xf32> -> vector<48x16xf32>
    %c1_159 = arith.constant 1 : index
    %c0_160 = arith.constant 0 : index
    %c0_161 = arith.constant 0 : index
    %c0_162 = arith.constant 0 : index
    %246 = vector.load %arg12[%c1_159, %c0_160, %c0_161, %c0_162] : memref<2x2x1x16xf32, #tpu.memory_space<vmem>>, vector<1x1x1x16xf32>
    %247 = vector.shape_cast %246 : vector<1x1x1x16xf32> to vector<1x16xf32>
    %248 = vector.broadcast %247 : vector<1x16xf32> to vector<48x16xf32>
    %249 = arith.addf %245, %248 : vector<48x16xf32>
    %250 = vector.shape_cast %235 : vector<48x16xf32> to vector<2x24x16xf32>
    %251 = arith.truncf %250 : vector<2x24x16xf32> to vector<2x24x16xbf16>
    %252 = vector.shape_cast %242 : vector<48x16xf32> to vector<2x24x16xf32>
    %253 = arith.truncf %252 : vector<2x24x16xf32> to vector<2x24x16xbf16>
    %254 = vector.shape_cast %249 : vector<48x16xf32> to vector<2x24x16xf32>
    %255 = arith.truncf %254 : vector<2x24x16xf32> to vector<2x24x16xbf16>
    "tpu.trace_start"() <{level = 10 : i32, message = "bqd,bkd->bqk"}> : () -> ()
    %cst_163 = arith.constant dense<0.000000e+00> : vector<2x24x24xf32>
    %256 = tpu.matmul %251, %253, %cst_163 {dimension_numbers = #tpu.dot_dimension_numbers<[2], [2], [1], [1], [0, 0, 0, 1, 1, 1], [0], [0]>} : vector<2x24x16xbf16>, vector<2x24x16xbf16>, vector<2x24x24xf32> -> vector<2x24x24xf32>
    "tpu.trace_stop"() : () -> ()
    %cst_164 = arith.constant 2.500000e-01 : f32
    %257 = vector.broadcast %cst_164 : f32 to vector<2x24x24xf32>
    %258 = arith.mulf %256, %257 : vector<2x24x24xf32>
    %259 = vector.shape_cast %9 : vector<1x24xf32> to vector<1x1x24xf32>
    %260 = vector.broadcast %259 : vector<1x1x24xf32> to vector<2x24x24xf32>
    %261 = arith.addf %258, %260 : vector<2x24x24xf32>
    %cst_165 = arith.constant dense<0xFF800000> : vector<2x24xf32>
    %262 = vector.multi_reduction <maximumf>, %261, %cst_165 [2] : vector<2x24x24xf32> to vector<2x24xf32>
    %263 = vector.shape_cast %262 : vector<2x24xf32> to vector<2x24x1xf32>
    %264 = vector.broadcast %263 : vector<2x24x1xf32> to vector<2x24x24xf32>
    %265 = arith.subf %261, %264 : vector<2x24x24xf32>
    %266 = math.exp %265 : vector<2x24x24xf32>
    %cst_166 = arith.constant dense<0.000000e+00> : vector<2x24xf32>
    %267 = vector.multi_reduction <add>, %266, %cst_166 [2] : vector<2x24x24xf32> to vector<2x24xf32>
    %268 = vector.shape_cast %267 : vector<2x24xf32> to vector<2x24x1xf32>
    %269 = tpu.reciprocal %268 {approx = true} : vector<2x24x1xf32> -> vector<2x24x1xf32>
    %270 = vector.broadcast %269 : vector<2x24x1xf32> to vector<2x24x24xf32>
    %271 = arith.mulf %266, %270 : vector<2x24x24xf32>
    %272 = arith.truncf %271 : vector<2x24x24xf32> to vector<2x24x24xbf16>
    "tpu.trace_start"() <{level = 10 : i32, message = "bqk,bkd->bqd"}> : () -> ()
    %cst_167 = arith.constant dense<0.000000e+00> : vector<2x24x16xf32>
    %273 = tpu.matmul %272, %255, %cst_167 {dimension_numbers = #tpu.dot_dimension_numbers<[2], [1], [1], [2], [0, 0, 0, 1, 1, 2], [0], [0]>} : vector<2x24x24xbf16>, vector<2x24x16xbf16>, vector<2x24x16xf32> -> vector<2x24x16xf32>
    "tpu.trace_stop"() : () -> ()
    %274 = vector.shape_cast %273 : vector<2x24x16xf32> to vector<48x16xf32>
    %275 = arith.truncf %274 : vector<48x16xf32> to vector<48x16xbf16>
    %c1_168 = arith.constant 1 : index
    %c0_169 = arith.constant 0 : index
    %c0_170 = arith.constant 0 : index
    %c0_171 = arith.constant 0 : index
    %276 = vector.load %arg13[%c1_168, %c0_169, %c0_170, %c0_171] : memref<2x2x16x32xbf16, #tpu.memory_space<vmem>>, vector<1x1x16x32xbf16>
    %277 = vector.shape_cast %276 : vector<1x1x16x32xbf16> to vector<16x32xbf16>
    %cst_172 = arith.constant dense<0.000000e+00> : vector<48x32xf32>
    %278 = tpu.matmul %275, %277, %cst_172 {dimension_numbers = #tpu.dot_dimension_numbers<[1], [0], [0], [1], [0, 0, 1, 1], [], []>} : vector<48x16xbf16>, vector<16x32xbf16>, vector<48x32xf32> -> vector<48x32xf32>
    %279 = arith.addf %228, %278 : vector<48x32xf32>
    %c1_173 = arith.constant 1 : index
    %c1_174 = arith.constant 1 : index
    %c0_175 = arith.constant 0 : index
    %c0_176 = arith.constant 0 : index
    %280 = vector.load %arg7[%c1_173, %c1_174, %c0_175, %c0_176] : memref<2x2x32x16xbf16, #tpu.memory_space<vmem>>, vector<1x1x32x16xbf16>
    %281 = vector.shape_cast %280 : vector<1x1x32x16xbf16> to vector<32x16xbf16>
    %cst_177 = arith.constant dense<0.000000e+00> : vector<48x16xf32>
    %282 = tpu.matmul %227, %281, %cst_177 {dimension_numbers = #tpu.dot_dimension_numbers<[1], [0], [0], [1], [0, 0, 1, 1], [], []>} : vector<48x32xbf16>, vector<32x16xbf16>, vector<48x16xf32> -> vector<48x16xf32>
    %c1_178 = arith.constant 1 : index
    %c1_179 = arith.constant 1 : index
    %c0_180 = arith.constant 0 : index
    %c0_181 = arith.constant 0 : index
    %283 = vector.load %arg8[%c1_178, %c1_179, %c0_180, %c0_181] : memref<2x2x1x16xf32, #tpu.memory_space<vmem>>, vector<1x1x1x16xf32>
    %284 = vector.shape_cast %283 : vector<1x1x1x16xf32> to vector<1x16xf32>
    %285 = vector.broadcast %284 : vector<1x16xf32> to vector<48x16xf32>
    %286 = arith.addf %282, %285 : vector<48x16xf32>
    %c1_182 = arith.constant 1 : index
    %c1_183 = arith.constant 1 : index
    %c0_184 = arith.constant 0 : index
    %c0_185 = arith.constant 0 : index
    %287 = vector.load %arg9[%c1_182, %c1_183, %c0_184, %c0_185] : memref<2x2x32x16xbf16, #tpu.memory_space<vmem>>, vector<1x1x32x16xbf16>
    %288 = vector.shape_cast %287 : vector<1x1x32x16xbf16> to vector<32x16xbf16>
    %cst_186 = arith.constant dense<0.000000e+00> : vector<48x16xf32>
    %289 = tpu.matmul %227, %288, %cst_186 {dimension_numbers = #tpu.dot_dimension_numbers<[1], [0], [0], [1], [0, 0, 1, 1], [], []>} : vector<48x32xbf16>, vector<32x16xbf16>, vector<48x16xf32> -> vector<48x16xf32>
    %c1_187 = arith.constant 1 : index
    %c1_188 = arith.constant 1 : index
    %c0_189 = arith.constant 0 : index
    %c0_190 = arith.constant 0 : index
    %290 = vector.load %arg10[%c1_187, %c1_188, %c0_189, %c0_190] : memref<2x2x1x16xf32, #tpu.memory_space<vmem>>, vector<1x1x1x16xf32>
    %291 = vector.shape_cast %290 : vector<1x1x1x16xf32> to vector<1x16xf32>
    %292 = vector.broadcast %291 : vector<1x16xf32> to vector<48x16xf32>
    %293 = arith.addf %289, %292 : vector<48x16xf32>
    %c1_191 = arith.constant 1 : index
    %c1_192 = arith.constant 1 : index
    %c0_193 = arith.constant 0 : index
    %c0_194 = arith.constant 0 : index
    %294 = vector.load %arg11[%c1_191, %c1_192, %c0_193, %c0_194] : memref<2x2x32x16xbf16, #tpu.memory_space<vmem>>, vector<1x1x32x16xbf16>
    %295 = vector.shape_cast %294 : vector<1x1x32x16xbf16> to vector<32x16xbf16>
    %cst_195 = arith.constant dense<0.000000e+00> : vector<48x16xf32>
    %296 = tpu.matmul %227, %295, %cst_195 {dimension_numbers = #tpu.dot_dimension_numbers<[1], [0], [0], [1], [0, 0, 1, 1], [], []>} : vector<48x32xbf16>, vector<32x16xbf16>, vector<48x16xf32> -> vector<48x16xf32>
    %c1_196 = arith.constant 1 : index
    %c1_197 = arith.constant 1 : index
    %c0_198 = arith.constant 0 : index
    %c0_199 = arith.constant 0 : index
    %297 = vector.load %arg12[%c1_196, %c1_197, %c0_198, %c0_199] : memref<2x2x1x16xf32, #tpu.memory_space<vmem>>, vector<1x1x1x16xf32>
    %298 = vector.shape_cast %297 : vector<1x1x1x16xf32> to vector<1x16xf32>
    %299 = vector.broadcast %298 : vector<1x16xf32> to vector<48x16xf32>
    %300 = arith.addf %296, %299 : vector<48x16xf32>
    %301 = vector.shape_cast %286 : vector<48x16xf32> to vector<2x24x16xf32>
    %302 = arith.truncf %301 : vector<2x24x16xf32> to vector<2x24x16xbf16>
    %303 = vector.shape_cast %293 : vector<48x16xf32> to vector<2x24x16xf32>
    %304 = arith.truncf %303 : vector<2x24x16xf32> to vector<2x24x16xbf16>
    %305 = vector.shape_cast %300 : vector<48x16xf32> to vector<2x24x16xf32>
    %306 = arith.truncf %305 : vector<2x24x16xf32> to vector<2x24x16xbf16>
    "tpu.trace_start"() <{level = 10 : i32, message = "bqd,bkd->bqk"}> : () -> ()
    %cst_200 = arith.constant dense<0.000000e+00> : vector<2x24x24xf32>
    %307 = tpu.matmul %302, %304, %cst_200 {dimension_numbers = #tpu.dot_dimension_numbers<[2], [2], [1], [1], [0, 0, 0, 1, 1, 1], [0], [0]>} : vector<2x24x16xbf16>, vector<2x24x16xbf16>, vector<2x24x24xf32> -> vector<2x24x24xf32>
    "tpu.trace_stop"() : () -> ()
    %cst_201 = arith.constant 2.500000e-01 : f32
    %308 = vector.broadcast %cst_201 : f32 to vector<2x24x24xf32>
    %309 = arith.mulf %307, %308 : vector<2x24x24xf32>
    %310 = vector.shape_cast %9 : vector<1x24xf32> to vector<1x1x24xf32>
    %311 = vector.broadcast %310 : vector<1x1x24xf32> to vector<2x24x24xf32>
    %312 = arith.addf %309, %311 : vector<2x24x24xf32>
    %cst_202 = arith.constant dense<0xFF800000> : vector<2x24xf32>
    %313 = vector.multi_reduction <maximumf>, %312, %cst_202 [2] : vector<2x24x24xf32> to vector<2x24xf32>
    %314 = vector.shape_cast %313 : vector<2x24xf32> to vector<2x24x1xf32>
    %315 = vector.broadcast %314 : vector<2x24x1xf32> to vector<2x24x24xf32>
    %316 = arith.subf %312, %315 : vector<2x24x24xf32>
    %317 = math.exp %316 : vector<2x24x24xf32>
    %cst_203 = arith.constant dense<0.000000e+00> : vector<2x24xf32>
    %318 = vector.multi_reduction <add>, %317, %cst_203 [2] : vector<2x24x24xf32> to vector<2x24xf32>
    %319 = vector.shape_cast %318 : vector<2x24xf32> to vector<2x24x1xf32>
    %320 = tpu.reciprocal %319 {approx = true} : vector<2x24x1xf32> -> vector<2x24x1xf32>
    %321 = vector.broadcast %320 : vector<2x24x1xf32> to vector<2x24x24xf32>
    %322 = arith.mulf %317, %321 : vector<2x24x24xf32>
    %323 = arith.truncf %322 : vector<2x24x24xf32> to vector<2x24x24xbf16>
    "tpu.trace_start"() <{level = 10 : i32, message = "bqk,bkd->bqd"}> : () -> ()
    %cst_204 = arith.constant dense<0.000000e+00> : vector<2x24x16xf32>
    %324 = tpu.matmul %323, %306, %cst_204 {dimension_numbers = #tpu.dot_dimension_numbers<[2], [1], [1], [2], [0, 0, 0, 1, 1, 2], [0], [0]>} : vector<2x24x24xbf16>, vector<2x24x16xbf16>, vector<2x24x16xf32> -> vector<2x24x16xf32>
    "tpu.trace_stop"() : () -> ()
    %325 = vector.shape_cast %324 : vector<2x24x16xf32> to vector<48x16xf32>
    %326 = arith.truncf %325 : vector<48x16xf32> to vector<48x16xbf16>
    %c1_205 = arith.constant 1 : index
    %c1_206 = arith.constant 1 : index
    %c0_207 = arith.constant 0 : index
    %c0_208 = arith.constant 0 : index
    %327 = vector.load %arg13[%c1_205, %c1_206, %c0_207, %c0_208] : memref<2x2x16x32xbf16, #tpu.memory_space<vmem>>, vector<1x1x16x32xbf16>
    %328 = vector.shape_cast %327 : vector<1x1x16x32xbf16> to vector<16x32xbf16>
    %cst_209 = arith.constant dense<0.000000e+00> : vector<48x32xf32>
    %329 = tpu.matmul %326, %328, %cst_209 {dimension_numbers = #tpu.dot_dimension_numbers<[1], [0], [0], [1], [0, 0, 1, 1], [], []>} : vector<48x16xbf16>, vector<16x32xbf16>, vector<48x32xf32> -> vector<48x32xf32>
    %330 = arith.addf %279, %329 : vector<48x32xf32>
    %331 = arith.addf %200, %330 : vector<48x32xf32>
    %c1_210 = arith.constant 1 : index
    %c0_211 = arith.constant 0 : index
    %c0_212 = arith.constant 0 : index
    %332 = vector.load %arg14[%c1_210, %c0_211, %c0_212] : memref<2x1x32xf32, #tpu.memory_space<vmem>>, vector<1x1x32xf32>
    %333 = vector.shape_cast %332 : vector<1x1x32xf32> to vector<1x32xf32>
    %334 = vector.broadcast %333 : vector<1x32xf32> to vector<48x32xf32>
    %335 = arith.addf %331, %334 : vector<48x32xf32>
    %c1_213 = arith.constant 1 : index
    %c0_214 = arith.constant 0 : index
    %c0_215 = arith.constant 0 : index
    %336 = vector.load %arg15[%c1_213, %c0_214, %c0_215] : memref<2x1x32xf32, #tpu.memory_space<vmem>>, vector<1x1x32xf32>
    %337 = vector.shape_cast %336 : vector<1x1x32xf32> to vector<1x32xf32>
    %c1_216 = arith.constant 1 : index
    %c0_217 = arith.constant 0 : index
    %c0_218 = arith.constant 0 : index
    %338 = vector.load %arg16[%c1_216, %c0_217, %c0_218] : memref<2x1x32xf32, #tpu.memory_space<vmem>>, vector<1x1x32xf32>
    %339 = vector.shape_cast %338 : vector<1x1x32xf32> to vector<1x32xf32>
    %cst_219 = arith.constant dense<0.000000e+00> : vector<48xf32>
    %340 = vector.multi_reduction <add>, %335, %cst_219 [1] : vector<48x32xf32> to vector<48xf32>
    %341 = vector.shape_cast %340 : vector<48xf32> to vector<48x1xf32>
    %cst_220 = arith.constant 3.200000e+01 : f32
    %342 = vector.broadcast %cst_220 : f32 to vector<48x1xf32>
    %343 = arith.divf %341, %342 : vector<48x1xf32>
    %344 = vector.broadcast %343 : vector<48x1xf32> to vector<48x32xf32>
    %345 = arith.subf %335, %344 : vector<48x32xf32>
    %346 = arith.mulf %345, %345 : vector<48x32xf32>
    %cst_221 = arith.constant dense<0.000000e+00> : vector<48xf32>
    %347 = vector.multi_reduction <add>, %346, %cst_221 [1] : vector<48x32xf32> to vector<48xf32>
    %348 = vector.shape_cast %347 : vector<48xf32> to vector<48x1xf32>
    %cst_222 = arith.constant 3.200000e+01 : f32
    %349 = vector.broadcast %cst_222 : f32 to vector<48x1xf32>
    %350 = arith.divf %348, %349 : vector<48x1xf32>
    %351 = vector.broadcast %343 : vector<48x1xf32> to vector<48x32xf32>
    %352 = arith.subf %335, %351 : vector<48x32xf32>
    %cst_223 = arith.constant 9.99999997E-7 : f32
    %353 = vector.broadcast %cst_223 : f32 to vector<48x1xf32>
    %354 = arith.addf %350, %353 : vector<48x1xf32>
    %355 = math.rsqrt %354 : vector<48x1xf32>
    %356 = vector.broadcast %355 : vector<48x1xf32> to vector<48x32xf32>
    %357 = arith.mulf %352, %356 : vector<48x32xf32>
    %358 = vector.broadcast %337 : vector<1x32xf32> to vector<48x32xf32>
    %359 = arith.mulf %357, %358 : vector<48x32xf32>
    %360 = vector.broadcast %339 : vector<1x32xf32> to vector<48x32xf32>
    %361 = arith.addf %359, %360 : vector<48x32xf32>
    %362 = arith.truncf %361 : vector<48x32xf32> to vector<48x32xbf16>
    %c1_224 = arith.constant 1 : index
    %c0_225 = arith.constant 0 : index
    %c0_226 = arith.constant 0 : index
    %363 = vector.load %arg17[%c1_224, %c0_225, %c0_226] : memref<2x32x128xbf16, #tpu.memory_space<vmem>>, vector<1x32x128xbf16>
    %364 = vector.shape_cast %363 : vector<1x32x128xbf16> to vector<32x128xbf16>
    %cst_227 = arith.constant dense<0.000000e+00> : vector<48x128xf32>
    %365 = tpu.matmul %362, %364, %cst_227 {dimension_numbers = #tpu.dot_dimension_numbers<[1], [0], [0], [1], [0, 0, 1, 1], [], []>} : vector<48x32xbf16>, vector<32x128xbf16>, vector<48x128xf32> -> vector<48x128xf32>
    %c1_228 = arith.constant 1 : index
    %c0_229 = arith.constant 0 : index
    %c0_230 = arith.constant 0 : index
    %366 = vector.load %arg18[%c1_228, %c0_229, %c0_230] : memref<2x1x128xf32, #tpu.memory_space<vmem>>, vector<1x1x128xf32>
    %367 = vector.shape_cast %366 : vector<1x1x128xf32> to vector<1x128xf32>
    %368 = vector.broadcast %367 : vector<1x128xf32> to vector<48x128xf32>
    %369 = arith.addf %365, %368 : vector<48x128xf32>
    %370 = arith.mulf %369, %369 : vector<48x128xf32>
    %371 = arith.mulf %369, %370 : vector<48x128xf32>
    %cst_231 = arith.constant 4.471500e-02 : f32
    %372 = vector.broadcast %cst_231 : f32 to vector<48x128xf32>
    %373 = arith.mulf %372, %371 : vector<48x128xf32>
    %374 = arith.addf %369, %373 : vector<48x128xf32>
    %cst_232 = arith.constant 0.797884583 : f32
    %375 = vector.broadcast %cst_232 : f32 to vector<48x128xf32>
    %376 = arith.mulf %375, %374 : vector<48x128xf32>
    %377 = math.tanh %376 : vector<48x128xf32>
    %cst_233 = arith.constant 1.000000e+00 : f32
    %378 = vector.broadcast %cst_233 : f32 to vector<48x128xf32>
    %379 = arith.addf %378, %377 : vector<48x128xf32>
    %cst_234 = arith.constant 5.000000e-01 : f32
    %380 = vector.broadcast %cst_234 : f32 to vector<48x128xf32>
    %381 = arith.mulf %380, %379 : vector<48x128xf32>
    %382 = arith.mulf %369, %381 : vector<48x128xf32>
    %383 = arith.truncf %382 : vector<48x128xf32> to vector<48x128xbf16>
    %c1_235 = arith.constant 1 : index
    %c0_236 = arith.constant 0 : index
    %c0_237 = arith.constant 0 : index
    %384 = vector.load %arg19[%c1_235, %c0_236, %c0_237] : memref<2x128x32xbf16, #tpu.memory_space<vmem>>, vector<1x128x32xbf16>
    %385 = vector.shape_cast %384 : vector<1x128x32xbf16> to vector<128x32xbf16>
    %cst_238 = arith.constant dense<0.000000e+00> : vector<48x32xf32>
    %386 = tpu.matmul %383, %385, %cst_238 {dimension_numbers = #tpu.dot_dimension_numbers<[1], [0], [0], [1], [0, 0, 1, 1], [], []>} : vector<48x128xbf16>, vector<128x32xbf16>, vector<48x32xf32> -> vector<48x32xf32>
    %c1_239 = arith.constant 1 : index
    %c0_240 = arith.constant 0 : index
    %c0_241 = arith.constant 0 : index
    %387 = vector.load %arg20[%c1_239, %c0_240, %c0_241] : memref<2x1x32xf32, #tpu.memory_space<vmem>>, vector<1x1x32xf32>
    %388 = vector.shape_cast %387 : vector<1x1x32xf32> to vector<1x32xf32>
    %389 = vector.broadcast %388 : vector<1x32xf32> to vector<48x32xf32>
    %390 = arith.addf %386, %389 : vector<48x32xf32>
    %391 = arith.addf %335, %390 : vector<48x32xf32>
    %c0_242 = arith.constant 0 : index
    %c0_243 = arith.constant 0 : index
    %392 = vector.load %arg21[%c0_242, %c0_243] : memref<1x32xf32, #tpu.memory_space<vmem>>, vector<1x32xf32>
    %c0_244 = arith.constant 0 : index
    %c0_245 = arith.constant 0 : index
    %393 = vector.load %arg22[%c0_244, %c0_245] : memref<1x32xf32, #tpu.memory_space<vmem>>, vector<1x32xf32>
    %cst_246 = arith.constant dense<0.000000e+00> : vector<48xf32>
    %394 = vector.multi_reduction <add>, %391, %cst_246 [1] : vector<48x32xf32> to vector<48xf32>
    %395 = vector.shape_cast %394 : vector<48xf32> to vector<48x1xf32>
    %cst_247 = arith.constant 3.200000e+01 : f32
    %396 = vector.broadcast %cst_247 : f32 to vector<48x1xf32>
    %397 = arith.divf %395, %396 : vector<48x1xf32>
    %398 = vector.broadcast %397 : vector<48x1xf32> to vector<48x32xf32>
    %399 = arith.subf %391, %398 : vector<48x32xf32>
    %400 = arith.mulf %399, %399 : vector<48x32xf32>
    %cst_248 = arith.constant dense<0.000000e+00> : vector<48xf32>
    %401 = vector.multi_reduction <add>, %400, %cst_248 [1] : vector<48x32xf32> to vector<48xf32>
    %402 = vector.shape_cast %401 : vector<48xf32> to vector<48x1xf32>
    %cst_249 = arith.constant 3.200000e+01 : f32
    %403 = vector.broadcast %cst_249 : f32 to vector<48x1xf32>
    %404 = arith.divf %402, %403 : vector<48x1xf32>
    %405 = vector.broadcast %397 : vector<48x1xf32> to vector<48x32xf32>
    %406 = arith.subf %391, %405 : vector<48x32xf32>
    %cst_250 = arith.constant 9.99999997E-7 : f32
    %407 = vector.broadcast %cst_250 : f32 to vector<48x1xf32>
    %408 = arith.addf %404, %407 : vector<48x1xf32>
    %409 = math.rsqrt %408 : vector<48x1xf32>
    %410 = vector.broadcast %409 : vector<48x1xf32> to vector<48x32xf32>
    %411 = arith.mulf %406, %410 : vector<48x32xf32>
    %412 = vector.broadcast %392 : vector<1x32xf32> to vector<48x32xf32>
    %413 = arith.mulf %411, %412 : vector<48x32xf32>
    %414 = vector.broadcast %393 : vector<1x32xf32> to vector<48x32xf32>
    %415 = arith.addf %413, %414 : vector<48x32xf32>
    %416 = vector.shape_cast %415 : vector<48x32xf32> to vector<2x24x32xf32>
    %417 = vector.extract_strided_slice %416 {offsets = [0, 0, 0], sizes = [2, 17, 32], strides = [1, 1, 1]} : vector<2x24x32xf32> to vector<2x17x32xf32>
    %c0_251 = arith.constant 0 : index
    %c0_252 = arith.constant 0 : index
    %c0_253 = arith.constant 0 : index
    %418 = vector.load %arg23[%c0_251, %c0_252, %c0_253] : memref<2x17x32xf32, #tpu.memory_space<vmem>>, vector<2x17x32xf32>
    tpu.vector_store %arg23[%c0_251, %c0_252, %c0_253], %417 {strides = array<i32>} : memref<2x17x32xf32, #tpu.memory_space<vmem>>, vector<2x17x32xf32>,
    return
  }
  func.func @transform_0(%arg0: i32) -> (i32, i32) {
    %c0_i32 = arith.constant 0 : i32
    %c0_i32_0 = arith.constant 0 : i32
    return %arg0, %c0_i32 : i32, i32
  }
  func.func @transform_1(%arg0: i32) -> (i32, i32) {
    %c0_i32 = arith.constant 0 : i32
    %c0_i32_0 = arith.constant 0 : i32
    %c0_i32_1 = arith.constant 0 : i32
    return %c0_i32, %c0_i32_0 : i32, i32
  }
  func.func @transform_2(%arg0: i32) -> (i32, i32) {
    %c0_i32 = arith.constant 0 : i32
    %c0_i32_0 = arith.constant 0 : i32
    %c0_i32_1 = arith.constant 0 : i32
    return %c0_i32, %c0_i32_0 : i32, i32
  }
  func.func @transform_3(%arg0: i32) -> (i32, i32) {
    %c0_i32 = arith.constant 0 : i32
    %c0_i32_0 = arith.constant 0 : i32
    %c0_i32_1 = arith.constant 0 : i32
    return %c0_i32, %c0_i32_0 : i32, i32
  }
  func.func @transform_4(%arg0: i32) -> (i32, i32, i32) {
    %c0_i32 = arith.constant 0 : i32
    %c0_i32_0 = arith.constant 0 : i32
    %c0_i32_1 = arith.constant 0 : i32
    %c0_i32_2 = arith.constant 0 : i32
    return %c0_i32, %c0_i32_0, %c0_i32_1 : i32, i32, i32
  }
  func.func @transform_5(%arg0: i32) -> (i32, i32, i32) {
    %c0_i32 = arith.constant 0 : i32
    %c0_i32_0 = arith.constant 0 : i32
    %c0_i32_1 = arith.constant 0 : i32
    %c0_i32_2 = arith.constant 0 : i32
    return %c0_i32, %c0_i32_0, %c0_i32_1 : i32, i32, i32
  }
  func.func @transform_6(%arg0: i32) -> (i32, i32, i32, i32) {
    %c0_i32 = arith.constant 0 : i32
    %c0_i32_0 = arith.constant 0 : i32
    %c0_i32_1 = arith.constant 0 : i32
    %c0_i32_2 = arith.constant 0 : i32
    %c0_i32_3 = arith.constant 0 : i32
    return %c0_i32, %c0_i32_0, %c0_i32_1, %c0_i32_2 : i32, i32, i32, i32
  }
  func.func @transform_7(%arg0: i32) -> (i32, i32, i32, i32) {
    %c0_i32 = arith.constant 0 : i32
    %c0_i32_0 = arith.constant 0 : i32
    %c0_i32_1 = arith.constant 0 : i32
    %c0_i32_2 = arith.constant 0 : i32
    %c0_i32_3 = arith.constant 0 : i32
    return %c0_i32, %c0_i32_0, %c0_i32_1, %c0_i32_2 : i32, i32, i32, i32
  }
  func.func @transform_8(%arg0: i32) -> (i32, i32, i32, i32) {
    %c0_i32 = arith.constant 0 : i32
    %c0_i32_0 = arith.constant 0 : i32
    %c0_i32_1 = arith.constant 0 : i32
    %c0_i32_2 = arith.constant 0 : i32
    %c0_i32_3 = arith.constant 0 : i32
    return %c0_i32, %c0_i32_0, %c0_i32_1, %c0_i32_2 : i32, i32, i32, i32
  }
  func.func @transform_9(%arg0: i32) -> (i32, i32, i32, i32) {
    %c0_i32 = arith.constant 0 : i32
    %c0_i32_0 = arith.constant 0 : i32
    %c0_i32_1 = arith.constant 0 : i32
    %c0_i32_2 = arith.constant 0 : i32
    %c0_i32_3 = arith.constant 0 : i32
    return %c0_i32, %c0_i32_0, %c0_i32_1, %c0_i32_2 : i32, i32, i32, i32
  }
  func.func @transform_10(%arg0: i32) -> (i32, i32, i32, i32) {
    %c0_i32 = arith.constant 0 : i32
    %c0_i32_0 = arith.constant 0 : i32
    %c0_i32_1 = arith.constant 0 : i32
    %c0_i32_2 = arith.constant 0 : i32
    %c0_i32_3 = arith.constant 0 : i32
    return %c0_i32, %c0_i32_0, %c0_i32_1, %c0_i32_2 : i32, i32, i32, i32
  }
  func.func @transform_11(%arg0: i32) -> (i32, i32, i32, i32) {
    %c0_i32 = arith.constant 0 : i32
    %c0_i32_0 = arith.constant 0 : i32
    %c0_i32_1 = arith.constant 0 : i32
    %c0_i32_2 = arith.constant 0 : i32
    %c0_i32_3 = arith.constant 0 : i32
    return %c0_i32, %c0_i32_0, %c0_i32_1, %c0_i32_2 : i32, i32, i32, i32
  }
  func.func @transform_12(%arg0: i32) -> (i32, i32, i32, i32) {
    %c0_i32 = arith.constant 0 : i32
    %c0_i32_0 = arith.constant 0 : i32
    %c0_i32_1 = arith.constant 0 : i32
    %c0_i32_2 = arith.constant 0 : i32
    %c0_i32_3 = arith.constant 0 : i32
    return %c0_i32, %c0_i32_0, %c0_i32_1, %c0_i32_2 : i32, i32, i32, i32
  }
  func.func @transform_13(%arg0: i32) -> (i32, i32, i32) {
    %c0_i32 = arith.constant 0 : i32
    %c0_i32_0 = arith.constant 0 : i32
    %c0_i32_1 = arith.constant 0 : i32
    %c0_i32_2 = arith.constant 0 : i32
    return %c0_i32, %c0_i32_0, %c0_i32_1 : i32, i32, i32
  }
  func.func @transform_14(%arg0: i32) -> (i32, i32, i32) {
    %c0_i32 = arith.constant 0 : i32
    %c0_i32_0 = arith.constant 0 : i32
    %c0_i32_1 = arith.constant 0 : i32
    %c0_i32_2 = arith.constant 0 : i32
    return %c0_i32, %c0_i32_0, %c0_i32_1 : i32, i32, i32
  }
  func.func @transform_15(%arg0: i32) -> (i32, i32, i32) {
    %c0_i32 = arith.constant 0 : i32
    %c0_i32_0 = arith.constant 0 : i32
    %c0_i32_1 = arith.constant 0 : i32
    %c0_i32_2 = arith.constant 0 : i32
    return %c0_i32, %c0_i32_0, %c0_i32_1 : i32, i32, i32
  }
  func.func @transform_16(%arg0: i32) -> (i32, i32, i32) {
    %c0_i32 = arith.constant 0 : i32
    %c0_i32_0 = arith.constant 0 : i32
    %c0_i32_1 = arith.constant 0 : i32
    %c0_i32_2 = arith.constant 0 : i32
    return %c0_i32, %c0_i32_0, %c0_i32_1 : i32, i32, i32
  }
  func.func @transform_17(%arg0: i32) -> (i32, i32, i32) {
    %c0_i32 = arith.constant 0 : i32
    %c0_i32_0 = arith.constant 0 : i32
    %c0_i32_1 = arith.constant 0 : i32
    %c0_i32_2 = arith.constant 0 : i32
    return %c0_i32, %c0_i32_0, %c0_i32_1 : i32, i32, i32
  }
  func.func @transform_18(%arg0: i32) -> (i32, i32, i32) {
    %c0_i32 = arith.constant 0 : i32
    %c0_i32_0 = arith.constant 0 : i32
    %c0_i32_1 = arith.constant 0 : i32
    %c0_i32_2 = arith.constant 0 : i32
    return %c0_i32, %c0_i32_0, %c0_i32_1 : i32, i32, i32
  }
  func.func @transform_19(%arg0: i32) -> (i32, i32, i32) {
    %c0_i32 = arith.constant 0 : i32
    %c0_i32_0 = arith.constant 0 : i32
    %c0_i32_1 = arith.constant 0 : i32
    %c0_i32_2 = arith.constant 0 : i32
    return %c0_i32, %c0_i32_0, %c0_i32_1 : i32, i32, i32
  }
  func.func @transform_20(%arg0: i32) -> (i32, i32) {
    %c0_i32 = arith.constant 0 : i32
    %c0_i32_0 = arith.constant 0 : i32
    %c0_i32_1 = arith.constant 0 : i32
    return %c0_i32, %c0_i32_0 : i32, i32
  }
  func.func @transform_21(%arg0: i32) -> (i32, i32) {
    %c0_i32 = arith.constant 0 : i32
    %c0_i32_0 = arith.constant 0 : i32
    %c0_i32_1 = arith.constant 0 : i32
    return %c0_i32, %c0_i32_0 : i32, i32
  }
  func.func @transform_22(%arg0: i32) -> (i32, i32, i32) {
    %c0_i32 = arith.constant 0 : i32
    %c0_i32_0 = arith.constant 0 : i32
    %c0_i32_1 = arith.constant 0 : i32
    return %arg0, %c0_i32, %c0_i32_0 : i32, i32, i32
  }
}

</mosaic_0001>

<llo_original>
// kernel: backbone_vit_forward.1
$region0: #{backbone_vit_forward.1}
  #allocation0 [shape = 'u32[]', space=smem, size = 0x4, offset = 0x4, fixed_abs, tag = 'smem constant byte address 0x4 - core index']
  #allocation1 [shape = 'u32[72,128]{1,0:T(1,128)}', space=vmem, size = 0x9000, scoped, tag = 'internal scratch']
  %s0 = inlined_call_operand.vmem [shape: bf16[48,48], index: 0, kind: input, shape index: {}]
  %s1 = inlined_call_operand.vmem [shape: f32[24,32], index: 1, kind: input, shape index: {}]
  %s2 = inlined_call_operand.vmem [shape: f32[1,24], index: 2, kind: input, shape index: {}]
  %s3 = inlined_call_operand.vmem [shape: bf16[48,32], index: 3, kind: input, shape index: {}]
  %s4 = inlined_call_operand.vmem [shape: f32[2,1,32], index: 4, kind: input, shape index: {}]
  %s5 = inlined_call_operand.vmem [shape: f32[2,1,32], index: 5, kind: input, shape index: {}]
  %s6 = inlined_call_operand.vmem [shape: bf16[2,2,32,16], index: 6, kind: input, shape index: {}]
  %s7 = inlined_call_operand.vmem [shape: f32[2,2,1,16], index: 7, kind: input, shape index: {}]
  %s8 = inlined_call_operand.vmem [shape: bf16[2,2,32,16], index: 8, kind: input, shape index: {}]
  %s9 = inlined_call_operand.vmem [shape: f32[2,2,1,16], index: 9, kind: input, shape index: {}]
  %s10 = inlined_call_operand.vmem [shape: bf16[2,2,32,16], index: 10, kind: input, shape index: {}]
  %s11 = inlined_call_operand.vmem [shape: f32[2,2,1,16], index: 11, kind: input, shape index: {}]
  %s12 = inlined_call_operand.vmem [shape: bf16[2,2,16,32], index: 12, kind: input, shape index: {}]
  %s13 = inlined_call_operand.vmem [shape: f32[2,1,32], index: 13, kind: input, shape index: {}]
  %s14 = inlined_call_operand.vmem [shape: f32[2,1,32], index: 14, kind: input, shape index: {}]
  %s15 = inlined_call_operand.vmem [shape: f32[2,1,32], index: 15, kind: input, shape index: {}]
  %s16 = inlined_call_operand.vmem [shape: bf16[2,32,128], index: 16, kind: input, shape index: {}]
  %s17 = inlined_call_operand.vmem [shape: f32[2,1,128], index: 17, kind: input, shape index: {}]
  %s18 = inlined_call_operand.vmem [shape: bf16[2,128,32], index: 18, kind: input, shape index: {}]
  %s19 = inlined_call_operand.vmem [shape: f32[2,1,32], index: 19, kind: input, shape index: {}]
  %s20 = inlined_call_operand.vmem [shape: f32[1,32], index: 20, kind: input, shape index: {}]
  %s21 = inlined_call_operand.vmem [shape: f32[1,32], index: 21, kind: input, shape index: {}]
  %s22 = inlined_call_operand.vmem [shape: f32[2,17,32], index: 22, kind: output, shape index: {}]
  %s23 = sld [smem:[#allocation0]]
  $region98: #{backbone_vit_forward.1} parent=0
    _
  %s25 = ssub.s32 1, %s23
  %s26 = scalar_select 0, %s25, %s23
  // Predicated region
  $region2: #{backbone_vit_forward.1} parent=0 // pred_check
    _
  $region3: #{backbone_vit_forward.1} parent=0 // pred_check_branch
    %28 = sbr.rel (0) target = $region5
  $region4: #{backbone_vit_forward.1} parent=0 // pred_region
    _
  $region5: #{backbone_vit_forward.1} parent=0 // pred_fallthru
    _
  // Predicated region
  $region6: #{backbone_vit_forward.1} parent=0 // pred_check
    _
  $region7: #{backbone_vit_forward.1} parent=0 // pred_check_branch
    %30 = sbr.rel (0) target = $region9
  $region8: #{backbone_vit_forward.1} parent=0 // pred_region
    _
  $region9: #{backbone_vit_forward.1} parent=0 // pred_fallthru
    _
  // Predicated region
  $region10: #{backbone_vit_forward.1} parent=0 // pred_check
    _
  $region11: #{backbone_vit_forward.1} parent=0 // pred_check_branch
    %32 = sbr.rel (0) target = $region13
  $region12: #{backbone_vit_forward.1} parent=0 // pred_region
    _
  $region13: #{backbone_vit_forward.1} parent=0 // pred_fallthru
    _
  // Predicated region
  $region14: #{backbone_vit_forward.1} parent=0 // pred_check
    _
  $region15: #{backbone_vit_forward.1} parent=0 // pred_check_branch
    %34 = sbr.rel (0) target = $region17
  $region16: #{backbone_vit_forward.1} parent=0 // pred_region
    _
  $region17: #{backbone_vit_forward.1} parent=0 // pred_fallthru
    _
  // Predicated region
  $region18: #{backbone_vit_forward.1} parent=0 // pred_check
    _
  $region19: #{backbone_vit_forward.1} parent=0 // pred_check_branch
    %36 = sbr.rel (0) target = $region21
  $region20: #{backbone_vit_forward.1} parent=0 // pred_region
    _
  $region21: #{backbone_vit_forward.1} parent=0 // pred_fallthru
    _
  // Predicated region
  $region22: #{backbone_vit_forward.1} parent=0 // pred_check
    _
  $region23: #{backbone_vit_forward.1} parent=0 // pred_check_branch
    %38 = sbr.rel (0) target = $region25
  $region24: #{backbone_vit_forward.1} parent=0 // pred_region
    _
  $region25: #{backbone_vit_forward.1} parent=0 // pred_fallthru
    _
  // Predicated region
  $region26: #{backbone_vit_forward.1} parent=0 // pred_check
    _
  $region27: #{backbone_vit_forward.1} parent=0 // pred_check_branch
    %40 = sbr.rel (0) target = $region29
  $region28: #{backbone_vit_forward.1} parent=0 // pred_region
    _
  $region29: #{backbone_vit_forward.1} parent=0 // pred_fallthru
    _
  // Predicated region
  $region30: #{backbone_vit_forward.1} parent=0 // pred_check
    _
  $region31: #{backbone_vit_forward.1} parent=0 // pred_check_branch
    %42 = sbr.rel (0) target = $region33
  $region32: #{backbone_vit_forward.1} parent=0 // pred_region
    _
  $region33: #{backbone_vit_forward.1} parent=0 // pred_fallthru
    _
  // Predicated region
  $region34: #{backbone_vit_forward.1} parent=0 // pred_check
    _
  $region35: #{backbone_vit_forward.1} parent=0 // pred_check_branch
    %44 = sbr.rel (0) target = $region37
  $region36: #{backbone_vit_forward.1} parent=0 // pred_region
    _
  $region37: #{backbone_vit_forward.1} parent=0 // pred_fallthru
    _
  // Predicated region
  $region38: #{backbone_vit_forward.1} parent=0 // pred_check
    _
  $region39: #{backbone_vit_forward.1} parent=0 // pred_check_branch
    %46 = sbr.rel (0) target = $region41
  $region40: #{backbone_vit_forward.1} parent=0 // pred_region
    _
  $region41: #{backbone_vit_forward.1} parent=0 // pred_fallthru
    _
  // Predicated region
  $region42: #{backbone_vit_forward.1} parent=0 // pred_check
    _
  $region43: #{backbone_vit_forward.1} parent=0 // pred_check_branch
    %48 = sbr.rel (0) target = $region45
  $region44: #{backbone_vit_forward.1} parent=0 // pred_region
    _
  $region45: #{backbone_vit_forward.1} parent=0 // pred_fallthru
    _
  // Predicated region
  $region46: #{backbone_vit_forward.1} parent=0 // pred_check
    _
  $region47: #{backbone_vit_forward.1} parent=0 // pred_check_branch
    %50 = sbr.rel (0) target = $region49
  $region48: #{backbone_vit_forward.1} parent=0 // pred_region
    _
  $region49: #{backbone_vit_forward.1} parent=0 // pred_fallthru
    _
  // Predicated region
  $region50: #{backbone_vit_forward.1} parent=0 // pred_check
    _
  $region51: #{backbone_vit_forward.1} parent=0 // pred_check_branch
    %52 = sbr.rel (0) target = $region53
  $region52: #{backbone_vit_forward.1} parent=0 // pred_region
    _
  $region53: #{backbone_vit_forward.1} parent=0 // pred_fallthru
    _
  // Predicated region
  $region54: #{backbone_vit_forward.1} parent=0 // pred_check
    _
  $region55: #{backbone_vit_forward.1} parent=0 // pred_check_branch
    %54 = sbr.rel (0) target = $region57
  $region56: #{backbone_vit_forward.1} parent=0 // pred_region
    _
  $region57: #{backbone_vit_forward.1} parent=0 // pred_fallthru
    _
  // Predicated region
  $region58: #{backbone_vit_forward.1} parent=0 // pred_check
    _
  $region59: #{backbone_vit_forward.1} parent=0 // pred_check_branch
    %56 = sbr.rel (0) target = $region61
  $region60: #{backbone_vit_forward.1} parent=0 // pred_region
    _
  $region61: #{backbone_vit_forward.1} parent=0 // pred_fallthru
    _
  // Predicated region
  $region62: #{backbone_vit_forward.1} parent=0 // pred_check
    _
  $region63: #{backbone_vit_forward.1} parent=0 // pred_check_branch
    %58 = sbr.rel (0) target = $region65
  $region64: #{backbone_vit_forward.1} parent=0 // pred_region
    _
  $region65: #{backbone_vit_forward.1} parent=0 // pred_fallthru
    _
  // Predicated region
  $region66: #{backbone_vit_forward.1} parent=0 // pred_check
    _
  $region67: #{backbone_vit_forward.1} parent=0 // pred_check_branch
    %60 = sbr.rel (0) target = $region69
  $region68: #{backbone_vit_forward.1} parent=0 // pred_region
    _
  $region69: #{backbone_vit_forward.1} parent=0 // pred_fallthru
    _
  // Predicated region
  $region70: #{backbone_vit_forward.1} parent=0 // pred_check
    _
  $region71: #{backbone_vit_forward.1} parent=0 // pred_check_branch
    %62 = sbr.rel (0) target = $region73
  $region72: #{backbone_vit_forward.1} parent=0 // pred_region
    _
  $region73: #{backbone_vit_forward.1} parent=0 // pred_fallthru
    _
  // Predicated region
  $region74: #{backbone_vit_forward.1} parent=0 // pred_check
    _
  $region75: #{backbone_vit_forward.1} parent=0 // pred_check_branch
    %64 = sbr.rel (0) target = $region77
  $region76: #{backbone_vit_forward.1} parent=0 // pred_region
    _
  $region77: #{backbone_vit_forward.1} parent=0 // pred_fallthru
    _
  // Predicated region
  $region78: #{backbone_vit_forward.1} parent=0 // pred_check
    _
  $region79: #{backbone_vit_forward.1} parent=0 // pred_check_branch
    %66 = sbr.rel (0) target = $region81
  $region80: #{backbone_vit_forward.1} parent=0 // pred_region
    _
  $region81: #{backbone_vit_forward.1} parent=0 // pred_fallthru
    _
  // Predicated region
  $region82: #{backbone_vit_forward.1} parent=0 // pred_check
    _
  $region83: #{backbone_vit_forward.1} parent=0 // pred_check_branch
    %68 = sbr.rel (0) target = $region85
  $region84: #{backbone_vit_forward.1} parent=0 // pred_region
    _
  $region85: #{backbone_vit_forward.1} parent=0 // pred_fallthru
    _
  // Predicated region
  $region86: #{backbone_vit_forward.1} parent=0 // pred_check
    _
  $region87: #{backbone_vit_forward.1} parent=0 // pred_check_branch
    %70 = sbr.rel (0) target = $region89
  $region88: #{backbone_vit_forward.1} parent=0 // pred_region
    _
  $region89: #{backbone_vit_forward.1} parent=0 // pred_fallthru
    _
  %v72 = vld [vmem:[%s0] sm:$0xf]
  %v73 = vld [vmem:[%s0 + $0x4] sm:$0xf]
  %v74 = vld [vmem:[%s0 + $0x8] sm:$0xf]
  %v75 = vld [vmem:[%s0 + $0xc] sm:$0xf]
  %v76 = vld [vmem:[%s0 + $0x10] sm:$0xf]
  %v77 = vld [vmem:[%s0 + $0x14] sm:$0xf]
  %v78 = vld [vmem:[%s3] sm:$0xf]
  %v79 = vld [vmem:[%s3 + $0x4] sm:$0xf]
  %v80 = vld [vmem:[%s3 + $0x8] sm:$0xf]
  %v81 = vld [vmem:[%s3 + $0xc] sm:$0xf]
  %v82 = vld [vmem:[%s3 + $0x10] sm:$0xf]
  %v83 = vld [vmem:[%s3 + $0x14] sm:$0xf]
  %v90 = vunpack.c.l.b16 %v72
  %v91 = vunpack.c.l.b16 %v73
  %v92 = vunpack.c.l.b16 %v74
  %v93 = vunpack.c.l.b16 %v75
  %v94 = vunpack.c.l.b16 %v76
  %v95 = vunpack.c.l.b16 %v77
  %v96 = vpack.c.b16 %v91, %v90
  %v97 = vpack.c.b16 %v93, %v92
  %v98 = vpack.c.b16 %v95, %v94
  %v105 = vunpack.c.l.b16 %v78
  %v106 = vunpack.c.l.b16 %v79
  %v107 = vunpack.c.l.b16 %v80
  %v108 = vunpack.c.l.b16 %v81
  %v109 = vunpack.c.l.b16 %v82
  %v110 = vunpack.c.l.b16 %v83
  %v111 = vpack.c.b16 %v106, %v105
  %v112 = vpack.c.b16 %v108, %v107
  %v113 = vpack.c.b16 %v110, %v109
  %vm117 = vcmask 392192
  %v119 = vsel %vm117, %v96, 0
  %v122 = vsel %vm117, %v97, 0
  %v125 = vsel %vm117, %v98, 0
  %127 = vmatpush.bf16.msra.mxu0 0
  %128 = vmatpush.bf16.msra.mxu0 0
  %129 = vmatpush.bf16.msra.mxu0 0
  %130 = vmatpush.bf16.msra.mxu0 0
  %131 = vmatpush.bf16.msra.mxu0 0
  %132 = vmatpush.bf16.msra.mxu0 %v113
  %133 = vmatpush.bf16.msra.mxu0 %v112
  %134 = vmatpush.bf16.msra.mxu0 %v111
  %135 = vmatmul.bf16.gmra.mxu0 %v119
  %v136 = vpop.f32.mrf.mxu0
  %v137 = vadd.f32 0.0, %v136
  %v138 = vpop.f32.mrf.mxu0
  %v139 = vadd.f32 0.0, %v138
  %140 = vmatmul.bf16.gmra.mxu0 %v122
  %v141 = vpop.f32.mrf.mxu0
  %v142 = vadd.f32 0.0, %v141
  %v143 = vpop.f32.mrf.mxu0
  %v144 = vadd.f32 0.0, %v143
  %145 = vmatmul.bf16.gmra.mxu0 %v125
  %v146 = vpop.f32.mrf.mxu0
  %v147 = vadd.f32 0.0, %v146
  %v148 = vpop.f32.mrf.mxu0
  %v149 = vadd.f32 0.0, %v148
  %150 = vdwg.mxu0
  %v151 = vld [vmem:[%s1] sm:$0xff]
  %v152 = vld [vmem:[%s1 + $0x8] sm:$0xff]
  %v153 = vld [vmem:[%s1 + $0x10] sm:$0xff]
  %v154 = vadd.f32 %v137, %v151
  %v155 = vadd.f32 %v139, %v152
  %v156 = vadd.f32 %v142, %v153
  %v157 = vadd.f32 %v144, %v151
  %v158 = vadd.f32 %v147, %v152
  %v159 = vadd.f32 %v149, %v153
  %v160 = vld [vmem:[%s2] sm:$0x1]
  %v161 = vld [vmem:[%s4] sm:$0x1]
  %v162 = vld [vmem:[%s5] sm:$0x1]
  %vm163 = vcmask 261120
  %v164 = vsel %vm163, %v154, 0.0
  %165 = vadd.xlane.f32.xlu0 %v164
  %v166 = vpop.xlane.xlu0 %165
  %v167 = vsel %vm163, %v155, 0.0
  %168 = vadd.xlane.f32.xlu0 %v167
  %v169 = vpop.xlane.xlu0 %168
  %v170 = vsel %vm163, %v156, 0.0
  %171 = vadd.xlane.f32.xlu0 %v170
  %v172 = vpop.xlane.xlu0 %171
  %v173 = vsel %vm163, %v157, 0.0
  %174 = vadd.xlane.f32.xlu0 %v173
  %v175 = vpop.xlane.xlu0 %174
  %v176 = vsel %vm163, %v158, 0.0
  %177 = vadd.xlane.f32.xlu0 %v176
  %v178 = vpop.xlane.xlu0 %177
  %v179 = vsel %vm163, %v159, 0.0
  %180 = vadd.xlane.f32.xlu0 %v179
  %v181 = vpop.xlane.xlu0 %180
  %v182 = vrcp.pop 32.0
  %v183 = vmul.f32 32.0, %v182
  %v184 = vsub.f32 1.0, %v183
  %v185 = vmul.f32 %v182, %v184
  %v186 = vadd.f32 %v182, %v185
  %vm187 = vweird.f32 %v182
  %v188 = vsel %vm187, %v182, %v186
  %v189 = vmul.f32 %v166, %v188
  %v190 = vmul.f32 %v169, %v188
  %v191 = vmul.f32 %v172, %v188
  %v192 = vmul.f32 %v175, %v188
  %v193 = vmul.f32 %v178, %v188
  %v194 = vmul.f32 %v181, %v188
  %v195 = vsub.f32 %v154, %v189
  %v196 = vsub.f32 %v155, %v190
  %v197 = vsub.f32 %v156, %v191
  %v198 = vsub.f32 %v157, %v192
  %v199 = vsub.f32 %v158, %v193
  %v200 = vsub.f32 %v159, %v194
  %v201 = vmul.f32 %v195, %v195
  %v202 = vmul.f32 %v196, %v196
  %v203 = vmul.f32 %v197, %v197
  %v204 = vmul.f32 %v198, %v198
  %v205 = vmul.f32 %v199, %v199
  %v206 = vmul.f32 %v200, %v200
  %v207 = vsel %vm163, %v201, 0.0
  %208 = vadd.xlane.f32.xlu0 %v207
  %v209 = vpop.xlane.xlu0 %208
  %v210 = vsel %vm163, %v202, 0.0
  %211 = vadd.xlane.f32.xlu0 %v210
  %v212 = vpop.xlane.xlu0 %211
  %v213 = vsel %vm163, %v203, 0.0
  %214 = vadd.xlane.f32.xlu0 %v213
  %v215 = vpop.xlane.xlu0 %214
  %v216 = vsel %vm163, %v204, 0.0
  %217 = vadd.xlane.f32.xlu0 %v216
  %v218 = vpop.xlane.xlu0 %217
  %v219 = vsel %vm163, %v205, 0.0
  %220 = vadd.xlane.f32.xlu0 %v219
  %v221 = vpop.xlane.xlu0 %220
  %v222 = vsel %vm163, %v206, 0.0
  %223 = vadd.xlane.f32.xlu0 %v222
  %v224 = vpop.xlane.xlu0 %223
  %v225 = vmul.f32 %v209, %v188
  %v226 = vmul.f32 %v212, %v188
  %v227 = vmul.f32 %v215, %v188
  %v228 = vmul.f32 %v218, %v188
  %v229 = vmul.f32 %v221, %v188
  %v230 = vmul.f32 %v224, %v188
  %v231 = vadd.f32 %v225, 1e-06
  %v232 = vadd.f32 %v226, 1e-06
  %v233 = vadd.f32 %v227, 1e-06
  %v234 = vadd.f32 %v228, 1e-06
  %v235 = vadd.f32 %v229, 1e-06
  %v236 = vadd.f32 %v230, 1e-06
  %v237 = vrsqrt.pop %v231
  %v238 = vmul.f32 %v237, %v231
  %v239 = vmul.f32 %v238, %v237
  %v240 = vmul.f32 0.5, %v239
  %v241 = vsub.f32 1.5, %v240
  %v242 = vmul.f32 %v237, %v241
  %vm243 = vweird.f32 %v231
  %vm244 = vweird.f32 %v237
  %vm245 = vmor %vm243, %vm244
  %v246 = vsel %vm245, %v237, %v242
  %v247 = vrsqrt.pop %v232
  %v248 = vmul.f32 %v247, %v232
  %v249 = vmul.f32 %v248, %v247
  %v250 = vmul.f32 0.5, %v249
  %v251 = vsub.f32 1.5, %v250
  %v252 = vmul.f32 %v247, %v251
  %vm253 = vweird.f32 %v232
  %vm254 = vweird.f32 %v247
  %vm255 = vmor %vm253, %vm254
  %v256 = vsel %vm255, %v247, %v252
  %v257 = vrsqrt.pop %v233
  %v258 = vmul.f32 %v257, %v233
  %v259 = vmul.f32 %v258, %v257
  %v260 = vmul.f32 0.5, %v259
  %v261 = vsub.f32 1.5, %v260
  %v262 = vmul.f32 %v257, %v261
  %vm263 = vweird.f32 %v233
  %vm264 = vweird.f32 %v257
  %vm265 = vmor %vm263, %vm264
  %v266 = vsel %vm265, %v257, %v262
  %v267 = vrsqrt.pop %v234
  %v268 = vmul.f32 %v267, %v234
  %v269 = vmul.f32 %v268, %v267
  %v270 = vmul.f32 0.5, %v269
  %v271 = vsub.f32 1.5, %v270
  %v272 = vmul.f32 %v267, %v271
  %vm273 = vweird.f32 %v234
  %vm274 = vweird.f32 %v267
  %vm275 = vmor %vm273, %vm274
  %v276 = vsel %vm275, %v267, %v272
  %v277 = vrsqrt.pop %v235
  %v278 = vmul.f32 %v277, %v235
  %v279 = vmul.f32 %v278, %v277
  %v280 = vmul.f32 0.5, %v279
  %v281 = vsub.f32 1.5, %v280
  %v282 = vmul.f32 %v277, %v281
  %vm283 = vweird.f32 %v235
  %vm284 = vweird.f32 %v277
  %vm285 = vmor %vm283, %vm284
  %v286 = vsel %vm285, %v277, %v282
  %v287 = vrsqrt.pop %v236
  %v288 = vmul.f32 %v287, %v236
  %v289 = vmul.f32 %v288, %v287
  %v290 = vmul.f32 0.5, %v289
  %v291 = vsub.f32 1.5, %v290
  %v292 = vmul.f32 %v287, %v291
  %vm293 = vweird.f32 %v236
  %vm294 = vweird.f32 %v287
  %vm295 = vmor %vm293, %vm294
  %v296 = vsel %vm295, %v287, %v292
  %v297 = vmul.f32 %v195, %v246
  %v298 = vmul.f32 %v196, %v256
  %v299 = vmul.f32 %v197, %v266
  %v300 = vmul.f32 %v198, %v276
  %v301 = vmul.f32 %v199, %v286
  %v302 = vmul.f32 %v200, %v296
  %v304 = vperm.slane %v161, 0
  %v306 = vmul.f32 %v297, %v304
  %v307 = vmul.f32 %v298, %v304
  %v308 = vmul.f32 %v299, %v304
  %v309 = vmul.f32 %v300, %v304
  %v310 = vmul.f32 %v301, %v304
  %v311 = vmul.f32 %v302, %v304
  %v313 = vperm.slane %v162, 0
  %v315 = vadd.f32 %v306, %v313
  %v316 = vadd.f32 %v307, %v313
  %v317 = vadd.f32 %v308, %v313
  %v318 = vadd.f32 %v309, %v313
  %v319 = vadd.f32 %v310, %v313
  %v320 = vadd.f32 %v311, %v313
  %v321 = vpack.c.bf16 %v316, %v315
  %v322 = vpack.c.bf16 %v318, %v317
  %v323 = vpack.c.bf16 %v320, %v319
  %v324 = vld [vmem:[%s6] sm:$0xf]
  %v325 = vld [vmem:[%s6 + $0x4] sm:$0xf]
  %v326 = vld [vmem:[%s6 + $0x8] sm:$0xf]
  %v327 = vld [vmem:[%s6 + $0xc] sm:$0xf]
  %v328 = vld [vmem:[%s7] sm:$0x1]
  %v330 = vperm.slane %v328, 0
  %v336 = vunpack.c.l.b16 %v324
  %v337 = vunpack.c.l.b16 %v325
  %v338 = vunpack.c.l.b16 %v326
  %v339 = vunpack.c.l.b16 %v327
  %v340 = vpack.c.b16 %v337, %v336
  %v341 = vpack.c.b16 %v339, %v338
  %v345 = vsel %vm163, %v321, 0
  %v348 = vsel %vm163, %v322, 0
  %v351 = vsel %vm163, %v323, 0
  %353 = vmatpush.bf16.msra.mxu0 0
  %354 = vmatpush.bf16.msra.mxu0 0
  %355 = vmatpush.bf16.msra.mxu0 0
  %356 = vmatpush.bf16.msra.mxu0 0
  %357 = vmatpush.bf16.msra.mxu0 0
  %358 = vmatpush.bf16.msra.mxu0 0
  %359 = vmatpush.bf16.msra.mxu0 %v341
  %360 = vmatpush.bf16.msra.mxu0 %v340
  %361 = vmatmul.bf16.gmra.mxu0 %v345
  %v362 = vpop.f32.mrf.mxu0
  %v363 = vadd.f32 %v330, %v362
  %v364 = vpop.f32.mrf.mxu0
  %v365 = vadd.f32 %v330, %v364
  %366 = vmatmul.bf16.gmra.mxu0 %v348
  %v367 = vpop.f32.mrf.mxu0
  %v368 = vadd.f32 %v330, %v367
  %v369 = vpop.f32.mrf.mxu0
  %v370 = vadd.f32 %v330, %v369
  %371 = vmatmul.bf16.gmra.mxu0 %v351
  %v372 = vpop.f32.mrf.mxu0
  %v373 = vadd.f32 %v330, %v372
  %v374 = vpop.f32.mrf.mxu0
  %v375 = vadd.f32 %v330, %v374
  %376 = vdwg.mxu0
  %v377 = vld [vmem:[%s8] sm:$0xf]
  %v378 = vld [vmem:[%s8 + $0x4] sm:$0xf]
  %v379 = vld [vmem:[%s8 + $0x8] sm:$0xf]
  %v380 = vld [vmem:[%s8 + $0xc] sm:$0xf]
  %v381 = vld [vmem:[%s9] sm:$0x1]
  %v383 = vperm.slane %v381, 0
  %v389 = vunpack.c.l.b16 %v377
  %v390 = vunpack.c.l.b16 %v378
  %v391 = vunpack.c.l.b16 %v379
  %v392 = vunpack.c.l.b16 %v380
  %v393 = vpack.c.b16 %v390, %v389
  %v394 = vpack.c.b16 %v392, %v391
  %397 = vmatpush.bf16.msra.mxu0 0
  %398 = vmatpush.bf16.msra.mxu0 0
  %399 = vmatpush.bf16.msra.mxu0 0
  %400 = vmatpush.bf16.msra.mxu0 0
  %401 = vmatpush.bf16.msra.mxu0 0
  %402 = vmatpush.bf16.msra.mxu0 0
  %403 = vmatpush.bf16.msra.mxu0 %v394
  %404 = vmatpush.bf16.msra.mxu0 %v393
  %405 = vmatmul.bf16.gmra.mxu0 %v345
  %v406 = vpop.f32.mrf.mxu0
  %v407 = vadd.f32 %v383, %v406
  %v408 = vpop.f32.mrf.mxu0
  %v409 = vadd.f32 %v383, %v408
  %410 = vmatmul.bf16.gmra.mxu0 %v348
  %v411 = vpop.f32.mrf.mxu0
  %v412 = vadd.f32 %v383, %v411
  %v413 = vpop.f32.mrf.mxu0
  %v414 = vadd.f32 %v383, %v413
  %415 = vmatmul.bf16.gmra.mxu0 %v351
  %v416 = vpop.f32.mrf.mxu0
  %v417 = vadd.f32 %v383, %v416
  %v418 = vpop.f32.mrf.mxu0
  %v419 = vadd.f32 %v383, %v418
  %420 = vdwg.mxu0
  %v421 = vld [vmem:[%s10] sm:$0xf]
  %v422 = vld [vmem:[%s10 + $0x4] sm:$0xf]
  %v423 = vld [vmem:[%s10 + $0x8] sm:$0xf]
  %v424 = vld [vmem:[%s10 + $0xc] sm:$0xf]
  %v425 = vld [vmem:[%s11] sm:$0x1]
  %v427 = vperm.slane %v425, 0
  %v433 = vunpack.c.l.b16 %v421
  %v434 = vunpack.c.l.b16 %v422
  %v435 = vunpack.c.l.b16 %v423
  %v436 = vunpack.c.l.b16 %v424
  %v437 = vpack.c.b16 %v434, %v433
  %v438 = vpack.c.b16 %v436, %v435
  %441 = vmatpush.bf16.msra.mxu0 0
  %442 = vmatpush.bf16.msra.mxu0 0
  %443 = vmatpush.bf16.msra.mxu0 0
  %444 = vmatpush.bf16.msra.mxu0 0
  %445 = vmatpush.bf16.msra.mxu0 0
  %446 = vmatpush.bf16.msra.mxu0 0
  %447 = vmatpush.bf16.msra.mxu0 %v438
  %448 = vmatpush.bf16.msra.mxu0 %v437
  %449 = vmatmul.bf16.gmra.mxu0 %v345
  %v450 = vpop.f32.mrf.mxu0
  %v451 = vadd.f32 %v427, %v450
  %v452 = vpop.f32.mrf.mxu0
  %v453 = vadd.f32 %v427, %v452
  %454 = vmatmul.bf16.gmra.mxu0 %v348
  %v455 = vpop.f32.mrf.mxu0
  %v456 = vadd.f32 %v427, %v455
  %v457 = vpop.f32.mrf.mxu0
  %v458 = vadd.f32 %v427, %v457
  %459 = vmatmul.bf16.gmra.mxu0 %v351
  %v460 = vpop.f32.mrf.mxu0
  %v461 = vadd.f32 %v427, %v460
  %v462 = vpop.f32.mrf.mxu0
  %v463 = vadd.f32 %v427, %v462
  %464 = vdwg.mxu0
  %v465 = vpack.c.bf16 %v363, %v363
  %v466 = vpack.c.bf16 %v365, %v365
  %v467 = vpack.c.bf16 %v368, %v368
  %v468 = vpack.c.bf16 %v370, %v370
  %v469 = vpack.c.bf16 %v373, %v373
  %v470 = vpack.c.bf16 %v375, %v375
  %v471 = vpack.c.bf16 %v407, %v407
  %v472 = vpack.c.bf16 %v409, %v409
  %v473 = vpack.c.bf16 %v412, %v412
  %v474 = vpack.c.bf16 %v414, %v414
  %v475 = vpack.c.bf16 %v417, %v417
  %v476 = vpack.c.bf16 %v419, %v419
  %v477 = vpack.c.bf16 %v451, %v451
  %v478 = vpack.c.bf16 %v453, %v453
  %v479 = vpack.c.bf16 %v456, %v456
  %v480 = vpack.c.bf16 %v458, %v458
  %v481 = vpack.c.bf16 %v461, %v461
  %v482 = vpack.c.bf16 %v463, %v463
  %v486 = vunpack.c.l.b16 %v465
  %v487 = vunpack.c.l.b16 %v466
  %v488 = vunpack.c.l.b16 %v467
  %v489 = vpack.c.b16 %v487, %v486
  %v490 = vpack.c.b16 %v488, %v488
  %v494 = vunpack.c.l.b16 %v471
  %v495 = vunpack.c.l.b16 %v472
  %v496 = vunpack.c.l.b16 %v473
  %v497 = vpack.c.b16 %v495, %v494
  %v498 = vpack.c.b16 %v496, %v496
  %vm499 = vcmask 130048
  %v501 = vsel %vm499, %v489, 0
  %v504 = vsel %vm499, %v490, 0
  %v507 = vsel %vm499, %v497, 0
  %v510 = vsel %vm499, %v498, 0
  %512 = vmatpush.bf16.xpose.msra.mxu0 0
  %513 = vmatpush.bf16.xpose.msra.mxu0 0
  %514 = vmatpush.bf16.xpose.msra.mxu0 0
  %515 = vmatpush.bf16.xpose.msra.mxu0 0
  %516 = vmatpush.bf16.xpose.msra.mxu0 0
  %517 = vmatpush.bf16.xpose.msra.mxu0 0
  %518 = vmatpush.bf16.xpose.msra.mxu0 %v510
  %519 = vmatpush.bf16.xpose.msra.mxu0 %v507
  %520 = vmatmul.bf16.gmra.mxu0 %v501
  %v521 = vpop.f32.mrf.mxu0
  %v522 = vadd.f32 0.0, %v521
  %v523 = vpop.f32.mrf.mxu0
  %v524 = vadd.f32 0.0, %v523
  %525 = vmatmul.bf16.gmra.mxu0 %v504
  %v526 = vpop.f32.mrf.mxu0
  %v527 = vadd.f32 0.0, %v526
  %v528 = vpop.f32.mrf.mxu0
  %529 = vdwg.mxu0
  %v533 = vunpack.c.l.b16 %v468
  %v534 = vunpack.c.l.b16 %v469
  %v535 = vunpack.c.l.b16 %v470
  %v536 = vpack.c.b16 %v534, %v533
  %v537 = vpack.c.b16 %v535, %v535
  %v541 = vunpack.c.l.b16 %v474
  %v542 = vunpack.c.l.b16 %v475
  %v543 = vunpack.c.l.b16 %v476
  %v544 = vpack.c.b16 %v542, %v541
  %v545 = vpack.c.b16 %v543, %v543
  %v547 = vsel %vm499, %v536, 0
  %v550 = vsel %vm499, %v537, 0
  %v553 = vsel %vm499, %v544, 0
  %v556 = vsel %vm499, %v545, 0
  %558 = vmatpush.bf16.xpose.msra.mxu0 0
  %559 = vmatpush.bf16.xpose.msra.mxu0 0
  %560 = vmatpush.bf16.xpose.msra.mxu0 0
  %561 = vmatpush.bf16.xpose.msra.mxu0 0
  %562 = vmatpush.bf16.xpose.msra.mxu0 0
  %563 = vmatpush.bf16.xpose.msra.mxu0 0
  %564 = vmatpush.bf16.xpose.msra.mxu0 %v556
  %565 = vmatpush.bf16.xpose.msra.mxu0 %v553
  %566 = vmatmul.bf16.gmra.mxu0 %v547
  %v567 = vpop.f32.mrf.mxu0
  %v568 = vadd.f32 0.0, %v567
  %v569 = vpop.f32.mrf.mxu0
  %v570 = vadd.f32 0.0, %v569
  %571 = vmatmul.bf16.gmra.mxu0 %v550
  %v572 = vpop.f32.mrf.mxu0
  %v573 = vadd.f32 0.0, %v572
  %v574 = vpop.f32.mrf.mxu0
  %575 = vdwg.mxu0
  %v576 = vmul.f32 %v522, 0.25
  %v577 = vmul.f32 %v524, 0.25
  %v578 = vmul.f32 %v527, 0.25
  %v579 = vmul.f32 %v568, 0.25
  %v580 = vmul.f32 %v570, 0.25
  %v581 = vmul.f32 %v573, 0.25
  %v583 = vperm.slane %v160, 0
  %v585 = vadd.f32 %v576, %v583
  %v586 = vadd.f32 %v577, %v583
  %v587 = vadd.f32 %v578, %v583
  %v588 = vadd.f32 %v579, %v583
  %v589 = vadd.f32 %v580, %v583
  %v590 = vadd.f32 %v581, %v583
  %vm591 = vcmask 195584
  %v592 = vsel %vm591, %v585, -inf
  %593 = vmax.xlane.f32.xlu0 %v592
  %v594 = vpop.xlane.xlu0 %593
  %v595 = vsel %vm591, %v586, -inf
  %596 = vmax.xlane.f32.xlu0 %v595
  %v597 = vpop.xlane.xlu0 %596
  %v598 = vsel %vm591, %v587, -inf
  %599 = vmax.xlane.f32.xlu0 %v598
  %v600 = vpop.xlane.xlu0 %599
  %v601 = vsel %vm591, %v588, -inf
  %602 = vmax.xlane.f32.xlu0 %v601
  %v603 = vpop.xlane.xlu0 %602
  %v604 = vsel %vm591, %v589, -inf
  %605 = vmax.xlane.f32.xlu0 %v604
  %v606 = vpop.xlane.xlu0 %605
  %v607 = vsel %vm591, %v590, -inf
  %608 = vmax.xlane.f32.xlu0 %v607
  %v609 = vpop.xlane.xlu0 %608
  %v610 = vsub.f32 %v585, %v594
  %v611 = vsub.f32 %v586, %v597
  %v612 = vsub.f32 %v587, %v600
  %v613 = vsub.f32 %v588, %v603
  %v614 = vsub.f32 %v589, %v606
  %v615 = vsub.f32 %v590, %v609
  %v616 = vmul.f32 %v610, 1.442695
  %v617 = vpow.pop %v616
  %v618 = vmul.f32 %v611, 1.442695
  %v619 = vpow.pop %v618
  %v620 = vmul.f32 %v612, 1.442695
  %v621 = vpow.pop %v620
  %v622 = vmul.f32 %v613, 1.442695
  %v623 = vpow.pop %v622
  %v624 = vmul.f32 %v614, 1.442695
  %v625 = vpow.pop %v624
  %v626 = vmul.f32 %v615, 1.442695
  %v627 = vpow.pop %v626
  %v628 = vsel %vm591, %v617, 0.0
  %629 = vadd.xlane.f32.xlu0 %v628
  %v630 = vpop.xlane.xlu0 %629
  %v631 = vsel %vm591, %v619, 0.0
  %632 = vadd.xlane.f32.xlu0 %v631
  %v633 = vpop.xlane.xlu0 %632
  %v634 = vsel %vm591, %v621, 0.0
  %635 = vadd.xlane.f32.xlu0 %v634
  %v636 = vpop.xlane.xlu0 %635
  %v637 = vsel %vm591, %v623, 0.0
  %638 = vadd.xlane.f32.xlu0 %v637
  %v639 = vpop.xlane.xlu0 %638
  %v640 = vsel %vm591, %v625, 0.0
  %641 = vadd.xlane.f32.xlu0 %v640
  %v642 = vpop.xlane.xlu0 %641
  %v643 = vsel %vm591, %v627, 0.0
  %644 = vadd.xlane.f32.xlu0 %v643
  %v645 = vpop.xlane.xlu0 %644
  %v646 = vrcp.pop %v630
  %v647 = vrcp.pop %v633
  %v648 = vrcp.pop %v636
  %v649 = vrcp.pop %v639
  %v650 = vrcp.pop %v642
  %v651 = vrcp.pop %v645
  %v652 = vmul.f32 %v617, %v646
  %v653 = vmul.f32 %v619, %v647
  %v654 = vmul.f32 %v621, %v648
  %v655 = vmul.f32 %v623, %v649
  %v656 = vmul.f32 %v625, %v650
  %v657 = vmul.f32 %v627, %v651
  %v658 = vpack.c.bf16 %v652, %v652
  %v659 = vpack.c.bf16 %v653, %v653
  %v660 = vpack.c.bf16 %v654, %v654
  %v661 = vpack.c.bf16 %v655, %v655
  %v662 = vpack.c.bf16 %v656, %v656
  %v663 = vpack.c.bf16 %v657, %v657
  %v667 = vunpack.c.l.b16 %v658
  %v668 = vunpack.c.l.b16 %v659
  %v669 = vunpack.c.l.b16 %v660
  %v670 = vpack.c.b16 %v668, %v667
  %v671 = vpack.c.b16 %v669, %v669
  %v675 = vunpack.c.l.b16 %v477
  %v676 = vunpack.c.l.b16 %v478
  %v677 = vunpack.c.l.b16 %v479
  %v678 = vpack.c.b16 %v676, %v675
  %v679 = vpack.c.b16 %v677, %v677
  %v682 = vsel %vm591, %v670, 0
  %v685 = vsel %vm591, %v671, 0
  %vm687 = vcmask 1043456
  %v689 = vsel %vm687, %v679, 0
  %691 = vmatpush.bf16.msra.mxu0 0
  %692 = vmatpush.bf16.msra.mxu0 0
  %693 = vmatpush.bf16.msra.mxu0 0
  %694 = vmatpush.bf16.msra.mxu0 0
  %695 = vmatpush.bf16.msra.mxu0 0
  %696 = vmatpush.bf16.msra.mxu0 0
  %697 = vmatpush.bf16.msra.mxu0 %v689
  %698 = vmatpush.bf16.msra.mxu0 %v678
  %699 = vmatmul.bf16.gmra.mxu0 %v682
  %v700 = vpop.f32.mrf.mxu0
  %v701 = vadd.f32 0.0, %v700
  %v702 = vpop.f32.mrf.mxu0
  %v703 = vadd.f32 0.0, %v702
  %704 = vmatmul.bf16.gmra.mxu0 %v685
  %v705 = vpop.f32.mrf.mxu0
  %v706 = vadd.f32 0.0, %v705
  %v707 = vpop.f32.mrf.mxu0
  %708 = vdwg.mxu0
  %v712 = vunpack.c.l.b16 %v661
  %v713 = vunpack.c.l.b16 %v662
  %v714 = vunpack.c.l.b16 %v663
  %v715 = vpack.c.b16 %v713, %v712
  %v716 = vpack.c.b16 %v714, %v714
  %v720 = vunpack.c.l.b16 %v480
  %v721 = vunpack.c.l.b16 %v481
  %v722 = vunpack.c.l.b16 %v482
  %v723 = vpack.c.b16 %v721, %v720
  %v724 = vpack.c.b16 %v722, %v722
  %v727 = vsel %vm591, %v715, 0
  %v730 = vsel %vm591, %v716, 0
  %v733 = vsel %vm687, %v724, 0
  %735 = vmatpush.bf16.msra.mxu0 0
  %736 = vmatpush.bf16.msra.mxu0 0
  %737 = vmatpush.bf16.msra.mxu0 0
  %738 = vmatpush.bf16.msra.mxu0 0
  %739 = vmatpush.bf16.msra.mxu0 0
  %740 = vmatpush.bf16.msra.mxu0 0
  %741 = vmatpush.bf16.msra.mxu0 %v733
  %742 = vmatpush.bf16.msra.mxu0 %v723
  %743 = vmatmul.bf16.gmra.mxu0 %v727
  %v744 = vpop.f32.mrf.mxu0
  %v745 = vadd.f32 0.0, %v744
  %v746 = vpop.f32.mrf.mxu0
  %v747 = vadd.f32 0.0, %v746
  %748 = vmatmul.bf16.gmra.mxu0 %v730
  %v749 = vpop.f32.mrf.mxu0
  %v750 = vadd.f32 0.0, %v749
  %v751 = vpop.f32.mrf.mxu0
  %752 = vdwg.mxu0
  %v753 = vpack.c.bf16 %v703, %v701
  %v754 = vpack.c.bf16 %v745, %v706
  %v755 = vpack.c.bf16 %v750, %v747
  %v756 = vld [vmem:[%s12] sm:$0xf]
  %v757 = vld [vmem:[%s12 + $0x4] sm:$0xf]
  %s758 = scalar_lea.vmem %s6, 16
  %v759 = vld [vmem:[%s758] sm:$0xf]
  %v760 = vld [vmem:[%s758 + $0x4] sm:$0xf]
  %v761 = vld [vmem:[%s758 + $0x8] sm:$0xf]
  %v762 = vld [vmem:[%s758 + $0xc] sm:$0xf]
  %s763 = scalar_lea.vmem %s7, 1
  %v764 = vld [vmem:[%s763] sm:$0x1]
  %v766 = vperm.slane %v764, 0
  %v772 = vunpack.c.l.b16 %v759
  %v773 = vunpack.c.l.b16 %v760
  %v774 = vunpack.c.l.b16 %v761
  %v775 = vunpack.c.l.b16 %v762
  %v776 = vpack.c.b16 %v773, %v772
  %v777 = vpack.c.b16 %v775, %v774
  %780 = vmatpush.bf16.msra.mxu0 0
  %781 = vmatpush.bf16.msra.mxu0 0
  %782 = vmatpush.bf16.msra.mxu0 0
  %783 = vmatpush.bf16.msra.mxu0 0
  %784 = vmatpush.bf16.msra.mxu0 0
  %785 = vmatpush.bf16.msra.mxu0 0
  %786 = vmatpush.bf16.msra.mxu0 %v777
  %787 = vmatpush.bf16.msra.mxu0 %v776
  %788 = vmatmul.bf16.gmra.mxu0 %v345
  %v789 = vpop.f32.mrf.mxu0
  %v790 = vadd.f32 %v766, %v789
  %v791 = vpop.f32.mrf.mxu0
  %v792 = vadd.f32 %v766, %v791
  %793 = vmatmul.bf16.gmra.mxu0 %v348
  %v794 = vpop.f32.mrf.mxu0
  %v795 = vadd.f32 %v766, %v794
  %v796 = vpop.f32.mrf.mxu0
  %v797 = vadd.f32 %v766, %v796
  %798 = vmatmul.bf16.gmra.mxu0 %v351
  %v799 = vpop.f32.mrf.mxu0
  %v800 = vadd.f32 %v766, %v799
  %v801 = vpop.f32.mrf.mxu0
  %v802 = vadd.f32 %v766, %v801
  %803 = vdwg.mxu0
  %s804 = scalar_lea.vmem %s8, 16
  %v805 = vld [vmem:[%s804] sm:$0xf]
  %v806 = vld [vmem:[%s804 + $0x4] sm:$0xf]
  %v807 = vld [vmem:[%s804 + $0x8] sm:$0xf]
  %v808 = vld [vmem:[%s804 + $0xc] sm:$0xf]
  %s809 = scalar_lea.vmem %s9, 1
  %v810 = vld [vmem:[%s809] sm:$0x1]
  %v812 = vperm.slane %v810, 0
  %v818 = vunpack.c.l.b16 %v805
  %v819 = vunpack.c.l.b16 %v806
  %v820 = vunpack.c.l.b16 %v807
  %v821 = vunpack.c.l.b16 %v808
  %v822 = vpack.c.b16 %v819, %v818
  %v823 = vpack.c.b16 %v821, %v820
  %826 = vmatpush.bf16.msra.mxu0 0
  %827 = vmatpush.bf16.msra.mxu0 0
  %828 = vmatpush.bf16.msra.mxu0 0
  %829 = vmatpush.bf16.msra.mxu0 0
  %830 = vmatpush.bf16.msra.mxu0 0
  %831 = vmatpush.bf16.msra.mxu0 0
  %832 = vmatpush.bf16.msra.mxu0 %v823
  %833 = vmatpush.bf16.msra.mxu0 %v822
  %834 = vmatmul.bf16.gmra.mxu0 %v345
  %v835 = vpop.f32.mrf.mxu0
  %v836 = vadd.f32 %v812, %v835
  %v837 = vpop.f32.mrf.mxu0
  %v838 = vadd.f32 %v812, %v837
  %839 = vmatmul.bf16.gmra.mxu0 %v348
  %v840 = vpop.f32.mrf.mxu0
  %v841 = vadd.f32 %v812, %v840
  %v842 = vpop.f32.mrf.mxu0
  %v843 = vadd.f32 %v812, %v842
  %844 = vmatmul.bf16.gmra.mxu0 %v351
  %v845 = vpop.f32.mrf.mxu0
  %v846 = vadd.f32 %v812, %v845
  %v847 = vpop.f32.mrf.mxu0
  %v848 = vadd.f32 %v812, %v847
  %849 = vdwg.mxu0
  %s850 = scalar_lea.vmem %s10, 16
  %v851 = vld [vmem:[%s850] sm:$0xf]
  %v852 = vld [vmem:[%s850 + $0x4] sm:$0xf]
  %v853 = vld [vmem:[%s850 + $0x8] sm:$0xf]
  %v854 = vld [vmem:[%s850 + $0xc] sm:$0xf]
  %s855 = scalar_lea.vmem %s11, 1
  %v856 = vld [vmem:[%s855] sm:$0x1]
  %v858 = vperm.slane %v856, 0
  %v864 = vunpack.c.l.b16 %v851
  %v865 = vunpack.c.l.b16 %v852
  %v866 = vunpack.c.l.b16 %v853
  %v867 = vunpack.c.l.b16 %v854
  %v868 = vpack.c.b16 %v865, %v864
  %v869 = vpack.c.b16 %v867, %v866
  %872 = vmatpush.bf16.msra.mxu0 0
  %873 = vmatpush.bf16.msra.mxu0 0
  %874 = vmatpush.bf16.msra.mxu0 0
  %875 = vmatpush.bf16.msra.mxu0 0
  %876 = vmatpush.bf16.msra.mxu0 0
  %877 = vmatpush.bf16.msra.mxu0 0
  %878 = vmatpush.bf16.msra.mxu0 %v869
  %879 = vmatpush.bf16.msra.mxu0 %v868
  %880 = vmatmul.bf16.gmra.mxu0 %v345
  %v881 = vpop.f32.mrf.mxu0
  %v882 = vadd.f32 %v858, %v881
  %v883 = vpop.f32.mrf.mxu0
  %v884 = vadd.f32 %v858, %v883
  %885 = vmatmul.bf16.gmra.mxu0 %v348
  %v886 = vpop.f32.mrf.mxu0
  %v887 = vadd.f32 %v858, %v886
  %v888 = vpop.f32.mrf.mxu0
  %v889 = vadd.f32 %v858, %v888
  %890 = vmatmul.bf16.gmra.mxu0 %v351
  %v891 = vpop.f32.mrf.mxu0
  %v892 = vadd.f32 %v858, %v891
  %v893 = vpop.f32.mrf.mxu0
  %v894 = vadd.f32 %v858, %v893
  %895 = vdwg.mxu0
  %v896 = vpack.c.bf16 %v790, %v790
  %v897 = vpack.c.bf16 %v792, %v792
  %v898 = vpack.c.bf16 %v795, %v795
  %v899 = vpack.c.bf16 %v797, %v797
  %v900 = vpack.c.bf16 %v800, %v800
  %v901 = vpack.c.bf16 %v802, %v802
  %v902 = vpack.c.bf16 %v836, %v836
  %v903 = vpack.c.bf16 %v838, %v838
  %v904 = vpack.c.bf16 %v841, %v841
  %v905 = vpack.c.bf16 %v843, %v843
  %v906 = vpack.c.bf16 %v846, %v846
  %v907 = vpack.c.bf16 %v848, %v848
  %v908 = vpack.c.bf16 %v882, %v882
  %v909 = vpack.c.bf16 %v884, %v884
  %v910 = vpack.c.bf16 %v887, %v887
  %v911 = vpack.c.bf16 %v889, %v889
  %v912 = vpack.c.bf16 %v892, %v892
  %v913 = vpack.c.bf16 %v894, %v894
  %v917 = vunpack.c.l.b16 %v896
  %v918 = vunpack.c.l.b16 %v897
  %v919 = vunpack.c.l.b16 %v898
  %v920 = vpack.c.b16 %v918, %v917
  %v921 = vpack.c.b16 %v919, %v919
  %v925 = vunpack.c.l.b16 %v902
  %v926 = vunpack.c.l.b16 %v903
  %v927 = vunpack.c.l.b16 %v904
  %v928 = vpack.c.b16 %v926, %v925
  %v929 = vpack.c.b16 %v927, %v927
  %v931 = vsel %vm499, %v920, 0
  %v934 = vsel %vm499, %v921, 0
  %v937 = vsel %vm499, %v928, 0
  %v940 = vsel %vm499, %v929, 0
  %942 = vmatpush.bf16.xpose.msra.mxu0 0
  %943 = vmatpush.bf16.xpose.msra.mxu0 0
  %944 = vmatpush.bf16.xpose.msra.mxu0 0
  %945 = vmatpush.bf16.xpose.msra.mxu0 0
  %946 = vmatpush.bf16.xpose.msra.mxu0 0
  %947 = vmatpush.bf16.xpose.msra.mxu0 0
  %948 = vmatpush.bf16.xpose.msra.mxu0 %v940
  %949 = vmatpush.bf16.xpose.msra.mxu0 %v937
  %950 = vmatmul.bf16.gmra.mxu0 %v931
  %v951 = vpop.f32.mrf.mxu0
  %v952 = vadd.f32 0.0, %v951
  %v953 = vpop.f32.mrf.mxu0
  %v954 = vadd.f32 0.0, %v953
  %955 = vmatmul.bf16.gmra.mxu0 %v934
  %v956 = vpop.f32.mrf.mxu0
  %v957 = vadd.f32 0.0, %v956
  %v958 = vpop.f32.mrf.mxu0
  %959 = vdwg.mxu0
  %v963 = vunpack.c.l.b16 %v899
  %v964 = vunpack.c.l.b16 %v900
  %v965 = vunpack.c.l.b16 %v901
  %v966 = vpack.c.b16 %v964, %v963
  %v967 = vpack.c.b16 %v965, %v965
  %v971 = vunpack.c.l.b16 %v905
  %v972 = vunpack.c.l.b16 %v906
  %v973 = vunpack.c.l.b16 %v907
  %v974 = vpack.c.b16 %v972, %v971
  %v975 = vpack.c.b16 %v973, %v973
  %v977 = vsel %vm499, %v966, 0
  %v980 = vsel %vm499, %v967, 0
  %v983 = vsel %vm499, %v974, 0
  %v986 = vsel %vm499, %v975, 0
  %988 = vmatpush.bf16.xpose.msra.mxu0 0
  %989 = vmatpush.bf16.xpose.msra.mxu0 0
  %990 = vmatpush.bf16.xpose.msra.mxu0 0
  %991 = vmatpush.bf16.xpose.msra.mxu0 0
  %992 = vmatpush.bf16.xpose.msra.mxu0 0
  %993 = vmatpush.bf16.xpose.msra.mxu0 0
  %994 = vmatpush.bf16.xpose.msra.mxu0 %v986
  %995 = vmatpush.bf16.xpose.msra.mxu0 %v983
  %996 = vmatmul.bf16.gmra.mxu0 %v977
  %v997 = vpop.f32.mrf.mxu0
  %v998 = vadd.f32 0.0, %v997
  %v999 = vpop.f32.mrf.mxu0
  %v1000 = vadd.f32 0.0, %v999
  %1001 = vmatmul.bf16.gmra.mxu0 %v980
  %v1002 = vpop.f32.mrf.mxu0
  %v1003 = vadd.f32 0.0, %v1002
  %v1004 = vpop.f32.mrf.mxu0
  %1005 = vdwg.mxu0
  %v1006 = vmul.f32 %v952, 0.25
  %v1007 = vmul.f32 %v954, 0.25
  %v1008 = vmul.f32 %v957, 0.25
  %v1009 = vmul.f32 %v998, 0.25
  %v1010 = vmul.f32 %v1000, 0.25
  %v1011 = vmul.f32 %v1003, 0.25
  %v1012 = vadd.f32 %v1006, %v583
  %v1013 = vadd.f32 %v1007, %v583
  %v1014 = vadd.f32 %v1008, %v583
  %v1015 = vadd.f32 %v1009, %v583
  %v1016 = vadd.f32 %v1010, %v583
  %v1017 = vadd.f32 %v1011, %v583
  %v1018 = vsel %vm591, %v1012, -inf
  %1019 = vmax.xlane.f32.xlu0 %v1018
  %v1020 = vpop.xlane.xlu0 %1019
  %v1021 = vsel %vm591, %v1013, -inf
  %1022 = vmax.xlane.f32.xlu0 %v1021
  %v1023 = vpop.xlane.xlu0 %1022
  %v1024 = vsel %vm591, %v1014, -inf
  %1025 = vmax.xlane.f32.xlu0 %v1024
  %v1026 = vpop.xlane.xlu0 %1025
  %v1027 = vsel %vm591, %v1015, -inf
  %1028 = vmax.xlane.f32.xlu0 %v1027
  %v1029 = vpop.xlane.xlu0 %1028
  %v1030 = vsel %vm591, %v1016, -inf
  %1031 = vmax.xlane.f32.xlu0 %v1030
  %v1032 = vpop.xlane.xlu0 %1031
  %v1033 = vsel %vm591, %v1017, -inf
  %1034 = vmax.xlane.f32.xlu0 %v1033
  %v1035 = vpop.xlane.xlu0 %1034
  %v1036 = vsub.f32 %v1012, %v1020
  %v1037 = vsub.f32 %v1013, %v1023
  %v1038 = vsub.f32 %v1014, %v1026
  %v1039 = vsub.f32 %v1015, %v1029
  %v1040 = vsub.f32 %v1016, %v1032
  %v1041 = vsub.f32 %v1017, %v1035
  %v1042 = vmul.f32 %v1036, 1.442695
  %v1043 = vpow.pop %v1042
  %v1044 = vmul.f32 %v1037, 1.442695
  %v1045 = vpow.pop %v1044
  %v1046 = vmul.f32 %v1038, 1.442695
  %v1047 = vpow.pop %v1046
  %v1048 = vmul.f32 %v1039, 1.442695
  %v1049 = vpow.pop %v1048
  %v1050 = vmul.f32 %v1040, 1.442695
  %v1051 = vpow.pop %v1050
  %v1052 = vmul.f32 %v1041, 1.442695
  %v1053 = vpow.pop %v1052
  %v1054 = vsel %vm591, %v1043, 0.0
  %1055 = vadd.xlane.f32.xlu0 %v1054
  %v1056 = vpop.xlane.xlu0 %1055
  %v1057 = vsel %vm591, %v1045, 0.0
  %1058 = vadd.xlane.f32.xlu0 %v1057
  %v1059 = vpop.xlane.xlu0 %1058
  %v1060 = vsel %vm591, %v1047, 0.0
  %1061 = vadd.xlane.f32.xlu0 %v1060
  %v1062 = vpop.xlane.xlu0 %1061
  %v1063 = vsel %vm591, %v1049, 0.0
  %1064 = vadd.xlane.f32.xlu0 %v1063
  %v1065 = vpop.xlane.xlu0 %1064
  %v1066 = vsel %vm591, %v1051, 0.0
  %1067 = vadd.xlane.f32.xlu0 %v1066
  %v1068 = vpop.xlane.xlu0 %1067
  %v1069 = vsel %vm591, %v1053, 0.0
  %1070 = vadd.xlane.f32.xlu0 %v1069
  %v1071 = vpop.xlane.xlu0 %1070
  %v1072 = vrcp.pop %v1056
  %v1073 = vrcp.pop %v1059
  %v1074 = vrcp.pop %v1062
  %v1075 = vrcp.pop %v1065
  %v1076 = vrcp.pop %v1068
  %v1077 = vrcp.pop %v1071
  %v1078 = vmul.f32 %v1043, %v1072
  %v1079 = vmul.f32 %v1045, %v1073
  %v1080 = vmul.f32 %v1047, %v1074
  %v1081 = vmul.f32 %v1049, %v1075
  %v1082 = vmul.f32 %v1051, %v1076
  %v1083 = vmul.f32 %v1053, %v1077
  %v1084 = vpack.c.bf16 %v1078, %v1078
  %v1085 = vpack.c.bf16 %v1079, %v1079
  %v1086 = vpack.c.bf16 %v1080, %v1080
  %v1087 = vpack.c.bf16 %v1081, %v1081
  %v1088 = vpack.c.bf16 %v1082, %v1082
  %v1089 = vpack.c.bf16 %v1083, %v1083
  %v1093 = vunpack.c.l.b16 %v1084
  %v1094 = vunpack.c.l.b16 %v1085
  %v1095 = vunpack.c.l.b16 %v1086
  %v1096 = vpack.c.b16 %v1094, %v1093
  %v1097 = vpack.c.b16 %v1095, %v1095
  %v1101 = vunpack.c.l.b16 %v908
  %v1102 = vunpack.c.l.b16 %v909
  %v1103 = vunpack.c.l.b16 %v910
  %v1104 = vpack.c.b16 %v1102, %v1101
  %v1105 = vpack.c.b16 %v1103, %v1103
  %v1108 = vsel %vm591, %v1096, 0
  %v1111 = vsel %vm591, %v1097, 0
  %v1114 = vsel %vm687, %v1105, 0
  %1116 = vmatpush.bf16.msra.mxu0 0
  %1117 = vmatpush.bf16.msra.mxu0 0
  %1118 = vmatpush.bf16.msra.mxu0 0
  %1119 = vmatpush.bf16.msra.mxu0 0
  %1120 = vmatpush.bf16.msra.mxu0 0
  %1121 = vmatpush.bf16.msra.mxu0 0
  %1122 = vmatpush.bf16.msra.mxu0 %v1114
  %1123 = vmatpush.bf16.msra.mxu0 %v1104
  %1124 = vmatmul.bf16.gmra.mxu0 %v1108
  %v1125 = vpop.f32.mrf.mxu0
  %v1126 = vadd.f32 0.0, %v1125
  %v1127 = vpop.f32.mrf.mxu0
  %v1128 = vadd.f32 0.0, %v1127
  %1129 = vmatmul.bf16.gmra.mxu0 %v1111
  %v1130 = vpop.f32.mrf.mxu0
  %v1131 = vadd.f32 0.0, %v1130
  %v1132 = vpop.f32.mrf.mxu0
  %1133 = vdwg.mxu0
  %v1137 = vunpack.c.l.b16 %v1087
  %v1138 = vunpack.c.l.b16 %v1088
  %v1139 = vunpack.c.l.b16 %v1089
  %v1140 = vpack.c.b16 %v1138, %v1137
  %v1141 = vpack.c.b16 %v1139, %v1139
  %v1145 = vunpack.c.l.b16 %v911
  %v1146 = vunpack.c.l.b16 %v912
  %v1147 = vunpack.c.l.b16 %v913
  %v1148 = vpack.c.b16 %v1146, %v1145
  %v1149 = vpack.c.b16 %v1147, %v1147
  %v1152 = vsel %vm591, %v1140, 0
  %v1155 = vsel %vm591, %v1141, 0
  %v1158 = vsel %vm687, %v1149, 0
  %1160 = vmatpush.bf16.msra.mxu0 0
  %1161 = vmatpush.bf16.msra.mxu0 0
  %1162 = vmatpush.bf16.msra.mxu0 0
  %1163 = vmatpush.bf16.msra.mxu0 0
  %1164 = vmatpush.bf16.msra.mxu0 0
  %1165 = vmatpush.bf16.msra.mxu0 0
  %1166 = vmatpush.bf16.msra.mxu0 %v1158
  %1167 = vmatpush.bf16.msra.mxu0 %v1148
  %1168 = vmatmul.bf16.gmra.mxu0 %v1152
  %v1169 = vpop.f32.mrf.mxu0
  %v1170 = vadd.f32 0.0, %v1169
  %v1171 = vpop.f32.mrf.mxu0
  %v1172 = vadd.f32 0.0, %v1171
  %1173 = vmatmul.bf16.gmra.mxu0 %v1155
  %v1174 = vpop.f32.mrf.mxu0
  %v1175 = vadd.f32 0.0, %v1174
  %v1176 = vpop.f32.mrf.mxu0
  %1177 = vdwg.mxu0
  %v1178 = vpack.c.bf16 %v1128, %v1126
  %v1179 = vpack.c.bf16 %v1170, %v1131
  %v1180 = vpack.c.bf16 %v1175, %v1172
  %s1181 = scalar_lea.vmem %s12, 8
  %v1182 = vld [vmem:[%s1181] sm:$0xf]
  %v1183 = vld [vmem:[%s1181 + $0x4] sm:$0xf]
  %v1186 = vunpack.c.l.b16 %v1182
  %v1187 = vunpack.c.l.b16 %v1183
  %v1188 = vpack.c.b16 %v1187, %v1186
  %v1191 = vsel %vm499, %v1178, 0
  %v1194 = vsel %vm499, %v1179, 0
  %v1197 = vsel %vm499, %v1180, 0
  %1199 = vmatpush.bf16.msra.mxu0 0
  %1200 = vmatpush.bf16.msra.mxu0 0
  %1201 = vmatpush.bf16.msra.mxu0 0
  %1202 = vmatpush.bf16.msra.mxu0 0
  %1203 = vmatpush.bf16.msra.mxu0 0
  %1204 = vmatpush.bf16.msra.mxu0 0
  %1205 = vmatpush.bf16.msra.mxu0 0
  %1206 = vmatpush.bf16.msra.mxu0 %v1188
  %1207 = vmatmul.bf16.gmra.mxu0 %v1191
  %v1208 = vpop.f32.mrf.mxu0
  %v1209 = vadd.f32 0.0, %v1208
  %v1210 = vpop.f32.mrf.mxu0
  %v1211 = vadd.f32 0.0, %v1210
  %1212 = vmatmul.bf16.gmra.mxu0 %v1194
  %v1213 = vpop.f32.mrf.mxu0
  %v1214 = vadd.f32 0.0, %v1213
  %v1215 = vpop.f32.mrf.mxu0
  %v1216 = vadd.f32 0.0, %v1215
  %1217 = vmatmul.bf16.gmra.mxu0 %v1197
  %v1218 = vpop.f32.mrf.mxu0
  %v1219 = vadd.f32 0.0, %v1218
  %v1220 = vpop.f32.mrf.mxu0
  %v1221 = vadd.f32 0.0, %v1220
  %1222 = vdwg.mxu0
  %v1225 = vunpack.c.l.b16 %v756
  %v1226 = vunpack.c.l.b16 %v757
  %v1227 = vpack.c.b16 %v1226, %v1225
  %v1230 = vsel %vm499, %v753, 0
  %v1233 = vsel %vm499, %v754, 0
  %v1236 = vsel %vm499, %v755, 0
  %1238 = vmatpush.bf16.msra.mxu0 0
  %1239 = vmatpush.bf16.msra.mxu0 0
  %1240 = vmatpush.bf16.msra.mxu0 0
  %1241 = vmatpush.bf16.msra.mxu0 0
  %1242 = vmatpush.bf16.msra.mxu0 0
  %1243 = vmatpush.bf16.msra.mxu0 0
  %1244 = vmatpush.bf16.msra.mxu0 0
  %1245 = vmatpush.bf16.msra.mxu0 %v1227
  %1246 = vmatmul.bf16.gmra.mxu0 %v1230
  %v1247 = vpop.f32.mrf.mxu0
  %v1248 = vadd.f32 %v1209, %v1247
  %v1249 = vpop.f32.mrf.mxu0
  %v1250 = vadd.f32 %v1211, %v1249
  %1251 = vmatmul.bf16.gmra.mxu0 %v1233
  %v1252 = vpop.f32.mrf.mxu0
  %v1253 = vadd.f32 %v1214, %v1252
  %v1254 = vpop.f32.mrf.mxu0
  %v1255 = vadd.f32 %v1216, %v1254
  %1256 = vmatmul.bf16.gmra.mxu0 %v1236
  %v1257 = vpop.f32.mrf.mxu0
  %v1258 = vadd.f32 %v1219, %v1257
  %v1259 = vpop.f32.mrf.mxu0
  %v1260 = vadd.f32 %v1221, %v1259
  %1261 = vdwg.mxu0
  %v1262 = vadd.f32 %v154, %v1248
  %v1263 = vadd.f32 %v155, %v1250
  %v1264 = vadd.f32 %v156, %v1253
  %v1265 = vadd.f32 %v157, %v1255
  %v1266 = vadd.f32 %v158, %v1258
  %v1267 = vadd.f32 %v159, %v1260
  %v1268 = vld [vmem:[%s13] sm:$0x1]
  %v1270 = vperm.slane %v1268, 0
  %v1272 = vadd.f32 %v1262, %v1270
  %v1273 = vadd.f32 %v1263, %v1270
  %v1274 = vadd.f32 %v1264, %v1270
  %v1275 = vadd.f32 %v1265, %v1270
  %v1276 = vadd.f32 %v1266, %v1270
  %v1277 = vadd.f32 %v1267, %v1270
  %v1278 = vld [vmem:[%s14] sm:$0x1]
  %v1279 = vld [vmem:[%s15] sm:$0x1]
  %v1280 = vsel %vm163, %v1272, 0.0
  %1281 = vadd.xlane.f32.xlu0 %v1280
  %v1282 = vpop.xlane.xlu0 %1281
  %v1283 = vsel %vm163, %v1273, 0.0
  %1284 = vadd.xlane.f32.xlu0 %v1283
  %v1285 = vpop.xlane.xlu0 %1284
  %v1286 = vsel %vm163, %v1274, 0.0
  %1287 = vadd.xlane.f32.xlu0 %v1286
  %v1288 = vpop.xlane.xlu0 %1287
  %v1289 = vsel %vm163, %v1275, 0.0
  %1290 = vadd.xlane.f32.xlu0 %v1289
  %v1291 = vpop.xlane.xlu0 %1290
  %v1292 = vsel %vm163, %v1276, 0.0
  %1293 = vadd.xlane.f32.xlu0 %v1292
  %v1294 = vpop.xlane.xlu0 %1293
  %v1295 = vsel %vm163, %v1277, 0.0
  %1296 = vadd.xlane.f32.xlu0 %v1295
  %v1297 = vpop.xlane.xlu0 %1296
  %v1298 = vmul.f32 %v1282, %v188
  %v1299 = vmul.f32 %v1285, %v188
  %v1300 = vmul.f32 %v1288, %v188
  %v1301 = vmul.f32 %v1291, %v188
  %v1302 = vmul.f32 %v1294, %v188
  %v1303 = vmul.f32 %v1297, %v188
  %v1304 = vsub.f32 %v1272, %v1298
  %v1305 = vsub.f32 %v1273, %v1299
  %v1306 = vsub.f32 %v1274, %v1300
  %v1307 = vsub.f32 %v1275, %v1301
  %v1308 = vsub.f32 %v1276, %v1302
  %v1309 = vsub.f32 %v1277, %v1303
  %v1310 = vmul.f32 %v1304, %v1304
  %v1311 = vmul.f32 %v1305, %v1305
  %v1312 = vmul.f32 %v1306, %v1306
  %v1313 = vmul.f32 %v1307, %v1307
  %v1314 = vmul.f32 %v1308, %v1308
  %v1315 = vmul.f32 %v1309, %v1309
  %v1316 = vsel %vm163, %v1310, 0.0
  %1317 = vadd.xlane.f32.xlu0 %v1316
  %v1318 = vpop.xlane.xlu0 %1317
  %v1319 = vsel %vm163, %v1311, 0.0
  %1320 = vadd.xlane.f32.xlu0 %v1319
  %v1321 = vpop.xlane.xlu0 %1320
  %v1322 = vsel %vm163, %v1312, 0.0
  %1323 = vadd.xlane.f32.xlu0 %v1322
  %v1324 = vpop.xlane.xlu0 %1323
  %v1325 = vsel %vm163, %v1313, 0.0
  %1326 = vadd.xlane.f32.xlu0 %v1325
  %v1327 = vpop.xlane.xlu0 %1326
  %v1328 = vsel %vm163, %v1314, 0.0
  %1329 = vadd.xlane.f32.xlu0 %v1328
  %v1330 = vpop.xlane.xlu0 %1329
  %v1331 = vsel %vm163, %v1315, 0.0
  %1332 = vadd.xlane.f32.xlu0 %v1331
  %v1333 = vpop.xlane.xlu0 %1332
  %v1334 = vmul.f32 %v1318, %v188
  %v1335 = vmul.f32 %v1321, %v188
  %v1336 = vmul.f32 %v1324, %v188
  %v1337 = vmul.f32 %v1327, %v188
  %v1338 = vmul.f32 %v1330, %v188
  %v1339 = vmul.f32 %v1333, %v188
  %v1340 = vadd.f32 %v1334, 1e-06
  %v1341 = vadd.f32 %v1335, 1e-06
  %v1342 = vadd.f32 %v1336, 1e-06
  %v1343 = vadd.f32 %v1337, 1e-06
  %v1344 = vadd.f32 %v1338, 1e-06
  %v1345 = vadd.f32 %v1339, 1e-06
  %v1346 = vrsqrt.pop %v1340
  %v1347 = vmul.f32 %v1346, %v1340
  %v1348 = vmul.f32 %v1347, %v1346
  %v1349 = vmul.f32 0.5, %v1348
  %v1350 = vsub.f32 1.5, %v1349
  %v1351 = vmul.f32 %v1346, %v1350
  %vm1352 = vweird.f32 %v1340
  %vm1353 = vweird.f32 %v1346
  %vm1354 = vmor %vm1352, %vm1353
  %v1355 = vsel %vm1354, %v1346, %v1351
  %v1356 = vrsqrt.pop %v1341
  %v1357 = vmul.f32 %v1356, %v1341
  %v1358 = vmul.f32 %v1357, %v1356
  %v1359 = vmul.f32 0.5, %v1358
  %v1360 = vsub.f32 1.5, %v1359
  %v1361 = vmul.f32 %v1356, %v1360
  %vm1362 = vweird.f32 %v1341
  %vm1363 = vweird.f32 %v1356
  %vm1364 = vmor %vm1362, %vm1363
  %v1365 = vsel %vm1364, %v1356, %v1361
  %v1366 = vrsqrt.pop %v1342
  %v1367 = vmul.f32 %v1366, %v1342
  %v1368 = vmul.f32 %v1367, %v1366
  %v1369 = vmul.f32 0.5, %v1368
  %v1370 = vsub.f32 1.5, %v1369
  %v1371 = vmul.f32 %v1366, %v1370
  %vm1372 = vweird.f32 %v1342
  %vm1373 = vweird.f32 %v1366
  %vm1374 = vmor %vm1372, %vm1373
  %v1375 = vsel %vm1374, %v1366, %v1371
  %v1376 = vrsqrt.pop %v1343
  %v1377 = vmul.f32 %v1376, %v1343
  %v1378 = vmul.f32 %v1377, %v1376
  %v1379 = vmul.f32 0.5, %v1378
  %v1380 = vsub.f32 1.5, %v1379
  %v1381 = vmul.f32 %v1376, %v1380
  %vm1382 = vweird.f32 %v1343
  %vm1383 = vweird.f32 %v1376
  %vm1384 = vmor %vm1382, %vm1383
  %v1385 = vsel %vm1384, %v1376, %v1381
  %v1386 = vrsqrt.pop %v1344
  %v1387 = vmul.f32 %v1386, %v1344
  %v1388 = vmul.f32 %v1387, %v1386
  %v1389 = vmul.f32 0.5, %v1388
  %v1390 = vsub.f32 1.5, %v1389
  %v1391 = vmul.f32 %v1386, %v1390
  %vm1392 = vweird.f32 %v1344
  %vm1393 = vweird.f32 %v1386
  %vm1394 = vmor %vm1392, %vm1393
  %v1395 = vsel %vm1394, %v1386, %v1391
  %v1396 = vrsqrt.pop %v1345
  %v1397 = vmul.f32 %v1396, %v1345
  %v1398 = vmul.f32 %v1397, %v1396
  %v1399 = vmul.f32 0.5, %v1398
  %v1400 = vsub.f32 1.5, %v1399
  %v1401 = vmul.f32 %v1396, %v1400
  %vm1402 = vweird.f32 %v1345
  %vm1403 = vweird.f32 %v1396
  %vm1404 = vmor %vm1402, %vm1403
  %v1405 = vsel %vm1404, %v1396, %v1401
  %v1406 = vmul.f32 %v1304, %v1355
  %v1407 = vmul.f32 %v1305, %v1365
  %v1408 = vmul.f32 %v1306, %v1375
  %v1409 = vmul.f32 %v1307, %v1385
  %v1410 = vmul.f32 %v1308, %v1395
  %v1411 = vmul.f32 %v1309, %v1405
  %v1413 = vperm.slane %v1278, 0
  %v1415 = vmul.f32 %v1406, %v1413
  %v1416 = vmul.f32 %v1407, %v1413
  %v1417 = vmul.f32 %v1408, %v1413
  %v1418 = vmul.f32 %v1409, %v1413
  %v1419 = vmul.f32 %v1410, %v1413
  %v1420 = vmul.f32 %v1411, %v1413
  %v1422 = vperm.slane %v1279, 0
  %v1424 = vadd.f32 %v1415, %v1422
  %v1425 = vadd.f32 %v1416, %v1422
  %v1426 = vadd.f32 %v1417, %v1422
  %v1427 = vadd.f32 %v1418, %v1422
  %v1428 = vadd.f32 %v1419, %v1422
  %v1429 = vadd.f32 %v1420, %v1422
  %v1430 = vpack.c.bf16 %v1425, %v1424
  %v1431 = vpack.c.bf16 %v1427, %v1426
  %v1432 = vpack.c.bf16 %v1429, %v1428
  %v1433 = vld [vmem:[%s16] sm:$0xf]
  %v1434 = vld [vmem:[%s16 + $0x4] sm:$0xf]
  %v1435 = vld [vmem:[%s16 + $0x8] sm:$0xf]
  %v1436 = vld [vmem:[%s16 + $0xc] sm:$0xf]
  %v1437 = vld [vmem:[%s17] sm:$0x1]
  %v1439 = vperm.slane %v1437, 0
  %v1445 = vunpack.c.l.b16 %v1433
  %v1446 = vunpack.c.l.b16 %v1434
  %v1447 = vunpack.c.l.b16 %v1435
  %v1448 = vunpack.c.l.b16 %v1436
  %v1449 = vpack.c.b16 %v1446, %v1445
  %v1450 = vpack.c.b16 %v1448, %v1447
  %v1454 = vsel %vm163, %v1430, 0
  %v1457 = vsel %vm163, %v1431, 0
  %v1460 = vsel %vm163, %v1432, 0
  %1462 = vmatpush.bf16.msra.mxu0 0
  %1463 = vmatpush.bf16.msra.mxu0 0
  %1464 = vmatpush.bf16.msra.mxu0 0
  %1465 = vmatpush.bf16.msra.mxu0 0
  %1466 = vmatpush.bf16.msra.mxu0 0
  %1467 = vmatpush.bf16.msra.mxu0 0
  %1468 = vmatpush.bf16.msra.mxu0 %v1450
  %1469 = vmatpush.bf16.msra.mxu0 %v1449
  %1470 = vmatmul.bf16.gmra.mxu0 %v1454
  %v1471 = vpop.f32.mrf.mxu0
  %v1472 = vadd.f32 %v1439, %v1471
  %v1473 = vpop.f32.mrf.mxu0
  %v1474 = vadd.f32 %v1439, %v1473
  %1475 = vmatmul.bf16.gmra.mxu0 %v1457
  %v1476 = vpop.f32.mrf.mxu0
  %v1477 = vadd.f32 %v1439, %v1476
  %v1478 = vpop.f32.mrf.mxu0
  %v1479 = vadd.f32 %v1439, %v1478
  %1480 = vmatmul.bf16.gmra.mxu0 %v1460
  %v1481 = vpop.f32.mrf.mxu0
  %v1482 = vadd.f32 %v1439, %v1481
  %v1483 = vpop.f32.mrf.mxu0
  %v1484 = vadd.f32 %v1439, %v1483
  %1485 = vdwg.mxu0
  %v1486 = vmul.f32 %v1472, %v1472
  %v1487 = vmul.f32 %v1474, %v1474
  %v1488 = vmul.f32 %v1477, %v1477
  %v1489 = vmul.f32 %v1479, %v1479
  %v1490 = vmul.f32 %v1482, %v1482
  %v1491 = vmul.f32 %v1484, %v1484
  %v1492 = vmul.f32 %v1472, %v1486
  %v1493 = vmul.f32 %v1474, %v1487
  %v1494 = vmul.f32 %v1477, %v1488
  %v1495 = vmul.f32 %v1479, %v1489
  %v1496 = vmul.f32 %v1482, %v1490
  %v1497 = vmul.f32 %v1484, %v1491
  %v1498 = vmul.f32 %v1492, 0.044715
  %v1499 = vmul.f32 %v1493, 0.044715
  %v1500 = vmul.f32 %v1494, 0.044715
  %v1501 = vmul.f32 %v1495, 0.044715
  %v1502 = vmul.f32 %v1496, 0.044715
  %v1503 = vmul.f32 %v1497, 0.044715
  %v1504 = vadd.f32 %v1472, %v1498
  %v1505 = vadd.f32 %v1474, %v1499
  %v1506 = vadd.f32 %v1477, %v1500
  %v1507 = vadd.f32 %v1479, %v1501
  %v1508 = vadd.f32 %v1482, %v1502
  %v1509 = vadd.f32 %v1484, %v1503
  %v1510 = vmul.f32 %v1504, 0.7978846
  %v1511 = vmul.f32 %v1505, 0.7978846
  %v1512 = vmul.f32 %v1506, 0.7978846
  %v1513 = vmul.f32 %v1507, 0.7978846
  %v1514 = vmul.f32 %v1508, 0.7978846
  %v1515 = vmul.f32 %v1509, 0.7978846
  %v1516 = vtanh.pop %v1510
  %v1517 = vtanh.pop %v1511
  %v1518 = vtanh.pop %v1512
  %v1519 = vtanh.pop %v1513
  %v1520 = vtanh.pop %v1514
  %v1521 = vtanh.pop %v1515
  %v1522 = vadd.f32 %v1516, 1.0
  %v1523 = vadd.f32 %v1517, 1.0
  %v1524 = vadd.f32 %v1518, 1.0
  %v1525 = vadd.f32 %v1519, 1.0
  %v1526 = vadd.f32 %v1520, 1.0
  %v1527 = vadd.f32 %v1521, 1.0
  %v1528 = vmul.f32 %v1522, 0.5
  %v1529 = vmul.f32 %v1523, 0.5
  %v1530 = vmul.f32 %v1524, 0.5
  %v1531 = vmul.f32 %v1525, 0.5
  %v1532 = vmul.f32 %v1526, 0.5
  %v1533 = vmul.f32 %v1527, 0.5
  %v1534 = vmul.f32 %v1472, %v1528
  %v1535 = vmul.f32 %v1474, %v1529
  %v1536 = vmul.f32 %v1477, %v1530
  %v1537 = vmul.f32 %v1479, %v1531
  %v1538 = vmul.f32 %v1482, %v1532
  %v1539 = vmul.f32 %v1484, %v1533
  %v1540 = vpack.c.bf16 %v1535, %v1534
  %v1541 = vpack.c.bf16 %v1537, %v1536
  %v1542 = vpack.c.bf16 %v1539, %v1538
  %v1543 = vld [vmem:[%s18] sm:$0xf]
  %v1544 = vld [vmem:[%s18 + $0x4] sm:$0xf]
  %v1545 = vld [vmem:[%s18 + $0x8] sm:$0xf]
  %v1546 = vld [vmem:[%s18 + $0xc] sm:$0xf]
  %v1547 = vld [vmem:[%s18 + $0x10] sm:$0xf]
  %v1548 = vld [vmem:[%s18 + $0x14] sm:$0xf]
  %v1549 = vld [vmem:[%s18 + $0x18] sm:$0xf]
  %v1550 = vld [vmem:[%s18 + $0x1c] sm:$0xf]
  %v1551 = vld [vmem:[%s18 + $0x20] sm:$0xf]
  %v1552 = vld [vmem:[%s18 + $0x24] sm:$0xf]
  %v1553 = vld [vmem:[%s18 + $0x28] sm:$0xf]
  %v1554 = vld [vmem:[%s18 + $0x2c] sm:$0xf]
  %v1555 = vld [vmem:[%s18 + $0x30] sm:$0xf]
  %v1556 = vld [vmem:[%s18 + $0x34] sm:$0xf]
  %v1557 = vld [vmem:[%s18 + $0x38] sm:$0xf]
  %v1558 = vld [vmem:[%s18 + $0x3c] sm:$0xf]
  %v1559 = vld [vmem:[%s19] sm:$0x1]
  %v1561 = vperm.slane %v1559, 0
  %v1579 = vunpack.c.l.b16 %v1543
  %v1580 = vunpack.c.l.b16 %v1544
  %v1581 = vunpack.c.l.b16 %v1545
  %v1582 = vunpack.c.l.b16 %v1546
  %v1583 = vunpack.c.l.b16 %v1547
  %v1584 = vunpack.c.l.b16 %v1548
  %v1585 = vunpack.c.l.b16 %v1549
  %v1586 = vunpack.c.l.b16 %v1550
  %v1587 = vunpack.c.l.b16 %v1551
  %v1588 = vunpack.c.l.b16 %v1552
  %v1589 = vunpack.c.l.b16 %v1553
  %v1590 = vunpack.c.l.b16 %v1554
  %v1591 = vunpack.c.l.b16 %v1555
  %v1592 = vunpack.c.l.b16 %v1556
  %v1593 = vunpack.c.l.b16 %v1557
  %v1594 = vunpack.c.l.b16 %v1558
  %v1595 = vpack.c.b16 %v1580, %v1579
  %v1596 = vpack.c.b16 %v1582, %v1581
  %v1597 = vpack.c.b16 %v1584, %v1583
  %v1598 = vpack.c.b16 %v1586, %v1585
  %v1599 = vpack.c.b16 %v1588, %v1587
  %v1600 = vpack.c.b16 %v1590, %v1589
  %v1601 = vpack.c.b16 %v1592, %v1591
  %v1602 = vpack.c.b16 %v1594, %v1593
  %1611 = vmatpush.bf16.msra.mxu0 %v1602
  %1612 = vmatpush.bf16.msra.mxu0 %v1601
  %1613 = vmatpush.bf16.msra.mxu0 %v1600
  %1614 = vmatpush.bf16.msra.mxu0 %v1599
  %1615 = vmatpush.bf16.msra.mxu0 %v1598
  %1616 = vmatpush.bf16.msra.mxu0 %v1597
  %1617 = vmatpush.bf16.msra.mxu0 %v1596
  %1618 = vmatpush.bf16.msra.mxu0 %v1595
  %1619 = vmatmul.bf16.gmra.mxu0 %v1540
  %v1620 = vpop.f32.mrf.mxu0
  %v1621 = vadd.f32 %v1561, %v1620
  %v1622 = vpop.f32.mrf.mxu0
  %v1623 = vadd.f32 %v1561, %v1622
  %1624 = vmatmul.bf16.gmra.mxu0 %v1541
  %v1625 = vpop.f32.mrf.mxu0
  %v1626 = vadd.f32 %v1561, %v1625
  %v1627 = vpop.f32.mrf.mxu0
  %v1628 = vadd.f32 %v1561, %v1627
  %1629 = vmatmul.bf16.gmra.mxu0 %v1542
  %v1630 = vpop.f32.mrf.mxu0
  %v1631 = vadd.f32 %v1561, %v1630
  %v1632 = vpop.f32.mrf.mxu0
  %v1633 = vadd.f32 %v1561, %v1632
  %1634 = vdwg.mxu0
  %v1635 = vadd.f32 %v1272, %v1621
  %v1636 = vadd.f32 %v1273, %v1623
  %v1637 = vadd.f32 %v1274, %v1626
  %v1638 = vadd.f32 %v1275, %v1628
  %v1639 = vadd.f32 %v1276, %v1631
  %v1640 = vadd.f32 %v1277, %v1633
  %s1641 = scalar_lea.vmem %s4, 1
  %v1642 = vld [vmem:[%s1641] sm:$0x1]
  %s1643 = scalar_lea.vmem %s5, 1
  %v1644 = vld [vmem:[%s1643] sm:$0x1]
  %v1645 = vsel %vm163, %v1635, 0.0
  %1646 = vadd.xlane.f32.xlu0 %v1645
  %v1647 = vpop.xlane.xlu0 %1646
  %v1648 = vsel %vm163, %v1636, 0.0
  %1649 = vadd.xlane.f32.xlu0 %v1648
  %v1650 = vpop.xlane.xlu0 %1649
  %v1651 = vsel %vm163, %v1637, 0.0
  %1652 = vadd.xlane.f32.xlu0 %v1651
  %v1653 = vpop.xlane.xlu0 %1652
  %v1654 = vsel %vm163, %v1638, 0.0
  %1655 = vadd.xlane.f32.xlu0 %v1654
  %v1656 = vpop.xlane.xlu0 %1655
  %v1657 = vsel %vm163, %v1639, 0.0
  %1658 = vadd.xlane.f32.xlu0 %v1657
  %v1659 = vpop.xlane.xlu0 %1658
  %v1660 = vsel %vm163, %v1640, 0.0
  %1661 = vadd.xlane.f32.xlu0 %v1660
  %v1662 = vpop.xlane.xlu0 %1661
  %v1663 = vmul.f32 %v1647, %v188
  %v1664 = vmul.f32 %v1650, %v188
  %v1665 = vmul.f32 %v1653, %v188
  %v1666 = vmul.f32 %v1656, %v188
  %v1667 = vmul.f32 %v1659, %v188
  %v1668 = vmul.f32 %v1662, %v188
  %v1669 = vsub.f32 %v1635, %v1663
  %v1670 = vsub.f32 %v1636, %v1664
  %v1671 = vsub.f32 %v1637, %v1665
  %v1672 = vsub.f32 %v1638, %v1666
  %v1673 = vsub.f32 %v1639, %v1667
  %v1674 = vsub.f32 %v1640, %v1668
  %v1675 = vmul.f32 %v1669, %v1669
  %v1676 = vmul.f32 %v1670, %v1670
  %v1677 = vmul.f32 %v1671, %v1671
  %v1678 = vmul.f32 %v1672, %v1672
  %v1679 = vmul.f32 %v1673, %v1673
  %v1680 = vmul.f32 %v1674, %v1674
  %v1681 = vsel %vm163, %v1675, 0.0
  %1682 = vadd.xlane.f32.xlu0 %v1681
  %v1683 = vpop.xlane.xlu0 %1682
  %v1684 = vsel %vm163, %v1676, 0.0
  %1685 = vadd.xlane.f32.xlu0 %v1684
  %v1686 = vpop.xlane.xlu0 %1685
  %v1687 = vsel %vm163, %v1677, 0.0
  %1688 = vadd.xlane.f32.xlu0 %v1687
  %v1689 = vpop.xlane.xlu0 %1688
  %v1690 = vsel %vm163, %v1678, 0.0
  %1691 = vadd.xlane.f32.xlu0 %v1690
  %v1692 = vpop.xlane.xlu0 %1691
  %v1693 = vsel %vm163, %v1679, 0.0
  %1694 = vadd.xlane.f32.xlu0 %v1693
  %v1695 = vpop.xlane.xlu0 %1694
  %v1696 = vsel %vm163, %v1680, 0.0
  %1697 = vadd.xlane.f32.xlu0 %v1696
  %v1698 = vpop.xlane.xlu0 %1697
  %v1699 = vmul.f32 %v1683, %v188
  %v1700 = vmul.f32 %v1686, %v188
  %v1701 = vmul.f32 %v1689, %v188
  %v1702 = vmul.f32 %v1692, %v188
  %v1703 = vmul.f32 %v1695, %v188
  %v1704 = vmul.f32 %v1698, %v188
  %v1705 = vadd.f32 %v1699, 1e-06
  %v1706 = vadd.f32 %v1700, 1e-06
  %v1707 = vadd.f32 %v1701, 1e-06
  %v1708 = vadd.f32 %v1702, 1e-06
  %v1709 = vadd.f32 %v1703, 1e-06
  %v1710 = vadd.f32 %v1704, 1e-06
  %v1711 = vrsqrt.pop %v1705
  %v1712 = vmul.f32 %v1711, %v1705
  %v1713 = vmul.f32 %v1712, %v1711
  %v1714 = vmul.f32 0.5, %v1713
  %v1715 = vsub.f32 1.5, %v1714
  %v1716 = vmul.f32 %v1711, %v1715
  %vm1717 = vweird.f32 %v1705
  %vm1718 = vweird.f32 %v1711
  %vm1719 = vmor %vm1717, %vm1718
  %v1720 = vsel %vm1719, %v1711, %v1716
  %v1721 = vrsqrt.pop %v1706
  %v1722 = vmul.f32 %v1721, %v1706
  %v1723 = vmul.f32 %v1722, %v1721
  %v1724 = vmul.f32 0.5, %v1723
  %v1725 = vsub.f32 1.5, %v1724
  %v1726 = vmul.f32 %v1721, %v1725
  %vm1727 = vweird.f32 %v1706
  %vm1728 = vweird.f32 %v1721
  %vm1729 = vmor %vm1727, %vm1728
  %v1730 = vsel %vm1729, %v1721, %v1726
  %v1731 = vrsqrt.pop %v1707
  %v1732 = vmul.f32 %v1731, %v1707
  %v1733 = vmul.f32 %v1732, %v1731
  %v1734 = vmul.f32 0.5, %v1733
  %v1735 = vsub.f32 1.5, %v1734
  %v1736 = vmul.f32 %v1731, %v1735
  %vm1737 = vweird.f32 %v1707
  %vm1738 = vweird.f32 %v1731
  %vm1739 = vmor %vm1737, %vm1738
  %v1740 = vsel %vm1739, %v1731, %v1736
  %v1741 = vrsqrt.pop %v1708
  %v1742 = vmul.f32 %v1741, %v1708
  %v1743 = vmul.f32 %v1742, %v1741
  %v1744 = vmul.f32 0.5, %v1743
  %v1745 = vsub.f32 1.5, %v1744
  %v1746 = vmul.f32 %v1741, %v1745
  %vm1747 = vweird.f32 %v1708
  %vm1748 = vweird.f32 %v1741
  %vm1749 = vmor %vm1747, %vm1748
  %v1750 = vsel %vm1749, %v1741, %v1746
  %v1751 = vrsqrt.pop %v1709
  %v1752 = vmul.f32 %v1751, %v1709
  %v1753 = vmul.f32 %v1752, %v1751
  %v1754 = vmul.f32 0.5, %v1753
  %v1755 = vsub.f32 1.5, %v1754
  %v1756 = vmul.f32 %v1751, %v1755
  %vm1757 = vweird.f32 %v1709
  %vm1758 = vweird.f32 %v1751
  %vm1759 = vmor %vm1757, %vm1758
  %v1760 = vsel %vm1759, %v1751, %v1756
  %v1761 = vrsqrt.pop %v1710
  %v1762 = vmul.f32 %v1761, %v1710
  %v1763 = vmul.f32 %v1762, %v1761
  %v1764 = vmul.f32 0.5, %v1763
  %v1765 = vsub.f32 1.5, %v1764
  %v1766 = vmul.f32 %v1761, %v1765
  %vm1767 = vweird.f32 %v1710
  %vm1768 = vweird.f32 %v1761
  %vm1769 = vmor %vm1767, %vm1768
  %v1770 = vsel %vm1769, %v1761, %v1766
  %v1771 = vmul.f32 %v1669, %v1720
  %v1772 = vmul.f32 %v1670, %v1730
  %v1773 = vmul.f32 %v1671, %v1740
  %v1774 = vmul.f32 %v1672, %v1750
  %v1775 = vmul.f32 %v1673, %v1760
  %v1776 = vmul.f32 %v1674, %v1770
  %v1778 = vperm.slane %v1642, 0
  %v1780 = vmul.f32 %v1771, %v1778
  %v1781 = vmul.f32 %v1772, %v1778
  %v1782 = vmul.f32 %v1773, %v1778
  %v1783 = vmul.f32 %v1774, %v1778
  %v1784 = vmul.f32 %v1775, %v1778
  %v1785 = vmul.f32 %v1776, %v1778
  %v1787 = vperm.slane %v1644, 0
  %v1789 = vadd.f32 %v1780, %v1787
  %v1790 = vadd.f32 %v1781, %v1787
  %v1791 = vadd.f32 %v1782, %v1787
  %v1792 = vadd.f32 %v1783, %v1787
  %v1793 = vadd.f32 %v1784, %v1787
  %v1794 = vadd.f32 %v1785, %v1787
  %v1795 = vpack.c.bf16 %v1790, %v1789
  %v1796 = vpack.c.bf16 %v1792, %v1791
  %v1797 = vpack.c.bf16 %v1794, %v1793
  %s1798 = scalar_lea.vmem %s6, 32
  %v1799 = vld [vmem:[%s1798] sm:$0xf]
  %v1800 = vld [vmem:[%s1798 + $0x4] sm:$0xf]
  %v1801 = vld [vmem:[%s1798 + $0x8] sm:$0xf]
  %v1802 = vld [vmem:[%s1798 + $0xc] sm:$0xf]
  %s1803 = scalar_lea.vmem %s7, 2
  %v1804 = vld [vmem:[%s1803] sm:$0x1]
  %v1806 = vperm.slane %v1804, 0
  %v1812 = vunpack.c.l.b16 %v1799
  %v1813 = vunpack.c.l.b16 %v1800
  %v1814 = vunpack.c.l.b16 %v1801
  %v1815 = vunpack.c.l.b16 %v1802
  %v1816 = vpack.c.b16 %v1813, %v1812
  %v1817 = vpack.c.b16 %v1815, %v1814
  %v1821 = vsel %vm163, %v1795, 0
  %v1824 = vsel %vm163, %v1796, 0
  %v1827 = vsel %vm163, %v1797, 0
  %1829 = vmatpush.bf16.msra.mxu0 0
  %1830 = vmatpush.bf16.msra.mxu0 0
  %1831 = vmatpush.bf16.msra.mxu0 0
  %1832 = vmatpush.bf16.msra.mxu0 0
  %1833 = vmatpush.bf16.msra.mxu0 0
  %1834 = vmatpush.bf16.msra.mxu0 0
  %1835 = vmatpush.bf16.msra.mxu0 %v1817
  %1836 = vmatpush.bf16.msra.mxu0 %v1816
  %1837 = vmatmul.bf16.gmra.mxu0 %v1821
  %v1838 = vpop.f32.mrf.mxu0
  %v1839 = vadd.f32 %v1806, %v1838
  %v1840 = vpop.f32.mrf.mxu0
  %v1841 = vadd.f32 %v1806, %v1840
  %1842 = vmatmul.bf16.gmra.mxu0 %v1824
  %v1843 = vpop.f32.mrf.mxu0
  %v1844 = vadd.f32 %v1806, %v1843
  %v1845 = vpop.f32.mrf.mxu0
  %v1846 = vadd.f32 %v1806, %v1845
  %1847 = vmatmul.bf16.gmra.mxu0 %v1827
  %v1848 = vpop.f32.mrf.mxu0
  %v1849 = vadd.f32 %v1806, %v1848
  %v1850 = vpop.f32.mrf.mxu0
  %v1851 = vadd.f32 %v1806, %v1850
  %1852 = vdwg.mxu0
  %s1853 = scalar_lea.vmem %s8, 32
  %v1854 = vld [vmem:[%s1853] sm:$0xf]
  %v1855 = vld [vmem:[%s1853 + $0x4] sm:$0xf]
  %v1856 = vld [vmem:[%s1853 + $0x8] sm:$0xf]
  %v1857 = vld [vmem:[%s1853 + $0xc] sm:$0xf]
  %s1858 = scalar_lea.vmem %s9, 2
  %v1859 = vld [vmem:[%s1858] sm:$0x1]
  %v1861 = vperm.slane %v1859, 0
  %v1867 = vunpack.c.l.b16 %v1854
  %v1868 = vunpack.c.l.b16 %v1855
  %v1869 = vunpack.c.l.b16 %v1856
  %v1870 = vunpack.c.l.b16 %v1857
  %v1871 = vpack.c.b16 %v1868, %v1867
  %v1872 = vpack.c.b16 %v1870, %v1869
  %1875 = vmatpush.bf16.msra.mxu0 0
  %1876 = vmatpush.bf16.msra.mxu0 0
  %1877 = vmatpush.bf16.msra.mxu0 0
  %1878 = vmatpush.bf16.msra.mxu0 0
  %1879 = vmatpush.bf16.msra.mxu0 0
  %1880 = vmatpush.bf16.msra.mxu0 0
  %1881 = vmatpush.bf16.msra.mxu0 %v1872
  %1882 = vmatpush.bf16.msra.mxu0 %v1871
  %1883 = vmatmul.bf16.gmra.mxu0 %v1821
  %v1884 = vpop.f32.mrf.mxu0
  %v1885 = vadd.f32 %v1861, %v1884
  %v1886 = vpop.f32.mrf.mxu0
  %v1887 = vadd.f32 %v1861, %v1886
  %1888 = vmatmul.bf16.gmra.mxu0 %v1824
  %v1889 = vpop.f32.mrf.mxu0
  %v1890 = vadd.f32 %v1861, %v1889
  %v1891 = vpop.f32.mrf.mxu0
  %v1892 = vadd.f32 %v1861, %v1891
  %1893 = vmatmul.bf16.gmra.mxu0 %v1827
  %v1894 = vpop.f32.mrf.mxu0
  %v1895 = vadd.f32 %v1861, %v1894
  %v1896 = vpop.f32.mrf.mxu0
  %v1897 = vadd.f32 %v1861, %v1896
  %1898 = vdwg.mxu0
  %s1899 = scalar_lea.vmem %s10, 32
  %v1900 = vld [vmem:[%s1899] sm:$0xf]
  %v1901 = vld [vmem:[%s1899 + $0x4] sm:$0xf]
  %v1902 = vld [vmem:[%s1899 + $0x8] sm:$0xf]
  %v1903 = vld [vmem:[%s1899 + $0xc] sm:$0xf]
  %s1904 = scalar_lea.vmem %s11, 2
  %v1905 = vld [vmem:[%s1904] sm:$0x1]
  %v1907 = vperm.slane %v1905, 0
  %v1913 = vunpack.c.l.b16 %v1900
  %v1914 = vunpack.c.l.b16 %v1901
  %v1915 = vunpack.c.l.b16 %v1902
  %v1916 = vunpack.c.l.b16 %v1903
  %v1917 = vpack.c.b16 %v1914, %v1913
  %v1918 = vpack.c.b16 %v1916, %v1915
  %1921 = vmatpush.bf16.msra.mxu0 0
  %1922 = vmatpush.bf16.msra.mxu0 0
  %1923 = vmatpush.bf16.msra.mxu0 0
  %1924 = vmatpush.bf16.msra.mxu0 0
  %1925 = vmatpush.bf16.msra.mxu0 0
  %1926 = vmatpush.bf16.msra.mxu0 0
  %1927 = vmatpush.bf16.msra.mxu0 %v1918
  %1928 = vmatpush.bf16.msra.mxu0 %v1917
  %1929 = vmatmul.bf16.gmra.mxu0 %v1821
  %v1930 = vpop.f32.mrf.mxu0
  %v1931 = vadd.f32 %v1907, %v1930
  %v1932 = vpop.f32.mrf.mxu0
  %v1933 = vadd.f32 %v1907, %v1932
  %1934 = vmatmul.bf16.gmra.mxu0 %v1824
  %v1935 = vpop.f32.mrf.mxu0
  %v1936 = vadd.f32 %v1907, %v1935
  %v1937 = vpop.f32.mrf.mxu0
  %v1938 = vadd.f32 %v1907, %v1937
  %1939 = vmatmul.bf16.gmra.mxu0 %v1827
  %v1940 = vpop.f32.mrf.mxu0
  %v1941 = vadd.f32 %v1907, %v1940
  %v1942 = vpop.f32.mrf.mxu0
  %v1943 = vadd.f32 %v1907, %v1942
  %1944 = vdwg.mxu0
  %v1945 = vpack.c.bf16 %v1839, %v1839
  %v1946 = vpack.c.bf16 %v1841, %v1841
  %v1947 = vpack.c.bf16 %v1844, %v1844
  %v1948 = vpack.c.bf16 %v1846, %v1846
  %v1949 = vpack.c.bf16 %v1849, %v1849
  %v1950 = vpack.c.bf16 %v1851, %v1851
  %v1951 = vpack.c.bf16 %v1885, %v1885
  %v1952 = vpack.c.bf16 %v1887, %v1887
  %v1953 = vpack.c.bf16 %v1890, %v1890
  %v1954 = vpack.c.bf16 %v1892, %v1892
  %v1955 = vpack.c.bf16 %v1895, %v1895
  %v1956 = vpack.c.bf16 %v1897, %v1897
  %v1957 = vpack.c.bf16 %v1931, %v1931
  %v1958 = vpack.c.bf16 %v1933, %v1933
  %v1959 = vpack.c.bf16 %v1936, %v1936
  %v1960 = vpack.c.bf16 %v1938, %v1938
  %v1961 = vpack.c.bf16 %v1941, %v1941
  %v1962 = vpack.c.bf16 %v1943, %v1943
  %v1966 = vunpack.c.l.b16 %v1945
  %v1967 = vunpack.c.l.b16 %v1946
  %v1968 = vunpack.c.l.b16 %v1947
  %v1969 = vpack.c.b16 %v1967, %v1966
  %v1970 = vpack.c.b16 %v1968, %v1968
  %v1974 = vunpack.c.l.b16 %v1951
  %v1975 = vunpack.c.l.b16 %v1952
  %v1976 = vunpack.c.l.b16 %v1953
  %v1977 = vpack.c.b16 %v1975, %v1974
  %v1978 = vpack.c.b16 %v1976, %v1976
  %v1980 = vsel %vm499, %v1969, 0
  %v1983 = vsel %vm499, %v1970, 0
  %v1986 = vsel %vm499, %v1977, 0
  %v1989 = vsel %vm499, %v1978, 0
  %1991 = vmatpush.bf16.xpose.msra.mxu0 0
  %1992 = vmatpush.bf16.xpose.msra.mxu0 0
  %1993 = vmatpush.bf16.xpose.msra.mxu0 0
  %1994 = vmatpush.bf16.xpose.msra.mxu0 0
  %1995 = vmatpush.bf16.xpose.msra.mxu0 0
  %1996 = vmatpush.bf16.xpose.msra.mxu0 0
  %1997 = vmatpush.bf16.xpose.msra.mxu0 %v1989
  %1998 = vmatpush.bf16.xpose.msra.mxu0 %v1986
  %1999 = vmatmul.bf16.gmra.mxu0 %v1980
  %v2000 = vpop.f32.mrf.mxu0
  %v2001 = vadd.f32 0.0, %v2000
  %v2002 = vpop.f32.mrf.mxu0
  %v2003 = vadd.f32 0.0, %v2002
  %2004 = vmatmul.bf16.gmra.mxu0 %v1983
  %v2005 = vpop.f32.mrf.mxu0
  %v2006 = vadd.f32 0.0, %v2005
  %v2007 = vpop.f32.mrf.mxu0
  %2008 = vdwg.mxu0
  %v2012 = vunpack.c.l.b16 %v1948
  %v2013 = vunpack.c.l.b16 %v1949
  %v2014 = vunpack.c.l.b16 %v1950
  %v2015 = vpack.c.b16 %v2013, %v2012
  %v2016 = vpack.c.b16 %v2014, %v2014
  %v2020 = vunpack.c.l.b16 %v1954
  %v2021 = vunpack.c.l.b16 %v1955
  %v2022 = vunpack.c.l.b16 %v1956
  %v2023 = vpack.c.b16 %v2021, %v2020
  %v2024 = vpack.c.b16 %v2022, %v2022
  %v2026 = vsel %vm499, %v2015, 0
  %v2029 = vsel %vm499, %v2016, 0
  %v2032 = vsel %vm499, %v2023, 0
  %v2035 = vsel %vm499, %v2024, 0
  %2037 = vmatpush.bf16.xpose.msra.mxu0 0
  %2038 = vmatpush.bf16.xpose.msra.mxu0 0
  %2039 = vmatpush.bf16.xpose.msra.mxu0 0
  %2040 = vmatpush.bf16.xpose.msra.mxu0 0
  %2041 = vmatpush.bf16.xpose.msra.mxu0 0
  %2042 = vmatpush.bf16.xpose.msra.mxu0 0
  %2043 = vmatpush.bf16.xpose.msra.mxu0 %v2035
  %2044 = vmatpush.bf16.xpose.msra.mxu0 %v2032
  %2045 = vmatmul.bf16.gmra.mxu0 %v2026
  %v2046 = vpop.f32.mrf.mxu0
  %v2047 = vadd.f32 0.0, %v2046
  %v2048 = vpop.f32.mrf.mxu0
  %v2049 = vadd.f32 0.0, %v2048
  %2050 = vmatmul.bf16.gmra.mxu0 %v2029
  %v2051 = vpop.f32.mrf.mxu0
  %v2052 = vadd.f32 0.0, %v2051
  %v2053 = vpop.f32.mrf.mxu0
  %2054 = vdwg.mxu0
  %v2055 = vmul.f32 %v2001, 0.25
  %v2056 = vmul.f32 %v2003, 0.25
  %v2057 = vmul.f32 %v2006, 0.25
  %v2058 = vmul.f32 %v2047, 0.25
  %v2059 = vmul.f32 %v2049, 0.25
  %v2060 = vmul.f32 %v2052, 0.25
  %v2061 = vadd.f32 %v2055, %v583
  %v2062 = vadd.f32 %v2056, %v583
  %v2063 = vadd.f32 %v2057, %v583
  %v2064 = vadd.f32 %v2058, %v583
  %v2065 = vadd.f32 %v2059, %v583
  %v2066 = vadd.f32 %v2060, %v583
  %v2067 = vsel %vm591, %v2061, -inf
  %2068 = vmax.xlane.f32.xlu0 %v2067
  %v2069 = vpop.xlane.xlu0 %2068
  %v2070 = vsel %vm591, %v2062, -inf
  %2071 = vmax.xlane.f32.xlu0 %v2070
  %v2072 = vpop.xlane.xlu0 %2071
  %v2073 = vsel %vm591, %v2063, -inf
  %2074 = vmax.xlane.f32.xlu0 %v2073
  %v2075 = vpop.xlane.xlu0 %2074
  %v2076 = vsel %vm591, %v2064, -inf
  %2077 = vmax.xlane.f32.xlu0 %v2076
  %v2078 = vpop.xlane.xlu0 %2077
  %v2079 = vsel %vm591, %v2065, -inf
  %2080 = vmax.xlane.f32.xlu0 %v2079
  %v2081 = vpop.xlane.xlu0 %2080
  %v2082 = vsel %vm591, %v2066, -inf
  %2083 = vmax.xlane.f32.xlu0 %v2082
  %v2084 = vpop.xlane.xlu0 %2083
  %v2085 = vsub.f32 %v2061, %v2069
  %v2086 = vsub.f32 %v2062, %v2072
  %v2087 = vsub.f32 %v2063, %v2075
  %v2088 = vsub.f32 %v2064, %v2078
  %v2089 = vsub.f32 %v2065, %v2081
  %v2090 = vsub.f32 %v2066, %v2084
  %v2091 = vmul.f32 %v2085, 1.442695
  %v2092 = vpow.pop %v2091
  %v2093 = vmul.f32 %v2086, 1.442695
  %v2094 = vpow.pop %v2093
  %v2095 = vmul.f32 %v2087, 1.442695
  %v2096 = vpow.pop %v2095
  %v2097 = vmul.f32 %v2088, 1.442695
  %v2098 = vpow.pop %v2097
  %v2099 = vmul.f32 %v2089, 1.442695
  %v2100 = vpow.pop %v2099
  %v2101 = vmul.f32 %v2090, 1.442695
  %v2102 = vpow.pop %v2101
  %v2103 = vsel %vm591, %v2092, 0.0
  %2104 = vadd.xlane.f32.xlu0 %v2103
  %v2105 = vpop.xlane.xlu0 %2104
  %v2106 = vsel %vm591, %v2094, 0.0
  %2107 = vadd.xlane.f32.xlu0 %v2106
  %v2108 = vpop.xlane.xlu0 %2107
  %v2109 = vsel %vm591, %v2096, 0.0
  %2110 = vadd.xlane.f32.xlu0 %v2109
  %v2111 = vpop.xlane.xlu0 %2110
  %v2112 = vsel %vm591, %v2098, 0.0
  %2113 = vadd.xlane.f32.xlu0 %v2112
  %v2114 = vpop.xlane.xlu0 %2113
  %v2115 = vsel %vm591, %v2100, 0.0
  %2116 = vadd.xlane.f32.xlu0 %v2115
  %v2117 = vpop.xlane.xlu0 %2116
  %v2118 = vsel %vm591, %v2102, 0.0
  %2119 = vadd.xlane.f32.xlu0 %v2118
  %v2120 = vpop.xlane.xlu0 %2119
  %v2121 = vrcp.pop %v2105
  %v2122 = vrcp.pop %v2108
  %v2123 = vrcp.pop %v2111
  %v2124 = vrcp.pop %v2114
  %v2125 = vrcp.pop %v2117
  %v2126 = vrcp.pop %v2120
  %v2127 = vmul.f32 %v2092, %v2121
  %v2128 = vmul.f32 %v2094, %v2122
  %v2129 = vmul.f32 %v2096, %v2123
  %v2130 = vmul.f32 %v2098, %v2124
  %v2131 = vmul.f32 %v2100, %v2125
  %v2132 = vmul.f32 %v2102, %v2126
  %v2133 = vpack.c.bf16 %v2127, %v2127
  %v2134 = vpack.c.bf16 %v2128, %v2128
  %v2135 = vpack.c.bf16 %v2129, %v2129
  %v2136 = vpack.c.bf16 %v2130, %v2130
  %v2137 = vpack.c.bf16 %v2131, %v2131
  %v2138 = vpack.c.bf16 %v2132, %v2132
  %v2142 = vunpack.c.l.b16 %v2133
  %v2143 = vunpack.c.l.b16 %v2134
  %v2144 = vunpack.c.l.b16 %v2135
  %v2145 = vpack.c.b16 %v2143, %v2142
  %v2146 = vpack.c.b16 %v2144, %v2144
  %v2150 = vunpack.c.l.b16 %v1957
  %v2151 = vunpack.c.l.b16 %v1958
  %v2152 = vunpack.c.l.b16 %v1959
  %v2153 = vpack.c.b16 %v2151, %v2150
  %v2154 = vpack.c.b16 %v2152, %v2152
  %v2157 = vsel %vm591, %v2145, 0
  %v2160 = vsel %vm591, %v2146, 0
  %v2163 = vsel %vm687, %v2154, 0
  %2165 = vmatpush.bf16.msra.mxu0 0
  %2166 = vmatpush.bf16.msra.mxu0 0
  %2167 = vmatpush.bf16.msra.mxu0 0
  %2168 = vmatpush.bf16.msra.mxu0 0
  %2169 = vmatpush.bf16.msra.mxu0 0
  %2170 = vmatpush.bf16.msra.mxu0 0
  %2171 = vmatpush.bf16.msra.mxu0 %v2163
  %2172 = vmatpush.bf16.msra.mxu0 %v2153
  %2173 = vmatmul.bf16.gmra.mxu0 %v2157
  %v2174 = vpop.f32.mrf.mxu0
  %v2175 = vadd.f32 0.0, %v2174
  %v2176 = vpop.f32.mrf.mxu0
  %v2177 = vadd.f32 0.0, %v2176
  %2178 = vmatmul.bf16.gmra.mxu0 %v2160
  %v2179 = vpop.f32.mrf.mxu0
  %v2180 = vadd.f32 0.0, %v2179
  %v2181 = vpop.f32.mrf.mxu0
  %2182 = vdwg.mxu0
  %v2186 = vunpack.c.l.b16 %v2136
  %v2187 = vunpack.c.l.b16 %v2137
  %v2188 = vunpack.c.l.b16 %v2138
  %v2189 = vpack.c.b16 %v2187, %v2186
  %v2190 = vpack.c.b16 %v2188, %v2188
  %v2194 = vunpack.c.l.b16 %v1960
  %v2195 = vunpack.c.l.b16 %v1961
  %v2196 = vunpack.c.l.b16 %v1962
  %v2197 = vpack.c.b16 %v2195, %v2194
  %v2198 = vpack.c.b16 %v2196, %v2196
  %v2201 = vsel %vm591, %v2189, 0
  %v2204 = vsel %vm591, %v2190, 0
  %v2207 = vsel %vm687, %v2198, 0
  %2209 = vmatpush.bf16.msra.mxu0 0
  %2210 = vmatpush.bf16.msra.mxu0 0
  %2211 = vmatpush.bf16.msra.mxu0 0
  %2212 = vmatpush.bf16.msra.mxu0 0
  %2213 = vmatpush.bf16.msra.mxu0 0
  %2214 = vmatpush.bf16.msra.mxu0 0
  %2215 = vmatpush.bf16.msra.mxu0 %v2207
  %2216 = vmatpush.bf16.msra.mxu0 %v2197
  %2217 = vmatmul.bf16.gmra.mxu0 %v2201
  %v2218 = vpop.f32.mrf.mxu0
  %v2219 = vadd.f32 0.0, %v2218
  %v2220 = vpop.f32.mrf.mxu0
  %v2221 = vadd.f32 0.0, %v2220
  %2222 = vmatmul.bf16.gmra.mxu0 %v2204
  %v2223 = vpop.f32.mrf.mxu0
  %v2224 = vadd.f32 0.0, %v2223
  %v2225 = vpop.f32.mrf.mxu0
  %2226 = vdwg.mxu0
  %v2227 = vpack.c.bf16 %v2177, %v2175
  %v2228 = vpack.c.bf16 %v2219, %v2180
  %v2229 = vpack.c.bf16 %v2224, %v2221
  %s2230 = scalar_lea.vmem %s12, 16
  %v2231 = vld [vmem:[%s2230] sm:$0xf]
  %v2232 = vld [vmem:[%s2230 + $0x4] sm:$0xf]
  %s2233 = scalar_lea.vmem %s6, 48
  %v2234 = vld [vmem:[%s2233] sm:$0xf]
  %v2235 = vld [vmem:[%s2233 + $0x4] sm:$0xf]
  %v2236 = vld [vmem:[%s2233 + $0x8] sm:$0xf]
  %v2237 = vld [vmem:[%s2233 + $0xc] sm:$0xf]
  %s2238 = scalar_lea.vmem %s7, 3
  %v2239 = vld [vmem:[%s2238] sm:$0x1]
  %v2241 = vperm.slane %v2239, 0
  %v2247 = vunpack.c.l.b16 %v2234
  %v2248 = vunpack.c.l.b16 %v2235
  %v2249 = vunpack.c.l.b16 %v2236
  %v2250 = vunpack.c.l.b16 %v2237
  %v2251 = vpack.c.b16 %v2248, %v2247
  %v2252 = vpack.c.b16 %v2250, %v2249
  %2255 = vmatpush.bf16.msra.mxu0 0
  %2256 = vmatpush.bf16.msra.mxu0 0
  %2257 = vmatpush.bf16.msra.mxu0 0
  %2258 = vmatpush.bf16.msra.mxu0 0
  %2259 = vmatpush.bf16.msra.mxu0 0
  %2260 = vmatpush.bf16.msra.mxu0 0
  %2261 = vmatpush.bf16.msra.mxu0 %v2252
  %2262 = vmatpush.bf16.msra.mxu0 %v2251
  %2263 = vmatmul.bf16.gmra.mxu0 %v1821
  %v2264 = vpop.f32.mrf.mxu0
  %v2265 = vadd.f32 %v2241, %v2264
  %v2266 = vpop.f32.mrf.mxu0
  %v2267 = vadd.f32 %v2241, %v2266
  %2268 = vmatmul.bf16.gmra.mxu0 %v1824
  %v2269 = vpop.f32.mrf.mxu0
  %v2270 = vadd.f32 %v2241, %v2269
  %v2271 = vpop.f32.mrf.mxu0
  %v2272 = vadd.f32 %v2241, %v2271
  %2273 = vmatmul.bf16.gmra.mxu0 %v1827
  %v2274 = vpop.f32.mrf.mxu0
  %v2275 = vadd.f32 %v2241, %v2274
  %v2276 = vpop.f32.mrf.mxu0
  %v2277 = vadd.f32 %v2241, %v2276
  %2278 = vdwg.mxu0
  %s2279 = scalar_lea.vmem %s8, 48
  %v2280 = vld [vmem:[%s2279] sm:$0xf]
  %v2281 = vld [vmem:[%s2279 + $0x4] sm:$0xf]
  %v2282 = vld [vmem:[%s2279 + $0x8] sm:$0xf]
  %v2283 = vld [vmem:[%s2279 + $0xc] sm:$0xf]
  %s2284 = scalar_lea.vmem %s9, 3
  %v2285 = vld [vmem:[%s2284] sm:$0x1]
  %v2287 = vperm.slane %v2285, 0
  %v2293 = vunpack.c.l.b16 %v2280
  %v2294 = vunpack.c.l.b16 %v2281
  %v2295 = vunpack.c.l.b16 %v2282
  %v2296 = vunpack.c.l.b16 %v2283
  %v2297 = vpack.c.b16 %v2294, %v2293
  %v2298 = vpack.c.b16 %v2296, %v2295
  %2301 = vmatpush.bf16.msra.mxu0 0
  %2302 = vmatpush.bf16.msra.mxu0 0
  %2303 = vmatpush.bf16.msra.mxu0 0
  %2304 = vmatpush.bf16.msra.mxu0 0
  %2305 = vmatpush.bf16.msra.mxu0 0
  %2306 = vmatpush.bf16.msra.mxu0 0
  %2307 = vmatpush.bf16.msra.mxu0 %v2298
  %2308 = vmatpush.bf16.msra.mxu0 %v2297
  %2309 = vmatmul.bf16.gmra.mxu0 %v1821
  %v2310 = vpop.f32.mrf.mxu0
  %v2311 = vadd.f32 %v2287, %v2310
  %v2312 = vpop.f32.mrf.mxu0
  %v2313 = vadd.f32 %v2287, %v2312
  %2314 = vmatmul.bf16.gmra.mxu0 %v1824
  %v2315 = vpop.f32.mrf.mxu0
  %v2316 = vadd.f32 %v2287, %v2315
  %v2317 = vpop.f32.mrf.mxu0
  %v2318 = vadd.f32 %v2287, %v2317
  %2319 = vmatmul.bf16.gmra.mxu0 %v1827
  %v2320 = vpop.f32.mrf.mxu0
  %v2321 = vadd.f32 %v2287, %v2320
  %v2322 = vpop.f32.mrf.mxu0
  %v2323 = vadd.f32 %v2287, %v2322
  %2324 = vdwg.mxu0
  %s2325 = scalar_lea.vmem %s10, 48
  %v2326 = vld [vmem:[%s2325] sm:$0xf]
  %v2327 = vld [vmem:[%s2325 + $0x4] sm:$0xf]
  %v2328 = vld [vmem:[%s2325 + $0x8] sm:$0xf]
  %v2329 = vld [vmem:[%s2325 + $0xc] sm:$0xf]
  %s2330 = scalar_lea.vmem %s11, 3
  %v2331 = vld [vmem:[%s2330] sm:$0x1]
  %v2333 = vperm.slane %v2331, 0
  %v2339 = vunpack.c.l.b16 %v2326
  %v2340 = vunpack.c.l.b16 %v2327
  %v2341 = vunpack.c.l.b16 %v2328
  %v2342 = vunpack.c.l.b16 %v2329
  %v2343 = vpack.c.b16 %v2340, %v2339
  %v2344 = vpack.c.b16 %v2342, %v2341
  %2347 = vmatpush.bf16.msra.mxu0 0
  %2348 = vmatpush.bf16.msra.mxu0 0
  %2349 = vmatpush.bf16.msra.mxu0 0
  %2350 = vmatpush.bf16.msra.mxu0 0
  %2351 = vmatpush.bf16.msra.mxu0 0
  %2352 = vmatpush.bf16.msra.mxu0 0
  %2353 = vmatpush.bf16.msra.mxu0 %v2344
  %2354 = vmatpush.bf16.msra.mxu0 %v2343
  %2355 = vmatmul.bf16.gmra.mxu0 %v1821
  %v2356 = vpop.f32.mrf.mxu0
  %v2357 = vadd.f32 %v2333, %v2356
  %v2358 = vpop.f32.mrf.mxu0
  %v2359 = vadd.f32 %v2333, %v2358
  %2360 = vmatmul.bf16.gmra.mxu0 %v1824
  %v2361 = vpop.f32.mrf.mxu0
  %v2362 = vadd.f32 %v2333, %v2361
  %v2363 = vpop.f32.mrf.mxu0
  %v2364 = vadd.f32 %v2333, %v2363
  %2365 = vmatmul.bf16.gmra.mxu0 %v1827
  %v2366 = vpop.f32.mrf.mxu0
  %v2367 = vadd.f32 %v2333, %v2366
  %v2368 = vpop.f32.mrf.mxu0
  %v2369 = vadd.f32 %v2333, %v2368
  %2370 = vdwg.mxu0
  %v2371 = vpack.c.bf16 %v2265, %v2265
  %v2372 = vpack.c.bf16 %v2267, %v2267
  %v2373 = vpack.c.bf16 %v2270, %v2270
  %v2374 = vpack.c.bf16 %v2272, %v2272
  %v2375 = vpack.c.bf16 %v2275, %v2275
  %v2376 = vpack.c.bf16 %v2277, %v2277
  %v2377 = vpack.c.bf16 %v2311, %v2311
  %v2378 = vpack.c.bf16 %v2313, %v2313
  %v2379 = vpack.c.bf16 %v2316, %v2316
  %v2380 = vpack.c.bf16 %v2318, %v2318
  %v2381 = vpack.c.bf16 %v2321, %v2321
  %v2382 = vpack.c.bf16 %v2323, %v2323
  %v2383 = vpack.c.bf16 %v2357, %v2357
  %v2384 = vpack.c.bf16 %v2359, %v2359
  %v2385 = vpack.c.bf16 %v2362, %v2362
  %v2386 = vpack.c.bf16 %v2364, %v2364
  %v2387 = vpack.c.bf16 %v2367, %v2367
  %v2388 = vpack.c.bf16 %v2369, %v2369
  %v2392 = vunpack.c.l.b16 %v2371
  %v2393 = vunpack.c.l.b16 %v2372
  %v2394 = vunpack.c.l.b16 %v2373
  %v2395 = vpack.c.b16 %v2393, %v2392
  %v2396 = vpack.c.b16 %v2394, %v2394
  %v2400 = vunpack.c.l.b16 %v2377
  %v2401 = vunpack.c.l.b16 %v2378
  %v2402 = vunpack.c.l.b16 %v2379
  %v2403 = vpack.c.b16 %v2401, %v2400
  %v2404 = vpack.c.b16 %v2402, %v2402
  %v2406 = vsel %vm499, %v2395, 0
  %v2409 = vsel %vm499, %v2396, 0
  %v2412 = vsel %vm499, %v2403, 0
  %v2415 = vsel %vm499, %v2404, 0
  %2417 = vmatpush.bf16.xpose.msra.mxu0 0
  %2418 = vmatpush.bf16.xpose.msra.mxu0 0
  %2419 = vmatpush.bf16.xpose.msra.mxu0 0
  %2420 = vmatpush.bf16.xpose.msra.mxu0 0
  %2421 = vmatpush.bf16.xpose.msra.mxu0 0
  %2422 = vmatpush.bf16.xpose.msra.mxu0 0
  %2423 = vmatpush.bf16.xpose.msra.mxu0 %v2415
  %2424 = vmatpush.bf16.xpose.msra.mxu0 %v2412
  %2425 = vmatmul.bf16.gmra.mxu0 %v2406
  %v2426 = vpop.f32.mrf.mxu0
  %v2427 = vadd.f32 0.0, %v2426
  %v2428 = vpop.f32.mrf.mxu0
  %v2429 = vadd.f32 0.0, %v2428
  %2430 = vmatmul.bf16.gmra.mxu0 %v2409
  %v2431 = vpop.f32.mrf.mxu0
  %v2432 = vadd.f32 0.0, %v2431
  %v2433 = vpop.f32.mrf.mxu0
  %2434 = vdwg.mxu0
  %v2438 = vunpack.c.l.b16 %v2374
  %v2439 = vunpack.c.l.b16 %v2375
  %v2440 = vunpack.c.l.b16 %v2376
  %v2441 = vpack.c.b16 %v2439, %v2438
  %v2442 = vpack.c.b16 %v2440, %v2440
  %v2446 = vunpack.c.l.b16 %v2380
  %v2447 = vunpack.c.l.b16 %v2381
  %v2448 = vunpack.c.l.b16 %v2382
  %v2449 = vpack.c.b16 %v2447, %v2446
  %v2450 = vpack.c.b16 %v2448, %v2448
  %v2452 = vsel %vm499, %v2441, 0
  %v2455 = vsel %vm499, %v2442, 0
  %v2458 = vsel %vm499, %v2449, 0
  %v2461 = vsel %vm499, %v2450, 0
  %2463 = vmatpush.bf16.xpose.msra.mxu0 0
  %2464 = vmatpush.bf16.xpose.msra.mxu0 0
  %2465 = vmatpush.bf16.xpose.msra.mxu0 0
  %2466 = vmatpush.bf16.xpose.msra.mxu0 0
  %2467 = vmatpush.bf16.xpose.msra.mxu0 0
  %2468 = vmatpush.bf16.xpose.msra.mxu0 0
  %2469 = vmatpush.bf16.xpose.msra.mxu0 %v2461
  %2470 = vmatpush.bf16.xpose.msra.mxu0 %v2458
  %2471 = vmatmul.bf16.gmra.mxu0 %v2452
  %v2472 = vpop.f32.mrf.mxu0
  %v2473 = vadd.f32 0.0, %v2472
  %v2474 = vpop.f32.mrf.mxu0
  %v2475 = vadd.f32 0.0, %v2474
  %2476 = vmatmul.bf16.gmra.mxu0 %v2455
  %v2477 = vpop.f32.mrf.mxu0
  %v2478 = vadd.f32 0.0, %v2477
  %v2479 = vpop.f32.mrf.mxu0
  %2480 = vdwg.mxu0
  %v2481 = vmul.f32 %v2427, 0.25
  %v2482 = vmul.f32 %v2429, 0.25
  %v2483 = vmul.f32 %v2432, 0.25
  %v2484 = vmul.f32 %v2473, 0.25
  %v2485 = vmul.f32 %v2475, 0.25
  %v2486 = vmul.f32 %v2478, 0.25
  %v2487 = vadd.f32 %v2481, %v583
  %v2488 = vadd.f32 %v2482, %v583
  %v2489 = vadd.f32 %v2483, %v583
  %v2490 = vadd.f32 %v2484, %v583
  %v2491 = vadd.f32 %v2485, %v583
  %v2492 = vadd.f32 %v2486, %v583
  %v2493 = vsel %vm591, %v2487, -inf
  %2494 = vmax.xlane.f32.xlu0 %v2493
  %v2495 = vpop.xlane.xlu0 %2494
  %v2496 = vsel %vm591, %v2488, -inf
  %2497 = vmax.xlane.f32.xlu0 %v2496
  %v2498 = vpop.xlane.xlu0 %2497
  %v2499 = vsel %vm591, %v2489, -inf
  %2500 = vmax.xlane.f32.xlu0 %v2499
  %v2501 = vpop.xlane.xlu0 %2500
  %v2502 = vsel %vm591, %v2490, -inf
  %2503 = vmax.xlane.f32.xlu0 %v2502
  %v2504 = vpop.xlane.xlu0 %2503
  %v2505 = vsel %vm591, %v2491, -inf
  %2506 = vmax.xlane.f32.xlu0 %v2505
  %v2507 = vpop.xlane.xlu0 %2506
  %v2508 = vsel %vm591, %v2492, -inf
  %2509 = vmax.xlane.f32.xlu0 %v2508
  %v2510 = vpop.xlane.xlu0 %2509
  %v2511 = vsub.f32 %v2487, %v2495
  %v2512 = vsub.f32 %v2488, %v2498
  %v2513 = vsub.f32 %v2489, %v2501
  %v2514 = vsub.f32 %v2490, %v2504
  %v2515 = vsub.f32 %v2491, %v2507
  %v2516 = vsub.f32 %v2492, %v2510
  %v2517 = vmul.f32 %v2511, 1.442695
  %v2518 = vpow.pop %v2517
  %v2519 = vmul.f32 %v2512, 1.442695
  %v2520 = vpow.pop %v2519
  %v2521 = vmul.f32 %v2513, 1.442695
  %v2522 = vpow.pop %v2521
  %v2523 = vmul.f32 %v2514, 1.442695
  %v2524 = vpow.pop %v2523
  %v2525 = vmul.f32 %v2515, 1.442695
  %v2526 = vpow.pop %v2525
  %v2527 = vmul.f32 %v2516, 1.442695
  %v2528 = vpow.pop %v2527
  %v2529 = vsel %vm591, %v2518, 0.0
  %2530 = vadd.xlane.f32.xlu0 %v2529
  %v2531 = vpop.xlane.xlu0 %2530
  %v2532 = vsel %vm591, %v2520, 0.0
  %2533 = vadd.xlane.f32.xlu0 %v2532
  %v2534 = vpop.xlane.xlu0 %2533
  %v2535 = vsel %vm591, %v2522, 0.0
  %2536 = vadd.xlane.f32.xlu0 %v2535
  %v2537 = vpop.xlane.xlu0 %2536
  %v2538 = vsel %vm591, %v2524, 0.0
  %2539 = vadd.xlane.f32.xlu0 %v2538
  %v2540 = vpop.xlane.xlu0 %2539
  %v2541 = vsel %vm591, %v2526, 0.0
  %2542 = vadd.xlane.f32.xlu0 %v2541
  %v2543 = vpop.xlane.xlu0 %2542
  %v2544 = vsel %vm591, %v2528, 0.0
  %2545 = vadd.xlane.f32.xlu0 %v2544
  %v2546 = vpop.xlane.xlu0 %2545
  %v2547 = vrcp.pop %v2531
  %v2548 = vrcp.pop %v2534
  %v2549 = vrcp.pop %v2537
  %v2550 = vrcp.pop %v2540
  %v2551 = vrcp.pop %v2543
  %v2552 = vrcp.pop %v2546
  %v2553 = vmul.f32 %v2518, %v2547
  %v2554 = vmul.f32 %v2520, %v2548
  %v2555 = vmul.f32 %v2522, %v2549
  %v2556 = vmul.f32 %v2524, %v2550
  %v2557 = vmul.f32 %v2526, %v2551
  %v2558 = vmul.f32 %v2528, %v2552
  %v2559 = vpack.c.bf16 %v2553, %v2553
  %v2560 = vpack.c.bf16 %v2554, %v2554
  %v2561 = vpack.c.bf16 %v2555, %v2555
  %v2562 = vpack.c.bf16 %v2556, %v2556
  %v2563 = vpack.c.bf16 %v2557, %v2557
  %v2564 = vpack.c.bf16 %v2558, %v2558
  %v2568 = vunpack.c.l.b16 %v2559
  %v2569 = vunpack.c.l.b16 %v2560
  %v2570 = vunpack.c.l.b16 %v2561
  %v2571 = vpack.c.b16 %v2569, %v2568
  %v2572 = vpack.c.b16 %v2570, %v2570
  %v2576 = vunpack.c.l.b16 %v2383
  %v2577 = vunpack.c.l.b16 %v2384
  %v2578 = vunpack.c.l.b16 %v2385
  %v2579 = vpack.c.b16 %v2577, %v2576
  %v2580 = vpack.c.b16 %v2578, %v2578
  %v2583 = vsel %vm591, %v2571, 0
  %v2586 = vsel %vm591, %v2572, 0
  %v2589 = vsel %vm687, %v2580, 0
  %2591 = vmatpush.bf16.msra.mxu0 0
  %2592 = vmatpush.bf16.msra.mxu0 0
  %2593 = vmatpush.bf16.msra.mxu0 0
  %2594 = vmatpush.bf16.msra.mxu0 0
  %2595 = vmatpush.bf16.msra.mxu0 0
  %2596 = vmatpush.bf16.msra.mxu0 0
  %2597 = vmatpush.bf16.msra.mxu0 %v2589
  %2598 = vmatpush.bf16.msra.mxu0 %v2579
  %2599 = vmatmul.bf16.gmra.mxu0 %v2583
  %v2600 = vpop.f32.mrf.mxu0
  %v2601 = vadd.f32 0.0, %v2600
  %v2602 = vpop.f32.mrf.mxu0
  %v2603 = vadd.f32 0.0, %v2602
  %2604 = vmatmul.bf16.gmra.mxu0 %v2586
  %v2605 = vpop.f32.mrf.mxu0
  %v2606 = vadd.f32 0.0, %v2605
  %v2607 = vpop.f32.mrf.mxu0
  %2608 = vdwg.mxu0
  %v2612 = vunpack.c.l.b16 %v2562
  %v2613 = vunpack.c.l.b16 %v2563
  %v2614 = vunpack.c.l.b16 %v2564
  %v2615 = vpack.c.b16 %v2613, %v2612
  %v2616 = vpack.c.b16 %v2614, %v2614
  %v2620 = vunpack.c.l.b16 %v2386
  %v2621 = vunpack.c.l.b16 %v2387
  %v2622 = vunpack.c.l.b16 %v2388
  %v2623 = vpack.c.b16 %v2621, %v2620
  %v2624 = vpack.c.b16 %v2622, %v2622
  %v2627 = vsel %vm591, %v2615, 0
  %v2630 = vsel %vm591, %v2616, 0
  %v2633 = vsel %vm687, %v2624, 0
  %2635 = vmatpush.bf16.msra.mxu0 0
  %2636 = vmatpush.bf16.msra.mxu0 0
  %2637 = vmatpush.bf16.msra.mxu0 0
  %2638 = vmatpush.bf16.msra.mxu0 0
  %2639 = vmatpush.bf16.msra.mxu0 0
  %2640 = vmatpush.bf16.msra.mxu0 0
  %2641 = vmatpush.bf16.msra.mxu0 %v2633
  %2642 = vmatpush.bf16.msra.mxu0 %v2623
  %2643 = vmatmul.bf16.gmra.mxu0 %v2627
  %v2644 = vpop.f32.mrf.mxu0
  %v2645 = vadd.f32 0.0, %v2644
  %v2646 = vpop.f32.mrf.mxu0
  %v2647 = vadd.f32 0.0, %v2646
  %2648 = vmatmul.bf16.gmra.mxu0 %v2630
  %v2649 = vpop.f32.mrf.mxu0
  %v2650 = vadd.f32 0.0, %v2649
  %v2651 = vpop.f32.mrf.mxu0
  %2652 = vdwg.mxu0
  %v2653 = vpack.c.bf16 %v2603, %v2601
  %v2654 = vpack.c.bf16 %v2645, %v2606
  %v2655 = vpack.c.bf16 %v2650, %v2647
  %s2656 = scalar_lea.vmem %s12, 24
  %v2657 = vld [vmem:[%s2656] sm:$0xf]
  %v2658 = vld [vmem:[%s2656 + $0x4] sm:$0xf]
  %v2661 = vunpack.c.l.b16 %v2657
  %v2662 = vunpack.c.l.b16 %v2658
  %v2663 = vpack.c.b16 %v2662, %v2661
  %v2666 = vsel %vm499, %v2653, 0
  %v2669 = vsel %vm499, %v2654, 0
  %v2672 = vsel %vm499, %v2655, 0
  %2674 = vmatpush.bf16.msra.mxu0 0
  %2675 = vmatpush.bf16.msra.mxu0 0
  %2676 = vmatpush.bf16.msra.mxu0 0
  %2677 = vmatpush.bf16.msra.mxu0 0
  %2678 = vmatpush.bf16.msra.mxu0 0
  %2679 = vmatpush.bf16.msra.mxu0 0
  %2680 = vmatpush.bf16.msra.mxu0 0
  %2681 = vmatpush.bf16.msra.mxu0 %v2663
  %2682 = vmatmul.bf16.gmra.mxu0 %v2666
  %v2683 = vpop.f32.mrf.mxu0
  %v2684 = vadd.f32 0.0, %v2683
  %v2685 = vpop.f32.mrf.mxu0
  %v2686 = vadd.f32 0.0, %v2685
  %2687 = vmatmul.bf16.gmra.mxu0 %v2669
  %v2688 = vpop.f32.mrf.mxu0
  %v2689 = vadd.f32 0.0, %v2688
  %v2690 = vpop.f32.mrf.mxu0
  %v2691 = vadd.f32 0.0, %v2690
  %2692 = vmatmul.bf16.gmra.mxu0 %v2672
  %v2693 = vpop.f32.mrf.mxu0
  %v2694 = vadd.f32 0.0, %v2693
  %v2695 = vpop.f32.mrf.mxu0
  %v2696 = vadd.f32 0.0, %v2695
  %2697 = vdwg.mxu0
  %v2700 = vunpack.c.l.b16 %v2231
  %v2701 = vunpack.c.l.b16 %v2232
  %v2702 = vpack.c.b16 %v2701, %v2700
  %v2705 = vsel %vm499, %v2227, 0
  %v2708 = vsel %vm499, %v2228, 0
  %v2711 = vsel %vm499, %v2229, 0
  %2713 = vmatpush.bf16.msra.mxu0 0
  %2714 = vmatpush.bf16.msra.mxu0 0
  %2715 = vmatpush.bf16.msra.mxu0 0
  %2716 = vmatpush.bf16.msra.mxu0 0
  %2717 = vmatpush.bf16.msra.mxu0 0
  %2718 = vmatpush.bf16.msra.mxu0 0
  %2719 = vmatpush.bf16.msra.mxu0 0
  %2720 = vmatpush.bf16.msra.mxu0 %v2702
  %2721 = vmatmul.bf16.gmra.mxu0 %v2705
  %v2722 = vpop.f32.mrf.mxu0
  %v2723 = vadd.f32 %v2684, %v2722
  %v2724 = vpop.f32.mrf.mxu0
  %v2725 = vadd.f32 %v2686, %v2724
  %2726 = vmatmul.bf16.gmra.mxu0 %v2708
  %v2727 = vpop.f32.mrf.mxu0
  %v2728 = vadd.f32 %v2689, %v2727
  %v2729 = vpop.f32.mrf.mxu0
  %v2730 = vadd.f32 %v2691, %v2729
  %2731 = vmatmul.bf16.gmra.mxu0 %v2711
  %v2732 = vpop.f32.mrf.mxu0
  %v2733 = vadd.f32 %v2694, %v2732
  %v2734 = vpop.f32.mrf.mxu0
  %v2735 = vadd.f32 %v2696, %v2734
  %2736 = vdwg.mxu0
  %v2737 = vadd.f32 %v1635, %v2723
  %v2738 = vadd.f32 %v1636, %v2725
  %v2739 = vadd.f32 %v1637, %v2728
  %v2740 = vadd.f32 %v1638, %v2730
  %v2741 = vadd.f32 %v1639, %v2733
  %v2742 = vadd.f32 %v1640, %v2735
  %s2743 = scalar_lea.vmem %s13, 1
  %v2744 = vld [vmem:[%s2743] sm:$0x1]
  %v2746 = vperm.slane %v2744, 0
  %v2748 = vadd.f32 %v2737, %v2746
  %v2749 = vadd.f32 %v2738, %v2746
  %v2750 = vadd.f32 %v2739, %v2746
  %v2751 = vadd.f32 %v2740, %v2746
  %v2752 = vadd.f32 %v2741, %v2746
  %v2753 = vadd.f32 %v2742, %v2746
  %s2754 = scalar_lea.vmem %s14, 1
  %v2755 = vld [vmem:[%s2754] sm:$0x1]
  %s2756 = scalar_lea.vmem %s15, 1
  %v2757 = vld [vmem:[%s2756] sm:$0x1]
  %v2758 = vsel %vm163, %v2748, 0.0
  %2759 = vadd.xlane.f32.xlu0 %v2758
  %v2760 = vpop.xlane.xlu0 %2759
  %v2761 = vsel %vm163, %v2749, 0.0
  %2762 = vadd.xlane.f32.xlu0 %v2761
  %v2763 = vpop.xlane.xlu0 %2762
  %v2764 = vsel %vm163, %v2750, 0.0
  %2765 = vadd.xlane.f32.xlu0 %v2764
  %v2766 = vpop.xlane.xlu0 %2765
  %v2767 = vsel %vm163, %v2751, 0.0
  %2768 = vadd.xlane.f32.xlu0 %v2767
  %v2769 = vpop.xlane.xlu0 %2768
  %v2770 = vsel %vm163, %v2752, 0.0
  %2771 = vadd.xlane.f32.xlu0 %v2770
  %v2772 = vpop.xlane.xlu0 %2771
  %v2773 = vsel %vm163, %v2753, 0.0
  %2774 = vadd.xlane.f32.xlu0 %v2773
  %v2775 = vpop.xlane.xlu0 %2774
  %v2776 = vmul.f32 %v2760, %v188
  %v2777 = vmul.f32 %v2763, %v188
  %v2778 = vmul.f32 %v2766, %v188
  %v2779 = vmul.f32 %v2769, %v188
  %v2780 = vmul.f32 %v2772, %v188
  %v2781 = vmul.f32 %v2775, %v188
  %v2782 = vsub.f32 %v2748, %v2776
  %v2783 = vsub.f32 %v2749, %v2777
  %v2784 = vsub.f32 %v2750, %v2778
  %v2785 = vsub.f32 %v2751, %v2779
  %v2786 = vsub.f32 %v2752, %v2780
  %v2787 = vsub.f32 %v2753, %v2781
  %v2788 = vmul.f32 %v2782, %v2782
  %v2789 = vmul.f32 %v2783, %v2783
  %v2790 = vmul.f32 %v2784, %v2784
  %v2791 = vmul.f32 %v2785, %v2785
  %v2792 = vmul.f32 %v2786, %v2786
  %v2793 = vmul.f32 %v2787, %v2787
  %v2794 = vsel %vm163, %v2788, 0.0
  %2795 = vadd.xlane.f32.xlu0 %v2794
  %v2796 = vpop.xlane.xlu0 %2795
  %v2797 = vsel %vm163, %v2789, 0.0
  %2798 = vadd.xlane.f32.xlu0 %v2797
  %v2799 = vpop.xlane.xlu0 %2798
  %v2800 = vsel %vm163, %v2790, 0.0
  %2801 = vadd.xlane.f32.xlu0 %v2800
  %v2802 = vpop.xlane.xlu0 %2801
  %v2803 = vsel %vm163, %v2791, 0.0
  %2804 = vadd.xlane.f32.xlu0 %v2803
  %v2805 = vpop.xlane.xlu0 %2804
  %v2806 = vsel %vm163, %v2792, 0.0
  %2807 = vadd.xlane.f32.xlu0 %v2806
  %v2808 = vpop.xlane.xlu0 %2807
  %v2809 = vsel %vm163, %v2793, 0.0
  %2810 = vadd.xlane.f32.xlu0 %v2809
  %v2811 = vpop.xlane.xlu0 %2810
  %v2812 = vmul.f32 %v2796, %v188
  %v2813 = vmul.f32 %v2799, %v188
  %v2814 = vmul.f32 %v2802, %v188
  %v2815 = vmul.f32 %v2805, %v188
  %v2816 = vmul.f32 %v2808, %v188
  %v2817 = vmul.f32 %v2811, %v188
  %v2818 = vadd.f32 %v2812, 1e-06
  %v2819 = vadd.f32 %v2813, 1e-06
  %v2820 = vadd.f32 %v2814, 1e-06
  %v2821 = vadd.f32 %v2815, 1e-06
  %v2822 = vadd.f32 %v2816, 1e-06
  %v2823 = vadd.f32 %v2817, 1e-06
  %v2824 = vrsqrt.pop %v2818
  %v2825 = vmul.f32 %v2824, %v2818
  %v2826 = vmul.f32 %v2825, %v2824
  %v2827 = vmul.f32 0.5, %v2826
  %v2828 = vsub.f32 1.5, %v2827
  %v2829 = vmul.f32 %v2824, %v2828
  %vm2830 = vweird.f32 %v2818
  %vm2831 = vweird.f32 %v2824
  %vm2832 = vmor %vm2830, %vm2831
  %v2833 = vsel %vm2832, %v2824, %v2829
  %v2834 = vrsqrt.pop %v2819
  %v2835 = vmul.f32 %v2834, %v2819
  %v2836 = vmul.f32 %v2835, %v2834
  %v2837 = vmul.f32 0.5, %v2836
  %v2838 = vsub.f32 1.5, %v2837
  %v2839 = vmul.f32 %v2834, %v2838
  %vm2840 = vweird.f32 %v2819
  %vm2841 = vweird.f32 %v2834
  %vm2842 = vmor %vm2840, %vm2841
  %v2843 = vsel %vm2842, %v2834, %v2839
  %v2844 = vrsqrt.pop %v2820
  %v2845 = vmul.f32 %v2844, %v2820
  %v2846 = vmul.f32 %v2845, %v2844
  %v2847 = vmul.f32 0.5, %v2846
  %v2848 = vsub.f32 1.5, %v2847
  %v2849 = vmul.f32 %v2844, %v2848
  %vm2850 = vweird.f32 %v2820
  %vm2851 = vweird.f32 %v2844
  %vm2852 = vmor %vm2850, %vm2851
  %v2853 = vsel %vm2852, %v2844, %v2849
  %v2854 = vrsqrt.pop %v2821
  %v2855 = vmul.f32 %v2854, %v2821
  %v2856 = vmul.f32 %v2855, %v2854
  %v2857 = vmul.f32 0.5, %v2856
  %v2858 = vsub.f32 1.5, %v2857
  %v2859 = vmul.f32 %v2854, %v2858
  %vm2860 = vweird.f32 %v2821
  %vm2861 = vweird.f32 %v2854
  %vm2862 = vmor %vm2860, %vm2861
  %v2863 = vsel %vm2862, %v2854, %v2859
  %v2864 = vrsqrt.pop %v2822
  %v2865 = vmul.f32 %v2864, %v2822
  %v2866 = vmul.f32 %v2865, %v2864
  %v2867 = vmul.f32 0.5, %v2866
  %v2868 = vsub.f32 1.5, %v2867
  %v2869 = vmul.f32 %v2864, %v2868
  %vm2870 = vweird.f32 %v2822
  %vm2871 = vweird.f32 %v2864
  %vm2872 = vmor %vm2870, %vm2871
  %v2873 = vsel %vm2872, %v2864, %v2869
  %v2874 = vrsqrt.pop %v2823
  %v2875 = vmul.f32 %v2874, %v2823
  %v2876 = vmul.f32 %v2875, %v2874
  %v2877 = vmul.f32 0.5, %v2876
  %v2878 = vsub.f32 1.5, %v2877
  %v2879 = vmul.f32 %v2874, %v2878
  %vm2880 = vweird.f32 %v2823
  %vm2881 = vweird.f32 %v2874
  %vm2882 = vmor %vm2880, %vm2881
  %v2883 = vsel %vm2882, %v2874, %v2879
  %v2884 = vmul.f32 %v2782, %v2833
  %v2885 = vmul.f32 %v2783, %v2843
  %v2886 = vmul.f32 %v2784, %v2853
  %v2887 = vmul.f32 %v2785, %v2863
  %v2888 = vmul.f32 %v2786, %v2873
  %v2889 = vmul.f32 %v2787, %v2883
  %v2891 = vperm.slane %v2755, 0
  %v2893 = vmul.f32 %v2884, %v2891
  %v2894 = vmul.f32 %v2885, %v2891
  %v2895 = vmul.f32 %v2886, %v2891
  %v2896 = vmul.f32 %v2887, %v2891
  %v2897 = vmul.f32 %v2888, %v2891
  %v2898 = vmul.f32 %v2889, %v2891
  %v2900 = vperm.slane %v2757, 0
  %v2902 = vadd.f32 %v2893, %v2900
  %v2903 = vadd.f32 %v2894, %v2900
  %v2904 = vadd.f32 %v2895, %v2900
  %v2905 = vadd.f32 %v2896, %v2900
  %v2906 = vadd.f32 %v2897, %v2900
  %v2907 = vadd.f32 %v2898, %v2900
  %v2908 = vpack.c.bf16 %v2903, %v2902
  %v2909 = vpack.c.bf16 %v2905, %v2904
  %v2910 = vpack.c.bf16 %v2907, %v2906
  %s2911 = scalar_lea.vmem %s16, 16
  %v2912 = vld [vmem:[%s2911] sm:$0xf]
  %v2913 = vld [vmem:[%s2911 + $0x4] sm:$0xf]
  %v2914 = vld [vmem:[%s2911 + $0x8] sm:$0xf]
  %v2915 = vld [vmem:[%s2911 + $0xc] sm:$0xf]
  %s2916 = scalar_lea.vmem %s17, 1
  %v2917 = vld [vmem:[%s2916] sm:$0x1]
  %v2919 = vperm.slane %v2917, 0
  %v2925 = vunpack.c.l.b16 %v2912
  %v2926 = vunpack.c.l.b16 %v2913
  %v2927 = vunpack.c.l.b16 %v2914
  %v2928 = vunpack.c.l.b16 %v2915
  %v2929 = vpack.c.b16 %v2926, %v2925
  %v2930 = vpack.c.b16 %v2928, %v2927
  %v2934 = vsel %vm163, %v2908, 0
  %v2937 = vsel %vm163, %v2909, 0
  %v2940 = vsel %vm163, %v2910, 0
  %2942 = vmatpush.bf16.msra.mxu0 0
  %2943 = vmatpush.bf16.msra.mxu0 0
  %2944 = vmatpush.bf16.msra.mxu0 0
  %2945 = vmatpush.bf16.msra.mxu0 0
  %2946 = vmatpush.bf16.msra.mxu0 0
  %2947 = vmatpush.bf16.msra.mxu0 0
  %2948 = vmatpush.bf16.msra.mxu0 %v2930
  %2949 = vmatpush.bf16.msra.mxu0 %v2929
  %2950 = vmatmul.bf16.gmra.mxu0 %v2934
  %v2951 = vpop.f32.mrf.mxu0
  %v2952 = vadd.f32 %v2919, %v2951
  %v2953 = vpop.f32.mrf.mxu0
  %v2954 = vadd.f32 %v2919, %v2953
  %2955 = vmatmul.bf16.gmra.mxu0 %v2937
  %v2956 = vpop.f32.mrf.mxu0
  %v2957 = vadd.f32 %v2919, %v2956
  %v2958 = vpop.f32.mrf.mxu0
  %v2959 = vadd.f32 %v2919, %v2958
  %2960 = vmatmul.bf16.gmra.mxu0 %v2940
  %v2961 = vpop.f32.mrf.mxu0
  %v2962 = vadd.f32 %v2919, %v2961
  %v2963 = vpop.f32.mrf.mxu0
  %v2964 = vadd.f32 %v2919, %v2963
  %2965 = vdwg.mxu0
  %v2966 = vmul.f32 %v2952, %v2952
  %v2967 = vmul.f32 %v2954, %v2954
  %v2968 = vmul.f32 %v2957, %v2957
  %v2969 = vmul.f32 %v2959, %v2959
  %v2970 = vmul.f32 %v2962, %v2962
  %v2971 = vmul.f32 %v2964, %v2964
  %v2972 = vmul.f32 %v2952, %v2966
  %v2973 = vmul.f32 %v2954, %v2967
  %v2974 = vmul.f32 %v2957, %v2968
  %v2975 = vmul.f32 %v2959, %v2969
  %v2976 = vmul.f32 %v2962, %v2970
  %v2977 = vmul.f32 %v2964, %v2971
  %v2978 = vmul.f32 %v2972, 0.044715
  %v2979 = vmul.f32 %v2973, 0.044715
  %v2980 = vmul.f32 %v2974, 0.044715
  %v2981 = vmul.f32 %v2975, 0.044715
  %v2982 = vmul.f32 %v2976, 0.044715
  %v2983 = vmul.f32 %v2977, 0.044715
  %v2984 = vadd.f32 %v2952, %v2978
  %v2985 = vadd.f32 %v2954, %v2979
  %v2986 = vadd.f32 %v2957, %v2980
  %v2987 = vadd.f32 %v2959, %v2981
  %v2988 = vadd.f32 %v2962, %v2982
  %v2989 = vadd.f32 %v2964, %v2983
  %v2990 = vmul.f32 %v2984, 0.7978846
  %v2991 = vmul.f32 %v2985, 0.7978846
  %v2992 = vmul.f32 %v2986, 0.7978846
  %v2993 = vmul.f32 %v2987, 0.7978846
  %v2994 = vmul.f32 %v2988, 0.7978846
  %v2995 = vmul.f32 %v2989, 0.7978846
  %v2996 = vtanh.pop %v2990
  %v2997 = vtanh.pop %v2991
  %v2998 = vtanh.pop %v2992
  %v2999 = vtanh.pop %v2993
  %v3000 = vtanh.pop %v2994
  %v3001 = vtanh.pop %v2995
  %v3002 = vadd.f32 %v2996, 1.0
  %v3003 = vadd.f32 %v2997, 1.0
  %v3004 = vadd.f32 %v2998, 1.0
  %v3005 = vadd.f32 %v2999, 1.0
  %v3006 = vadd.f32 %v3000, 1.0
  %v3007 = vadd.f32 %v3001, 1.0
  %v3008 = vmul.f32 %v3002, 0.5
  %v3009 = vmul.f32 %v3003, 0.5
  %v3010 = vmul.f32 %v3004, 0.5
  %v3011 = vmul.f32 %v3005, 0.5
  %v3012 = vmul.f32 %v3006, 0.5
  %v3013 = vmul.f32 %v3007, 0.5
  %v3014 = vmul.f32 %v2952, %v3008
  %v3015 = vmul.f32 %v2954, %v3009
  %v3016 = vmul.f32 %v2957, %v3010
  %v3017 = vmul.f32 %v2959, %v3011
  %v3018 = vmul.f32 %v2962, %v3012
  %v3019 = vmul.f32 %v2964, %v3013
  %v3020 = vpack.c.bf16 %v3015, %v3014
  %v3021 = vpack.c.bf16 %v3017, %v3016
  %v3022 = vpack.c.bf16 %v3019, %v3018
  %s3023 = scalar_lea.vmem %s18, 64
  %v3024 = vld [vmem:[%s3023] sm:$0xf]
  %v3025 = vld [vmem:[%s3023 + $0x4] sm:$0xf]
  %v3026 = vld [vmem:[%s3023 + $0x8] sm:$0xf]
  %v3027 = vld [vmem:[%s3023 + $0xc] sm:$0xf]
  %v3028 = vld [vmem:[%s3023 + $0x10] sm:$0xf]
  %v3029 = vld [vmem:[%s3023 + $0x14] sm:$0xf]
  %v3030 = vld [vmem:[%s3023 + $0x18] sm:$0xf]
  %v3031 = vld [vmem:[%s3023 + $0x1c] sm:$0xf]
  %v3032 = vld [vmem:[%s3023 + $0x20] sm:$0xf]
  %v3033 = vld [vmem:[%s3023 + $0x24] sm:$0xf]
  %v3034 = vld [vmem:[%s3023 + $0x28] sm:$0xf]
  %v3035 = vld [vmem:[%s3023 + $0x2c] sm:$0xf]
  %v3036 = vld [vmem:[%s3023 + $0x30] sm:$0xf]
  %v3037 = vld [vmem:[%s3023 + $0x34] sm:$0xf]
  %v3038 = vld [vmem:[%s3023 + $0x38] sm:$0xf]
  %v3039 = vld [vmem:[%s3023 + $0x3c] sm:$0xf]
  %s3040 = scalar_lea.vmem %s19, 1
  %v3041 = vld [vmem:[%s3040] sm:$0x1]
  %v3043 = vperm.slane %v3041, 0
  %v3061 = vunpack.c.l.b16 %v3024
  %v3062 = vunpack.c.l.b16 %v3025
  %v3063 = vunpack.c.l.b16 %v3026
  %v3064 = vunpack.c.l.b16 %v3027
  %v3065 = vunpack.c.l.b16 %v3028
  %v3066 = vunpack.c.l.b16 %v3029
  %v3067 = vunpack.c.l.b16 %v3030
  %v3068 = vunpack.c.l.b16 %v3031
  %v3069 = vunpack.c.l.b16 %v3032
  %v3070 = vunpack.c.l.b16 %v3033
  %v3071 = vunpack.c.l.b16 %v3034
  %v3072 = vunpack.c.l.b16 %v3035
  %v3073 = vunpack.c.l.b16 %v3036
  %v3074 = vunpack.c.l.b16 %v3037
  %v3075 = vunpack.c.l.b16 %v3038
  %v3076 = vunpack.c.l.b16 %v3039
  %v3077 = vpack.c.b16 %v3062, %v3061
  %v3078 = vpack.c.b16 %v3064, %v3063
  %v3079 = vpack.c.b16 %v3066, %v3065
  %v3080 = vpack.c.b16 %v3068, %v3067
  %v3081 = vpack.c.b16 %v3070, %v3069
  %v3082 = vpack.c.b16 %v3072, %v3071
  %v3083 = vpack.c.b16 %v3074, %v3073
  %v3084 = vpack.c.b16 %v3076, %v3075
  %3093 = vmatpush.bf16.msra.mxu0 %v3084
  %3094 = vmatpush.bf16.msra.mxu0 %v3083
  %3095 = vmatpush.bf16.msra.mxu0 %v3082
  %3096 = vmatpush.bf16.msra.mxu0 %v3081
  %3097 = vmatpush.bf16.msra.mxu0 %v3080
  %3098 = vmatpush.bf16.msra.mxu0 %v3079
  %3099 = vmatpush.bf16.msra.mxu0 %v3078
  %3100 = vmatpush.bf16.msra.mxu0 %v3077
  %3101 = vmatmul.bf16.gmra.mxu0 %v3020
  %v3102 = vpop.f32.mrf.mxu0
  %v3103 = vadd.f32 %v3043, %v3102
  %v3104 = vpop.f32.mrf.mxu0
  %v3105 = vadd.f32 %v3043, %v3104
  %3106 = vmatmul.bf16.gmra.mxu0 %v3021
  %v3107 = vpop.f32.mrf.mxu0
  %v3108 = vadd.f32 %v3043, %v3107
  %v3109 = vpop.f32.mrf.mxu0
  %v3110 = vadd.f32 %v3043, %v3109
  %3111 = vmatmul.bf16.gmra.mxu0 %v3022
  %v3112 = vpop.f32.mrf.mxu0
  %v3113 = vadd.f32 %v3043, %v3112
  %v3114 = vpop.f32.mrf.mxu0
  %v3115 = vadd.f32 %v3043, %v3114
  %3116 = vdwg.mxu0
  %v3117 = vadd.f32 %v2748, %v3103
  %v3118 = vadd.f32 %v2749, %v3105
  %v3119 = vadd.f32 %v2750, %v3108
  %v3120 = vadd.f32 %v2751, %v3110
  %v3121 = vadd.f32 %v2752, %v3113
  %v3122 = vadd.f32 %v2753, %v3115
  %v3123 = vld [vmem:[%s20] sm:$0x1]
  %v3124 = vld [vmem:[%s21] sm:$0x1]
  %v3125 = vsel %vm163, %v3117, 0.0
  %3126 = vadd.xlane.f32.xlu0 %v3125
  %v3127 = vpop.xlane.xlu0 %3126
  %v3128 = vsel %vm163, %v3118, 0.0
  %3129 = vadd.xlane.f32.xlu0 %v3128
  %v3130 = vpop.xlane.xlu0 %3129
  %v3131 = vsel %vm163, %v3119, 0.0
  %3132 = vadd.xlane.f32.xlu0 %v3131
  %v3133 = vpop.xlane.xlu0 %3132
  %v3134 = vsel %vm163, %v3120, 0.0
  %3135 = vadd.xlane.f32.xlu0 %v3134
  %v3136 = vpop.xlane.xlu0 %3135
  %v3137 = vsel %vm163, %v3121, 0.0
  %3138 = vadd.xlane.f32.xlu0 %v3137
  %v3139 = vpop.xlane.xlu0 %3138
  %v3140 = vsel %vm163, %v3122, 0.0
  %3141 = vadd.xlane.f32.xlu0 %v3140
  %v3142 = vpop.xlane.xlu0 %3141
  %v3143 = vmul.f32 %v3127, %v188
  %v3144 = vmul.f32 %v3130, %v188
  %v3145 = vmul.f32 %v3133, %v188
  %v3146 = vmul.f32 %v3136, %v188
  %v3147 = vmul.f32 %v3139, %v188
  %v3148 = vmul.f32 %v3142, %v188
  %v3149 = vsub.f32 %v3117, %v3143
  %v3150 = vsub.f32 %v3118, %v3144
  %v3151 = vsub.f32 %v3119, %v3145
  %v3152 = vsub.f32 %v3120, %v3146
  %v3153 = vsub.f32 %v3121, %v3147
  %v3154 = vsub.f32 %v3122, %v3148
  %v3155 = vmul.f32 %v3149, %v3149
  %v3156 = vmul.f32 %v3150, %v3150
  %v3157 = vmul.f32 %v3151, %v3151
  %v3158 = vmul.f32 %v3152, %v3152
  %v3159 = vmul.f32 %v3153, %v3153
  %v3160 = vmul.f32 %v3154, %v3154
  %v3161 = vsel %vm163, %v3155, 0.0
  %3162 = vadd.xlane.f32.xlu0 %v3161
  %v3163 = vpop.xlane.xlu0 %3162
  %v3164 = vsel %vm163, %v3156, 0.0
  %3165 = vadd.xlane.f32.xlu0 %v3164
  %v3166 = vpop.xlane.xlu0 %3165
  %v3167 = vsel %vm163, %v3157, 0.0
  %3168 = vadd.xlane.f32.xlu0 %v3167
  %v3169 = vpop.xlane.xlu0 %3168
  %v3170 = vsel %vm163, %v3158, 0.0
  %3171 = vadd.xlane.f32.xlu0 %v3170
  %v3172 = vpop.xlane.xlu0 %3171
  %v3173 = vsel %vm163, %v3159, 0.0
  %3174 = vadd.xlane.f32.xlu0 %v3173
  %v3175 = vpop.xlane.xlu0 %3174
  %v3176 = vsel %vm163, %v3160, 0.0
  %3177 = vadd.xlane.f32.xlu0 %v3176
  %v3178 = vpop.xlane.xlu0 %3177
  %v3179 = vmul.f32 %v3163, %v188
  %v3180 = vmul.f32 %v3166, %v188
  %v3181 = vmul.f32 %v3169, %v188
  %v3182 = vmul.f32 %v3172, %v188
  %v3183 = vmul.f32 %v3175, %v188
  %v3184 = vmul.f32 %v3178, %v188
  %v3185 = vadd.f32 %v3179, 1e-06
  %v3186 = vadd.f32 %v3180, 1e-06
  %v3187 = vadd.f32 %v3181, 1e-06
  %v3188 = vadd.f32 %v3182, 1e-06
  %v3189 = vadd.f32 %v3183, 1e-06
  %v3190 = vadd.f32 %v3184, 1e-06
  %v3191 = vrsqrt.pop %v3185
  %v3192 = vmul.f32 %v3191, %v3185
  %v3193 = vmul.f32 %v3192, %v3191
  %v3194 = vmul.f32 0.5, %v3193
  %v3195 = vsub.f32 1.5, %v3194
  %v3196 = vmul.f32 %v3191, %v3195
  %vm3197 = vweird.f32 %v3185
  %vm3198 = vweird.f32 %v3191
  %vm3199 = vmor %vm3197, %vm3198
  %v3200 = vsel %vm3199, %v3191, %v3196
  %v3201 = vrsqrt.pop %v3186
  %v3202 = vmul.f32 %v3201, %v3186
  %v3203 = vmul.f32 %v3202, %v3201
  %v3204 = vmul.f32 0.5, %v3203
  %v3205 = vsub.f32 1.5, %v3204
  %v3206 = vmul.f32 %v3201, %v3205
  %vm3207 = vweird.f32 %v3186
  %vm3208 = vweird.f32 %v3201
  %vm3209 = vmor %vm3207, %vm3208
  %v3210 = vsel %vm3209, %v3201, %v3206
  %v3211 = vrsqrt.pop %v3187
  %v3212 = vmul.f32 %v3211, %v3187
  %v3213 = vmul.f32 %v3212, %v3211
  %v3214 = vmul.f32 0.5, %v3213
  %v3215 = vsub.f32 1.5, %v3214
  %v3216 = vmul.f32 %v3211, %v3215
  %vm3217 = vweird.f32 %v3187
  %vm3218 = vweird.f32 %v3211
  %vm3219 = vmor %vm3217, %vm3218
  %v3220 = vsel %vm3219, %v3211, %v3216
  %v3221 = vrsqrt.pop %v3188
  %v3222 = vmul.f32 %v3221, %v3188
  %v3223 = vmul.f32 %v3222, %v3221
  %v3224 = vmul.f32 0.5, %v3223
  %v3225 = vsub.f32 1.5, %v3224
  %v3226 = vmul.f32 %v3221, %v3225
  %vm3227 = vweird.f32 %v3188
  %vm3228 = vweird.f32 %v3221
  %vm3229 = vmor %vm3227, %vm3228
  %v3230 = vsel %vm3229, %v3221, %v3226
  %v3231 = vrsqrt.pop %v3189
  %v3232 = vmul.f32 %v3231, %v3189
  %v3233 = vmul.f32 %v3232, %v3231
  %v3234 = vmul.f32 0.5, %v3233
  %v3235 = vsub.f32 1.5, %v3234
  %v3236 = vmul.f32 %v3231, %v3235
  %vm3237 = vweird.f32 %v3189
  %vm3238 = vweird.f32 %v3231
  %vm3239 = vmor %vm3237, %vm3238
  %v3240 = vsel %vm3239, %v3231, %v3236
  %v3241 = vrsqrt.pop %v3190
  %v3242 = vmul.f32 %v3241, %v3190
  %v3243 = vmul.f32 %v3242, %v3241
  %v3244 = vmul.f32 0.5, %v3243
  %v3245 = vsub.f32 1.5, %v3244
  %v3246 = vmul.f32 %v3241, %v3245
  %vm3247 = vweird.f32 %v3190
  %vm3248 = vweird.f32 %v3241
  %vm3249 = vmor %vm3247, %vm3248
  %v3250 = vsel %vm3249, %v3241, %v3246
  %v3251 = vmul.f32 %v3149, %v3200
  %v3252 = vmul.f32 %v3150, %v3210
  %v3253 = vmul.f32 %v3151, %v3220
  %v3254 = vmul.f32 %v3152, %v3230
  %v3255 = vmul.f32 %v3153, %v3240
  %v3256 = vmul.f32 %v3154, %v3250
  %v3258 = vperm.slane %v3123, 0
  %v3260 = vmul.f32 %v3251, %v3258
  %v3261 = vmul.f32 %v3252, %v3258
  %v3262 = vmul.f32 %v3253, %v3258
  %v3263 = vmul.f32 %v3254, %v3258
  %v3264 = vmul.f32 %v3255, %v3258
  %v3265 = vmul.f32 %v3256, %v3258
  %v3267 = vperm.slane %v3124, 0
  %v3269 = vadd.f32 %v3260, %v3267
  %v3270 = vadd.f32 %v3261, %v3267
  %v3271 = vadd.f32 %v3262, %v3267
  %v3272 = vadd.f32 %v3263, %v3267
  %v3273 = vadd.f32 %v3264, %v3267
  %v3274 = vadd.f32 %v3265, %v3267
  %3275 = vst.msk [vmem:[%s22] sm:$0xff] %vm163, %v3269
  %3276 = vst.msk [vmem:[%s22 + $0x8] sm:$0xff] %vm163, %v3270
  %vm3277 = vcmask 253952
  %3278 = vst.msk [vmem:[%s22 + $0x10] sm:$0x1] %vm3277, %v3271
  %3279 = vst.msk [vmem:[%s22 + $0x18] sm:$0xff] %vm163, %v3272
  %3280 = vst.msk [vmem:[%s22 + $0x20] sm:$0xff] %vm163, %v3273
  %3281 = vst.msk [vmem:[%s22 + $0x28] sm:$0x1] %vm3277, %v3274
  // Predicated region
  $region90: #{backbone_vit_forward.1} parent=0 // pred_check
    _
  $region91: #{backbone_vit_forward.1} parent=0 // pred_check_branch
    %3283 = sbr.rel (0) target = $region93
  $region92: #{backbone_vit_forward.1} parent=0 // pred_region
    _
  $region93: #{backbone_vit_forward.1} parent=0 // pred_fallthru
    _
  // Predicated region
  $region94: #{backbone_vit_forward.1} parent=0 // pred_check
    _
  $region95: #{backbone_vit_forward.1} parent=0 // pred_check_branch
    %3285 = sbr.rel (0) target = $region97
  $region96: #{backbone_vit_forward.1} parent=0 // pred_region
    _
  $region97: #{backbone_vit_forward.1} parent=0 // pred_fallthru
    _

</llo_original>
